<compile_context>
chip_gen: v5e
topology: v5e:2x2
jax: 0.10.0
libtpu: 0.0.40
codegen_flags: <defaults>
</compile_context>

<pallas_src>
import math

import jax
import jax.numpy as jnp
from jax.experimental import pallas as pl
from jax.experimental.pallas import tpu as pltpu

# Model geometry (Linear(96,16) forces the post-pool length to 6 => seq_len=27)
SEQ_LEN = 27
C_IN = 11
C1, C2 = 8, 16
L1 = SEQ_LEN - 1          # 26  after conv1 (k=2)
P1 = L1 // 2              # 13  after pool1
L2 = P1 - 1               # 12  after conv2 (k=2)
P2 = L2 // 2              # 6   after pool2
FLAT = C2 * P2            # 96
H1, H2 = 16, 4

B_TILE = 1024             # samples per grid step (multiple of 256 / 128)


def _dot(a, b):
    return jnp.dot(a, b, preferred_element_type=jnp.float32)


# ----------------------------------------------------------------------------
# Kernel
# ----------------------------------------------------------------------------
def cnn_kernel(x_ref,
               t1e_ref, t1o_ref, b1_ref,
               t2e_ref, t2o_ref, b2_ref,
               wfc1_ref, bfc1_ref, wfc2_ref, bfc2_ref, wfc3_ref, bfc3_ref,
               out_ref):
    x = x_ref[...]                                                    # (BT, 297)

    # conv1 + bias + ReLU at even / odd output positions; MaxPool(2,2) = max.
    he = jnp.maximum(_dot(x, t1e_ref[...]) + b1_ref[...], 0.0)        # (BT, 104)
    ho = jnp.maximum(_dot(x, t1o_ref[...]) + b1_ref[...], 0.0)        # (BT, 104)
    p1 = jnp.maximum(he, ho)                                          # pooled (8,13) per sample

    # conv2 + bias + ReLU at even / odd positions; MaxPool(2,2) = max.
    # Output columns are already in PyTorch Flatten order (c2*6 + u).
    ge = jnp.maximum(_dot(p1, t2e_ref[...]) + b2_ref[...], 0.0)       # (BT, 96)
    go = jnp.maximum(_dot(p1, t2o_ref[...]) + b2_ref[...], 0.0)       # (BT, 96)
    p2 = jnp.maximum(ge, go)                                          # (BT, 96)

    # Linear(96,16) + ReLU as one MXU matmul.
    f1 = jnp.maximum(_dot(p2, wfc1_ref[...]) + bfc1_ref[...], 0.0)    # (BT, 16)

    # Linear(16,4) + ReLU and Linear(4,1) in "batch on lanes" orientation so
    # the final result is a lane-dense (1, BT) row (no masked narrow stores).
    f2 = jnp.einsum("ji,bi->jb", wfc2_ref[...], f1,
                    preferred_element_type=jnp.float32)               # (4, BT)
    f2 = jnp.maximum(f2 + bfc2_ref[...], 0.0)
    out = _dot(wfc3_ref[...], f2) + bfc3_ref[...]                     # (1, BT)

    out_ref[0] = out


# ----------------------------------------------------------------------------
# Constant (weight) packing: conv+pool stages as even/odd Toeplitz matrices.
# ----------------------------------------------------------------------------
def _stride2_selector(n_src, n_dst, offset):
    src = jnp.arange(n_src)[:, None]
    dst = jnp.arange(n_dst)[None, :]
    return (src == 2 * dst + offset).astype(jnp.float32)


def _conv_pool_matrix(W, n_src, n_dst, parity):
    """Toeplitz matrix computing conv1d(k=2) outputs at positions 2u+parity.

    M[c*n_src + s, o*n_dst + u] = sum_k W[o, c, k] * [s == 2u + parity + k]
    so (x_flat @ M)[b, o*n_dst + u] = conv(x)[b, o, 2u + parity].
    """
    cout, cin, _ = W.shape
    m = sum(jnp.einsum("oc,su->csou", W[:, :, k],
                       _stride2_selector(n_src, n_dst, parity + k))
            for k in range(2))
    return m.reshape(cin * n_src, cout * n_dst)


def _pack_params(params):
    W1, b1 = params["W1"], params["b1"]
    W2, b2 = params["W2"], params["b2"]
    t1e = _conv_pool_matrix(W1, SEQ_LEN, P1, 0)           # (297, 104)
    t1o = _conv_pool_matrix(W1, SEQ_LEN, P1, 1)           # (297, 104)
    b1r = jnp.repeat(b1, P1).reshape(1, C1 * P1)          # (1, 104)
    t2e = _conv_pool_matrix(W2, P1, P2, 0)                # (104, 96)
    t2o = _conv_pool_matrix(W2, P1, P2, 1)                # (104, 96)
    b2r = jnp.repeat(b2, P2).reshape(1, C2 * P2)          # (1, 96)
    wfc1t = params["Wfc1"].T                              # (96, 16)
    bfc1r = params["bfc1"].reshape(1, H1)                 # (1, 16)
    wfc2 = params["Wfc2"]                                 # (4, 16)
    bfc2c = params["bfc2"].reshape(H2, 1)                 # (4, 1)
    wfc3 = params["Wfc3"]                                 # (1, 4)
    bfc3c = params["bfc3"].reshape(1, 1)                  # (1, 1)
    return (t1e, t1o, b1r, t2e, t2o, b2r,
            wfc1t, bfc1r, wfc2, bfc2c, wfc3, bfc3c)


# ----------------------------------------------------------------------------
# Wrapper
# ----------------------------------------------------------------------------
def cnn_forward_pallas(x, params, *, b_tile=B_TILE):
    B = x.shape[0]
    # Contiguous 2-D slab (B, 297): each block DMA streams a single region.
    x2 = x.reshape(B, C_IN * SEQ_LEN).astype(jnp.float32)
    n_tiles = pl.cdiv(B, b_tile)
    b_pad = n_tiles * b_tile
    if b_pad != B:
        x2 = jnp.pad(x2, ((0, b_pad - B), (0, 0)))

    consts = _pack_params(params)

    in_specs = [pl.BlockSpec((b_tile, C_IN * SEQ_LEN), lambda i: (i, 0))]
    # Constant index_map -> each weight slab is DMA'd into VMEM once.
    in_specs += [pl.BlockSpec(c.shape, lambda i: (0, 0)) for c in consts]

    out = pl.pallas_call(
        cnn_kernel,
        out_shape=jax.ShapeDtypeStruct((n_tiles, 1, b_tile), jnp.float32),
        grid=(n_tiles,),
        in_specs=in_specs,
        out_specs=pl.BlockSpec((1, 1, b_tile), lambda i: (i, 0, 0)),
        compiler_params=pltpu.CompilerParams(
            dimension_semantics=("parallel",)),
    )(x2, *consts)

    return out.reshape(b_pad, 1)[:B]


# ----------------------------------------------------------------------------
# Pure-JAX reference + synthetic init (matches the PyTorch module's scheme)
# ----------------------------------------------------------------------------
def cnn_forward_ref(x, params):
    W1, b1 = params["W1"], params["b1"]
    W2, b2 = params["W2"], params["b2"]
    xw = jnp.stack([x[..., :-1], x[..., 1:]], axis=2)          # (B, 11, 2, 26)
    h = jnp.einsum("ock,bckt->bot", W1, xw) + b1[None, :, None]
    h = jnp.maximum(h, 0.0)
    p = h.reshape(h.shape[0], C1, P1, 2).max(-1)               # (B, 8, 13)
    pw = jnp.stack([p[..., :-1], p[..., 1:]], axis=2)          # (B, 8, 2, 12)
    h2 = jnp.einsum("ock,bckt->bot", W2, pw) + b2[None, :, None]
    h2 = jnp.maximum(h2, 0.0)
    q = h2.reshape(h2.shape[0], C2, P2, 2).max(-1)             # (B, 16, 6)
    flat = q.reshape(q.shape[0], FLAT)
    f1 = jnp.maximum(flat @ params["Wfc1"].T + params["bfc1"], 0.0)
    f2 = jnp.maximum(f1 @ params["Wfc2"].T + params["bfc2"], 0.0)
    return f2 @ params["Wfc3"].T + params["bfc3"]


def init_params(key):
    ks = jax.random.split(key, 12)
    f32 = jnp.float32

    def kaiming(k, shape, fan_in):
        return jax.random.normal(k, shape, f32) * math.sqrt(2.0 / fan_in)

    def default_uniform(k, shape, fan_in):
        bound = 1.0 / math.sqrt(fan_in)
        return jax.random.uniform(k, shape, f32, minval=-bound, maxval=bound)

    W1 = kaiming(ks[0], (C1, C_IN, 2), C_IN * 2)
    b1 = default_uniform(ks[1], (C1,), C_IN * 2)
    W2 = kaiming(ks[2], (C2, C1, 2), C1 * 2)
    b2 = default_uniform(ks[3], (C2,), C1 * 2)
    Wfc1 = kaiming(ks[4], (H1, FLAT), FLAT)
    bfc1 = default_uniform(ks[5], (H1,), FLAT)
    Wfc2 = kaiming(ks[6], (H2, H1), H1)
    bfc2 = default_uniform(ks[7], (H2,), H1)
    Wfc3 = default_uniform(ks[8], (1, H2), H2)     # last layer keeps default init
    bfc3 = default_uniform(ks[9], (1,), H2)
    return dict(W1=W1, b1=b1, W2=W2, b2=b2, Wfc1=Wfc1, bfc1=bfc1,
                Wfc2=Wfc2, bfc2=bfc2, Wfc3=Wfc3, bfc3=bfc3)


if __name__ == "__main__":
    key = jax.random.PRNGKey(0)
    kx, kp = jax.random.split(key)
    params = init_params(kp)

    fwd = jax.jit(cnn_forward_pallas)

    # Small sanity check (batch=2, channels=11, seq=27 as the module implies).
    x_small = jax.random.normal(kx, (2, C_IN, SEQ_LEN), jnp.float32)
    out_small = jax.block_until_ready(fwd(x_small, params))
    ref_small = jax.block_until_ready(cnn_forward_ref(x_small, params))
    assert out_small.shape == (2, 1), out_small.shape
    assert jnp.allclose(out_small, ref_small, rtol=1e-4, atol=1e-5), (
        out_small, ref_small)

    # Multi-tile check: exercises grid > 1 and the batch-padding path.
    x_big = jax.random.normal(kx, (2500, C_IN, SEQ_LEN), jnp.float32)
    out_big = jax.block_until_ready(fwd(x_big, params))
    ref_big = jax.block_until_ready(cnn_forward_ref(x_big, params))
    assert out_big.shape == (2500, 1), out_big.shape
    assert jnp.allclose(out_big, ref_big, rtol=1e-4, atol=1e-4), (
        float(jnp.max(jnp.abs(out_big - ref_big))))

    print("KERNEL_OK")
</pallas_src>

<mosaic_0001>
module attributes {stable_mosaic.version = 11 : i64} {
  func.func @cnn_kernel(%arg0: i32, %arg1: memref<1024x297xf32, #tpu.memory_space<vmem>>, %arg2: memref<297x104xf32, #tpu.memory_space<vmem>>, %arg3: memref<297x104xf32, #tpu.memory_space<vmem>>, %arg4: memref<1x104xf32, #tpu.memory_space<vmem>>, %arg5: memref<104x96xf32, #tpu.memory_space<vmem>>, %arg6: memref<104x96xf32, #tpu.memory_space<vmem>>, %arg7: memref<1x96xf32, #tpu.memory_space<vmem>>, %arg8: memref<96x16xf32, #tpu.memory_space<vmem>>, %arg9: memref<1x16xf32, #tpu.memory_space<vmem>>, %arg10: memref<4x16xf32, #tpu.memory_space<vmem>>, %arg11: memref<4x1xf32, #tpu.memory_space<vmem>>, %arg12: memref<1x4xf32, #tpu.memory_space<vmem>>, %arg13: memref<1x1xf32, #tpu.memory_space<vmem>>, %arg14: memref<1x1x1024xf32, #tpu.memory_space<vmem>>) attributes {dimension_semantics = [#tpu.dimension_semantics<parallel>], iteration_bounds = array<i64: 1>, scalar_prefetch = 0 : i64, scratch_operands = 0 : i64, tpu.core_type = #tpu.core_type<tc>, window_params = [{transform_indices = @transform_0, window_bounds = array<i64: 1024, 297>}, {pipeline_mode = #tpu.pipeline_mode<synchronous>, transform_indices = @transform_1, window_bounds = array<i64: 297, 104>}, {pipeline_mode = #tpu.pipeline_mode<synchronous>, transform_indices = @transform_2, window_bounds = array<i64: 297, 104>}, {pipeline_mode = #tpu.pipeline_mode<synchronous>, transform_indices = @transform_3, window_bounds = array<i64: 1, 104>}, {pipeline_mode = #tpu.pipeline_mode<synchronous>, transform_indices = @transform_4, window_bounds = array<i64: 104, 96>}, {pipeline_mode = #tpu.pipeline_mode<synchronous>, transform_indices = @transform_5, window_bounds = array<i64: 104, 96>}, {pipeline_mode = #tpu.pipeline_mode<synchronous>, transform_indices = @transform_6, window_bounds = array<i64: 1, 96>}, {pipeline_mode = #tpu.pipeline_mode<synchronous>, transform_indices = @transform_7, window_bounds = array<i64: 96, 16>}, {pipeline_mode = #tpu.pipeline_mode<synchronous>, transform_indices = @transform_8, window_bounds = array<i64: 1, 16>}, {pipeline_mode = #tpu.pipeline_mode<synchronous>, transform_indices = @transform_9, window_bounds = array<i64: 4, 16>}, {pipeline_mode = #tpu.pipeline_mode<synchronous>, transform_indices = @transform_10, window_bounds = array<i64: 4, 1>}, {pipeline_mode = #tpu.pipeline_mode<synchronous>, transform_indices = @transform_11, window_bounds = array<i64: 1, 4>}, {pipeline_mode = #tpu.pipeline_mode<synchronous>, transform_indices = @transform_12, window_bounds = array<i64: 1, 1>}, {transform_indices = @transform_13, window_bounds = array<i64: 1, 1, 1024>}]} {
    %c0 = arith.constant 0 : index
    %c0_0 = arith.constant 0 : index
    %0 = vector.load %arg1[%c0, %c0_0] : memref<1024x297xf32, #tpu.memory_space<vmem>>, vector<1024x297xf32>
    %c0_1 = arith.constant 0 : index
    %c0_2 = arith.constant 0 : index
    %1 = vector.load %arg2[%c0_1, %c0_2] : memref<297x104xf32, #tpu.memory_space<vmem>>, vector<297x104xf32>
    %cst = arith.constant dense<0.000000e+00> : vector<1024x104xf32>
    %2 = tpu.matmul %0, %1, %cst {dimension_numbers = #tpu.dot_dimension_numbers<[1], [0], [0], [1], [0, 0, 1, 1], [], []>} : vector<1024x297xf32>, vector<297x104xf32>, vector<1024x104xf32> -> vector<1024x104xf32>
    %c0_3 = arith.constant 0 : index
    %c0_4 = arith.constant 0 : index
    %3 = vector.load %arg4[%c0_3, %c0_4] : memref<1x104xf32, #tpu.memory_space<vmem>>, vector<1x104xf32>
    %4 = vector.broadcast %3 : vector<1x104xf32> to vector<1024x104xf32>
    %5 = arith.addf %2, %4 : vector<1024x104xf32>
    %cst_5 = arith.constant 0.000000e+00 : f32
    %6 = vector.broadcast %cst_5 : f32 to vector<1024x104xf32>
    %7 = arith.maximumf %5, %6 : vector<1024x104xf32>
    %c0_6 = arith.constant 0 : index
    %c0_7 = arith.constant 0 : index
    %8 = vector.load %arg3[%c0_6, %c0_7] : memref<297x104xf32, #tpu.memory_space<vmem>>, vector<297x104xf32>
    %cst_8 = arith.constant dense<0.000000e+00> : vector<1024x104xf32>
    %9 = tpu.matmul %0, %8, %cst_8 {dimension_numbers = #tpu.dot_dimension_numbers<[1], [0], [0], [1], [0, 0, 1, 1], [], []>} : vector<1024x297xf32>, vector<297x104xf32>, vector<1024x104xf32> -> vector<1024x104xf32>
    %c0_9 = arith.constant 0 : index
    %c0_10 = arith.constant 0 : index
    %10 = vector.load %arg4[%c0_9, %c0_10] : memref<1x104xf32, #tpu.memory_space<vmem>>, vector<1x104xf32>
    %11 = vector.broadcast %10 : vector<1x104xf32> to vector<1024x104xf32>
    %12 = arith.addf %9, %11 : vector<1024x104xf32>
    %cst_11 = arith.constant 0.000000e+00 : f32
    %13 = vector.broadcast %cst_11 : f32 to vector<1024x104xf32>
    %14 = arith.maximumf %12, %13 : vector<1024x104xf32>
    %15 = arith.maximumf %7, %14 : vector<1024x104xf32>
    %c0_12 = arith.constant 0 : index
    %c0_13 = arith.constant 0 : index
    %16 = vector.load %arg5[%c0_12, %c0_13] : memref<104x96xf32, #tpu.memory_space<vmem>>, vector<104x96xf32>
    %cst_14 = arith.constant dense<0.000000e+00> : vector<1024x96xf32>
    %17 = tpu.matmul %15, %16, %cst_14 {dimension_numbers = #tpu.dot_dimension_numbers<[1], [0], [0], [1], [0, 0, 1, 1], [], []>} : vector<1024x104xf32>, vector<104x96xf32>, vector<1024x96xf32> -> vector<1024x96xf32>
    %c0_15 = arith.constant 0 : index
    %c0_16 = arith.constant 0 : index
    %18 = vector.load %arg7[%c0_15, %c0_16] : memref<1x96xf32, #tpu.memory_space<vmem>>, vector<1x96xf32>
    %19 = vector.broadcast %18 : vector<1x96xf32> to vector<1024x96xf32>
    %20 = arith.addf %17, %19 : vector<1024x96xf32>
    %cst_17 = arith.constant 0.000000e+00 : f32
    %21 = vector.broadcast %cst_17 : f32 to vector<1024x96xf32>
    %22 = arith.maximumf %20, %21 : vector<1024x96xf32>
    %c0_18 = arith.constant 0 : index
    %c0_19 = arith.constant 0 : index
    %23 = vector.load %arg6[%c0_18, %c0_19] : memref<104x96xf32, #tpu.memory_space<vmem>>, vector<104x96xf32>
    %cst_20 = arith.constant dense<0.000000e+00> : vector<1024x96xf32>
    %24 = tpu.matmul %15, %23, %cst_20 {dimension_numbers = #tpu.dot_dimension_numbers<[1], [0], [0], [1], [0, 0, 1, 1], [], []>} : vector<1024x104xf32>, vector<104x96xf32>, vector<1024x96xf32> -> vector<1024x96xf32>
    %c0_21 = arith.constant 0 : index
    %c0_22 = arith.constant 0 : index
    %25 = vector.load %arg7[%c0_21, %c0_22] : memref<1x96xf32, #tpu.memory_space<vmem>>, vector<1x96xf32>
    %26 = vector.broadcast %25 : vector<1x96xf32> to vector<1024x96xf32>
    %27 = arith.addf %24, %26 : vector<1024x96xf32>
    %cst_23 = arith.constant 0.000000e+00 : f32
    %28 = vector.broadcast %cst_23 : f32 to vector<1024x96xf32>
    %29 = arith.maximumf %27, %28 : vector<1024x96xf32>
    %30 = arith.maximumf %22, %29 : vector<1024x96xf32>
    %c0_24 = arith.constant 0 : index
    %c0_25 = arith.constant 0 : index
    %31 = vector.load %arg8[%c0_24, %c0_25] : memref<96x16xf32, #tpu.memory_space<vmem>>, vector<96x16xf32>
    %cst_26 = arith.constant dense<0.000000e+00> : vector<1024x16xf32>
    %32 = tpu.matmul %30, %31, %cst_26 {dimension_numbers = #tpu.dot_dimension_numbers<[1], [0], [0], [1], [0, 0, 1, 1], [], []>} : vector<1024x96xf32>, vector<96x16xf32>, vector<1024x16xf32> -> vector<1024x16xf32>
    %c0_27 = arith.constant 0 : index
    %c0_28 = arith.constant 0 : index
    %33 = vector.load %arg9[%c0_27, %c0_28] : memref<1x16xf32, #tpu.memory_space<vmem>>, vector<1x16xf32>
    %34 = vector.broadcast %33 : vector<1x16xf32> to vector<1024x16xf32>
    %35 = arith.addf %32, %34 : vector<1024x16xf32>
    %cst_29 = arith.constant 0.000000e+00 : f32
    %36 = vector.broadcast %cst_29 : f32 to vector<1024x16xf32>
    %37 = arith.maximumf %35, %36 : vector<1024x16xf32>
    %c0_30 = arith.constant 0 : index
    %c0_31 = arith.constant 0 : index
    %38 = vector.load %arg10[%c0_30, %c0_31] : memref<4x16xf32, #tpu.memory_space<vmem>>, vector<4x16xf32>
    "tpu.trace_start"() <{level = 10 : i32, message = "ji,bi->jb"}> : () -> ()
    %cst_32 = arith.constant dense<0.000000e+00> : vector<4x1024xf32>
    %39 = tpu.matmul %38, %37, %cst_32 {dimension_numbers = #tpu.dot_dimension_numbers<[1], [1], [0], [0], [0, 0, 1, 0], [], []>} : vector<4x16xf32>, vector<1024x16xf32>, vector<4x1024xf32> -> vector<4x1024xf32>
    "tpu.trace_stop"() : () -> ()
    %c0_33 = arith.constant 0 : index
    %c0_34 = arith.constant 0 : index
    %40 = vector.load %arg11[%c0_33, %c0_34] : memref<4x1xf32, #tpu.memory_space<vmem>>, vector<4x1xf32>
    %41 = vector.broadcast %40 : vector<4x1xf32> to vector<4x1024xf32>
    %42 = arith.addf %39, %41 : vector<4x1024xf32>
    %cst_35 = arith.constant 0.000000e+00 : f32
    %43 = vector.broadcast %cst_35 : f32 to vector<4x1024xf32>
    %44 = arith.maximumf %42, %43 : vector<4x1024xf32>
    %c0_36 = arith.constant 0 : index
    %c0_37 = arith.constant 0 : index
    %45 = vector.load %arg12[%c0_36, %c0_37] : memref<1x4xf32, #tpu.memory_space<vmem>>, vector<1x4xf32>
    %cst_38 = arith.constant dense<0.000000e+00> : vector<1x1024xf32>
    %46 = tpu.matmul %45, %44, %cst_38 {dimension_numbers = #tpu.dot_dimension_numbers<[1], [0], [0], [1], [0, 0, 1, 1], [], []>} : vector<1x4xf32>, vector<4x1024xf32>, vector<1x1024xf32> -> vector<1x1024xf32>
    %c0_39 = arith.constant 0 : index
    %c0_40 = arith.constant 0 : index
    %47 = vector.load %arg13[%c0_39, %c0_40] : memref<1x1xf32, #tpu.memory_space<vmem>>, vector<1x1xf32>
    %48 = vector.broadcast %47 : vector<1x1xf32> to vector<1x1024xf32>
    %49 = arith.addf %46, %48 : vector<1x1024xf32>
    %c0_41 = arith.constant 0 : index
    %c0_42 = arith.constant 0 : index
    %c0_43 = arith.constant 0 : index
    %50 = vector.load %arg14[%c0_41, %c0_42, %c0_43] : memref<1x1x1024xf32, #tpu.memory_space<vmem>>, vector<1x1x1024xf32>
    %51 = vector.shape_cast %50 : vector<1x1x1024xf32> to vector<1x1024xf32>
    %52 = vector.shape_cast %49 : vector<1x1024xf32> to vector<1x1x1024xf32>
    tpu.vector_store %arg14[%c0_41, %c0_42, %c0_43], %52 {strides = array<i32>} : memref<1x1x1024xf32, #tpu.memory_space<vmem>>, vector<1x1x1024xf32>,
    return
  }
  func.func @transform_0(%arg0: i32) -> (i32, i32) {
    %c0_i32 = arith.constant 0 : i32
    %c0_i32_0 = arith.constant 0 : i32
    return %arg0, %c0_i32 : i32, i32
  }
  func.func @transform_1(%arg0: i32) -> (i32, i32) {
    %c0_i32 = arith.constant 0 : i32
    %c0_i32_0 = arith.constant 0 : i32
    %c0_i32_1 = arith.constant 0 : i32
    return %c0_i32, %c0_i32_0 : i32, i32
  }
  func.func @transform_2(%arg0: i32) -> (i32, i32) {
    %c0_i32 = arith.constant 0 : i32
    %c0_i32_0 = arith.constant 0 : i32
    %c0_i32_1 = arith.constant 0 : i32
    return %c0_i32, %c0_i32_0 : i32, i32
  }
  func.func @transform_3(%arg0: i32) -> (i32, i32) {
    %c0_i32 = arith.constant 0 : i32
    %c0_i32_0 = arith.constant 0 : i32
    %c0_i32_1 = arith.constant 0 : i32
    return %c0_i32, %c0_i32_0 : i32, i32
  }
  func.func @transform_4(%arg0: i32) -> (i32, i32) {
    %c0_i32 = arith.constant 0 : i32
    %c0_i32_0 = arith.constant 0 : i32
    %c0_i32_1 = arith.constant 0 : i32
    return %c0_i32, %c0_i32_0 : i32, i32
  }
  func.func @transform_5(%arg0: i32) -> (i32, i32) {
    %c0_i32 = arith.constant 0 : i32
    %c0_i32_0 = arith.constant 0 : i32
    %c0_i32_1 = arith.constant 0 : i32
    return %c0_i32, %c0_i32_0 : i32, i32
  }
  func.func @transform_6(%arg0: i32) -> (i32, i32) {
    %c0_i32 = arith.constant 0 : i32
    %c0_i32_0 = arith.constant 0 : i32
    %c0_i32_1 = arith.constant 0 : i32
    return %c0_i32, %c0_i32_0 : i32, i32
  }
  func.func @transform_7(%arg0: i32) -> (i32, i32) {
    %c0_i32 = arith.constant 0 : i32
    %c0_i32_0 = arith.constant 0 : i32
    %c0_i32_1 = arith.constant 0 : i32
    return %c0_i32, %c0_i32_0 : i32, i32
  }
  func.func @transform_8(%arg0: i32) -> (i32, i32) {
    %c0_i32 = arith.constant 0 : i32
    %c0_i32_0 = arith.constant 0 : i32
    %c0_i32_1 = arith.constant 0 : i32
    return %c0_i32, %c0_i32_0 : i32, i32
  }
  func.func @transform_9(%arg0: i32) -> (i32, i32) {
    %c0_i32 = arith.constant 0 : i32
    %c0_i32_0 = arith.constant 0 : i32
    %c0_i32_1 = arith.constant 0 : i32
    return %c0_i32, %c0_i32_0 : i32, i32
  }
  func.func @transform_10(%arg0: i32) -> (i32, i32) {
    %c0_i32 = arith.constant 0 : i32
    %c0_i32_0 = arith.constant 0 : i32
    %c0_i32_1 = arith.constant 0 : i32
    return %c0_i32, %c0_i32_0 : i32, i32
  }
  func.func @transform_11(%arg0: i32) -> (i32, i32) {
    %c0_i32 = arith.constant 0 : i32
    %c0_i32_0 = arith.constant 0 : i32
    %c0_i32_1 = arith.constant 0 : i32
    return %c0_i32, %c0_i32_0 : i32, i32
  }
  func.func @transform_12(%arg0: i32) -> (i32, i32) {
    %c0_i32 = arith.constant 0 : i32
    %c0_i32_0 = arith.constant 0 : i32
    %c0_i32_1 = arith.constant 0 : i32
    return %c0_i32, %c0_i32_0 : i32, i32
  }
  func.func @transform_13(%arg0: i32) -> (i32, i32, i32) {
    %c0_i32 = arith.constant 0 : i32
    %c0_i32_0 = arith.constant 0 : i32
    %c0_i32_1 = arith.constant 0 : i32
    return %arg0, %c0_i32, %c0_i32_0 : i32, i32, i32
  }
}

</mosaic_0001>

<llo_original>
// kernel: cnn_forward_pallas.1
$region0: #{cnn_forward_pallas.1}
  #allocation0 [shape = 'u32[]', space=smem, size = 0x4, offset = 0x4, fixed_abs, tag = 'smem constant byte address 0x4 - core index']
  #allocation1 [shape = 'u32[72,128]{1,0:T(1,128)}', space=vmem, size = 0x9000, scoped, tag = 'internal scratch']
  #allocation2 [shape = 'f32[1,1]{1,0:T(1,128)S(1)}', space=vmem, size = 0x200, scoped, tag = 'scoped memory for cnn_forward_pallas.1']
  %s0 = inlined_call_operand.vmem [shape: f32[1024,297], index: 0, kind: input, shape index: {}]
  %s1 = inlined_call_operand.vmem [shape: f32[297,104], index: 1, kind: input, shape index: {}]
  %s2 = inlined_call_operand.vmem [shape: f32[297,104], index: 2, kind: input, shape index: {}]
  %s3 = inlined_call_operand.vmem [shape: f32[1,104], index: 3, kind: input, shape index: {}]
  %s4 = inlined_call_operand.vmem [shape: f32[104,96], index: 4, kind: input, shape index: {}]
  %s5 = inlined_call_operand.vmem [shape: f32[104,96], index: 5, kind: input, shape index: {}]
  %s6 = inlined_call_operand.vmem [shape: f32[1,96], index: 6, kind: input, shape index: {}]
  %s7 = inlined_call_operand.vmem [shape: f32[96,16], index: 7, kind: input, shape index: {}]
  %s8 = inlined_call_operand.vmem [shape: f32[1,16], index: 8, kind: input, shape index: {}]
  %s9 = inlined_call_operand.vmem [shape: f32[4,16], index: 9, kind: input, shape index: {}]
  %s10 = inlined_call_operand.vmem [shape: f32[4,1], index: 10, kind: input, shape index: {}]
  %s11 = inlined_call_operand.vmem [shape: f32[1,4], index: 11, kind: input, shape index: {}]
  %s12 = inlined_call_operand.<no memory space> [shape: f32[1,1], index: 12, kind: input, shape index: {}]
  %s13 = inlined_call_operand.vmem [shape: f32[1,1,1024], index: 13, kind: output, shape index: {}]
  %s14 = sld [smem:[#allocation0]]
  $region62: #{cnn_forward_pallas.1} parent=0
    _
  %s16 = ssub.s32 1, %s14
  %s17 = scalar_select 0, %s16, %s14
  %v18 = vstv %s12
  %19 = vst [vmem:[#allocation2] sm:$0x1] %v18
  // Predicated region
  $region2: #{cnn_forward_pallas.1} parent=0 // pred_check
    _
  $region3: #{cnn_forward_pallas.1} parent=0 // pred_check_branch
    %21 = sbr.rel (0) target = $region5
  $region4: #{cnn_forward_pallas.1} parent=0 // pred_region
    _
  $region5: #{cnn_forward_pallas.1} parent=0 // pred_fallthru
    _
  // Predicated region
  $region6: #{cnn_forward_pallas.1} parent=0 // pred_check
    _
  $region7: #{cnn_forward_pallas.1} parent=0 // pred_check_branch
    %23 = sbr.rel (0) target = $region9
  $region8: #{cnn_forward_pallas.1} parent=0 // pred_region
    _
  $region9: #{cnn_forward_pallas.1} parent=0 // pred_fallthru
    _
  // Predicated region
  $region10: #{cnn_forward_pallas.1} parent=0 // pred_check
    _
  $region11: #{cnn_forward_pallas.1} parent=0 // pred_check_branch
    %25 = sbr.rel (0) target = $region13
  $region12: #{cnn_forward_pallas.1} parent=0 // pred_region
    _
  $region13: #{cnn_forward_pallas.1} parent=0 // pred_fallthru
    _
  // Predicated region
  $region14: #{cnn_forward_pallas.1} parent=0 // pred_check
    _
  $region15: #{cnn_forward_pallas.1} parent=0 // pred_check_branch
    %27 = sbr.rel (0) target = $region17
  $region16: #{cnn_forward_pallas.1} parent=0 // pred_region
    _
  $region17: #{cnn_forward_pallas.1} parent=0 // pred_fallthru
    _
  // Predicated region
  $region18: #{cnn_forward_pallas.1} parent=0 // pred_check
    _
  $region19: #{cnn_forward_pallas.1} parent=0 // pred_check_branch
    %29 = sbr.rel (0) target = $region21
  $region20: #{cnn_forward_pallas.1} parent=0 // pred_region
    _
  $region21: #{cnn_forward_pallas.1} parent=0 // pred_fallthru
    _
  // Predicated region
  $region22: #{cnn_forward_pallas.1} parent=0 // pred_check
    _
  $region23: #{cnn_forward_pallas.1} parent=0 // pred_check_branch
    %31 = sbr.rel (0) target = $region25
  $region24: #{cnn_forward_pallas.1} parent=0 // pred_region
    _
  $region25: #{cnn_forward_pallas.1} parent=0 // pred_fallthru
    _
  // Predicated region
  $region26: #{cnn_forward_pallas.1} parent=0 // pred_check
    _
  $region27: #{cnn_forward_pallas.1} parent=0 // pred_check_branch
    %33 = sbr.rel (0) target = $region29
  $region28: #{cnn_forward_pallas.1} parent=0 // pred_region
    _
  $region29: #{cnn_forward_pallas.1} parent=0 // pred_fallthru
    _
  // Predicated region
  $region30: #{cnn_forward_pallas.1} parent=0 // pred_check
    _
  $region31: #{cnn_forward_pallas.1} parent=0 // pred_check_branch
    %35 = sbr.rel (0) target = $region33
  $region32: #{cnn_forward_pallas.1} parent=0 // pred_region
    _
  $region33: #{cnn_forward_pallas.1} parent=0 // pred_fallthru
    _
  // Predicated region
  $region34: #{cnn_forward_pallas.1} parent=0 // pred_check
    _
  $region35: #{cnn_forward_pallas.1} parent=0 // pred_check_branch
    %37 = sbr.rel (0) target = $region37
  $region36: #{cnn_forward_pallas.1} parent=0 // pred_region
    _
  $region37: #{cnn_forward_pallas.1} parent=0 // pred_fallthru
    _
  // Predicated region
  $region38: #{cnn_forward_pallas.1} parent=0 // pred_check
    _
  $region39: #{cnn_forward_pallas.1} parent=0 // pred_check_branch
    %39 = sbr.rel (0) target = $region41
  $region40: #{cnn_forward_pallas.1} parent=0 // pred_region
    _
  $region41: #{cnn_forward_pallas.1} parent=0 // pred_fallthru
    _
  // Predicated region
  $region42: #{cnn_forward_pallas.1} parent=0 // pred_check
    _
  $region43: #{cnn_forward_pallas.1} parent=0 // pred_check_branch
    %41 = sbr.rel (0) target = $region45
  $region44: #{cnn_forward_pallas.1} parent=0 // pred_region
    _
  $region45: #{cnn_forward_pallas.1} parent=0 // pred_fallthru
    _
  // Predicated region
  $region46: #{cnn_forward_pallas.1} parent=0 // pred_check
    _
  $region47: #{cnn_forward_pallas.1} parent=0 // pred_check_branch
    %43 = sbr.rel (0) target = $region49
  $region48: #{cnn_forward_pallas.1} parent=0 // pred_region
    _
  $region49: #{cnn_forward_pallas.1} parent=0 // pred_fallthru
    _
  // Predicated region
  $region50: #{cnn_forward_pallas.1} parent=0 // pred_check
    _
  $region51: #{cnn_forward_pallas.1} parent=0 // pred_check_branch
    %45 = sbr.rel (0) target = $region53
  $region52: #{cnn_forward_pallas.1} parent=0 // pred_region
    _
  $region53: #{cnn_forward_pallas.1} parent=0 // pred_fallthru
    _
  %v46 = vld [vmem:[%s0] sm:$0xff]
  %v47 = vld [vmem:[%s0 + $0x8] sm:$0xff]
  %v48 = vld [vmem:[%s0 + $0x10] sm:$0xff]
  %v49 = vld [vmem:[%s0 + $0x18] sm:$0xff]
  %v50 = vld [vmem:[%s0 + $0x20] sm:$0xff]
  %v51 = vld [vmem:[%s0 + $0x28] sm:$0xff]
  %v52 = vld [vmem:[%s0 + $0x30] sm:$0xff]
  %v53 = vld [vmem:[%s0 + $0x38] sm:$0xff]
  %v54 = vld [vmem:[%s0 + $0x40] sm:$0xff]
  %v55 = vld [vmem:[%s0 + $0x48] sm:$0xff]
  %v56 = vld [vmem:[%s0 + $0x50] sm:$0xff]
  %v57 = vld [vmem:[%s0 + $0x58] sm:$0xff]
  %v58 = vld [vmem:[%s0 + $0x60] sm:$0xff]
  %v59 = vld [vmem:[%s0 + $0x68] sm:$0xff]
  %v60 = vld [vmem:[%s0 + $0x70] sm:$0xff]
  %v61 = vld [vmem:[%s0 + $0x78] sm:$0xff]
  %v62 = vld [vmem:[%s0 + $0x80] sm:$0xff]
  %v63 = vld [vmem:[%s0 + $0x88] sm:$0xff]
  %v64 = vld [vmem:[%s0 + $0x90] sm:$0xff]
  %v65 = vld [vmem:[%s0 + $0x98] sm:$0xff]
  %v66 = vld [vmem:[%s0 + $0xa0] sm:$0xff]
  %v67 = vld [vmem:[%s0 + $0xa8] sm:$0xff]
  %v68 = vld [vmem:[%s0 + $0xb0] sm:$0xff]
  %v69 = vld [vmem:[%s0 + $0xb8] sm:$0xff]
  %v70 = vld [vmem:[%s0 + $0xc0] sm:$0xff]
  %v71 = vld [vmem:[%s0 + $0xc8] sm:$0xff]
  %v72 = vld [vmem:[%s0 + $0xd0] sm:$0xff]
  %v73 = vld [vmem:[%s0 + $0xd8] sm:$0xff]
  %v74 = vld [vmem:[%s0 + $0xe0] sm:$0xff]
  %v75 = vld [vmem:[%s0 + $0xe8] sm:$0xff]
  %v76 = vld [vmem:[%s0 + $0xf0] sm:$0xff]
  %v77 = vld [vmem:[%s0 + $0xf8] sm:$0xff]
  %v78 = vld [vmem:[%s0 + $0x100] sm:$0xff]
  %v79 = vld [vmem:[%s0 + $0x108] sm:$0xff]
  %v80 = vld [vmem:[%s0 + $0x110] sm:$0xff]
  %v81 = vld [vmem:[%s0 + $0x118] sm:$0xff]
  %v82 = vld [vmem:[%s0 + $0x120] sm:$0xff]
  %v83 = vld [vmem:[%s0 + $0x128] sm:$0xff]
  %v84 = vld [vmem:[%s0 + $0x130] sm:$0xff]
  %v85 = vld [vmem:[%s0 + $0x138] sm:$0xff]
  %v86 = vld [vmem:[%s0 + $0x140] sm:$0xff]
  %v87 = vld [vmem:[%s0 + $0x148] sm:$0xff]
  %v88 = vld [vmem:[%s0 + $0x150] sm:$0xff]
  %v89 = vld [vmem:[%s0 + $0x158] sm:$0xff]
  %v90 = vld [vmem:[%s0 + $0x160] sm:$0xff]
  %v91 = vld [vmem:[%s0 + $0x168] sm:$0xff]
  %v92 = vld [vmem:[%s0 + $0x170] sm:$0xff]
  %v93 = vld [vmem:[%s0 + $0x178] sm:$0xff]
  %v94 = vld [vmem:[%s0 + $0x180] sm:$0xff]
  %v95 = vld [vmem:[%s0 + $0x188] sm:$0xff]
  %v96 = vld [vmem:[%s0 + $0x190] sm:$0xff]
  %v97 = vld [vmem:[%s0 + $0x198] sm:$0xff]
  %v98 = vld [vmem:[%s0 + $0x1a0] sm:$0xff]
  %v99 = vld [vmem:[%s0 + $0x1a8] sm:$0xff]
  %v100 = vld [vmem:[%s0 + $0x1b0] sm:$0xff]
  %v101 = vld [vmem:[%s0 + $0x1b8] sm:$0xff]
  %v102 = vld [vmem:[%s0 + $0x1c0] sm:$0xff]
  %v103 = vld [vmem:[%s0 + $0x1c8] sm:$0xff]
  %v104 = vld [vmem:[%s0 + $0x1d0] sm:$0xff]
  %v105 = vld [vmem:[%s0 + $0x1d8] sm:$0xff]
  %v106 = vld [vmem:[%s0 + $0x1e0] sm:$0xff]
  %v107 = vld [vmem:[%s0 + $0x1e8] sm:$0xff]
  %v108 = vld [vmem:[%s0 + $0x1f0] sm:$0xff]
  %v109 = vld [vmem:[%s0 + $0x1f8] sm:$0xff]
  %v110 = vld [vmem:[%s0 + $0x200] sm:$0xff]
  %v111 = vld [vmem:[%s0 + $0x208] sm:$0xff]
  %v112 = vld [vmem:[%s0 + $0x210] sm:$0xff]
  %v113 = vld [vmem:[%s0 + $0x218] sm:$0xff]
  %v114 = vld [vmem:[%s0 + $0x220] sm:$0xff]
  %v115 = vld [vmem:[%s0 + $0x228] sm:$0xff]
  %v116 = vld [vmem:[%s0 + $0x230] sm:$0xff]
  %v117 = vld [vmem:[%s0 + $0x238] sm:$0xff]
  %v118 = vld [vmem:[%s0 + $0x240] sm:$0xff]
  %v119 = vld [vmem:[%s0 + $0x248] sm:$0xff]
  %v120 = vld [vmem:[%s0 + $0x250] sm:$0xff]
  %v121 = vld [vmem:[%s0 + $0x258] sm:$0xff]
  %v122 = vld [vmem:[%s0 + $0x260] sm:$0xff]
  %v123 = vld [vmem:[%s0 + $0x268] sm:$0xff]
  %v124 = vld [vmem:[%s0 + $0x270] sm:$0xff]
  %v125 = vld [vmem:[%s0 + $0x278] sm:$0xff]
  %v126 = vld [vmem:[%s0 + $0x280] sm:$0xff]
  %v127 = vld [vmem:[%s0 + $0x288] sm:$0xff]
  %v128 = vld [vmem:[%s0 + $0x290] sm:$0xff]
  %v129 = vld [vmem:[%s0 + $0x298] sm:$0xff]
  %v130 = vld [vmem:[%s0 + $0x2a0] sm:$0xff]
  %v131 = vld [vmem:[%s0 + $0x2a8] sm:$0xff]
  %v132 = vld [vmem:[%s0 + $0x2b0] sm:$0xff]
  %v133 = vld [vmem:[%s0 + $0x2b8] sm:$0xff]
  %v134 = vld [vmem:[%s0 + $0x2c0] sm:$0xff]
  %v135 = vld [vmem:[%s0 + $0x2c8] sm:$0xff]
  %v136 = vld [vmem:[%s0 + $0x2d0] sm:$0xff]
  %v137 = vld [vmem:[%s0 + $0x2d8] sm:$0xff]
  %v138 = vld [vmem:[%s0 + $0x2e0] sm:$0xff]
  %v139 = vld [vmem:[%s0 + $0x2e8] sm:$0xff]
  %v140 = vld [vmem:[%s0 + $0x2f0] sm:$0xff]
  %v141 = vld [vmem:[%s0 + $0x2f8] sm:$0xff]
  %v142 = vld [vmem:[%s0 + $0x300] sm:$0xff]
  %v143 = vld [vmem:[%s0 + $0x308] sm:$0xff]
  %v144 = vld [vmem:[%s0 + $0x310] sm:$0xff]
  %v145 = vld [vmem:[%s0 + $0x318] sm:$0xff]
  %v146 = vld [vmem:[%s0 + $0x320] sm:$0xff]
  %v147 = vld [vmem:[%s0 + $0x328] sm:$0xff]
  %v148 = vld [vmem:[%s0 + $0x330] sm:$0xff]
  %v149 = vld [vmem:[%s0 + $0x338] sm:$0xff]
  %v150 = vld [vmem:[%s0 + $0x340] sm:$0xff]
  %v151 = vld [vmem:[%s0 + $0x348] sm:$0xff]
  %v152 = vld [vmem:[%s0 + $0x350] sm:$0xff]
  %v153 = vld [vmem:[%s0 + $0x358] sm:$0xff]
  %v154 = vld [vmem:[%s0 + $0x360] sm:$0xff]
  %v155 = vld [vmem:[%s0 + $0x368] sm:$0xff]
  %v156 = vld [vmem:[%s0 + $0x370] sm:$0xff]
  %v157 = vld [vmem:[%s0 + $0x378] sm:$0xff]
  %v158 = vld [vmem:[%s0 + $0x380] sm:$0xff]
  %v159 = vld [vmem:[%s0 + $0x388] sm:$0xff]
  %v160 = vld [vmem:[%s0 + $0x390] sm:$0xff]
  %v161 = vld [vmem:[%s0 + $0x398] sm:$0xff]
  %v162 = vld [vmem:[%s0 + $0x3a0] sm:$0xff]
  %v163 = vld [vmem:[%s0 + $0x3a8] sm:$0xff]
  %v164 = vld [vmem:[%s0 + $0x3b0] sm:$0xff]
  %v165 = vld [vmem:[%s0 + $0x3b8] sm:$0xff]
  %v166 = vld [vmem:[%s0 + $0x3c0] sm:$0xff]
  %v167 = vld [vmem:[%s0 + $0x3c8] sm:$0xff]
  %v168 = vld [vmem:[%s0 + $0x3d0] sm:$0xff]
  %v169 = vld [vmem:[%s0 + $0x3d8] sm:$0xff]
  %v170 = vld [vmem:[%s0 + $0x3e0] sm:$0xff]
  %v171 = vld [vmem:[%s0 + $0x3e8] sm:$0xff]
  %v172 = vld [vmem:[%s0 + $0x3f0] sm:$0xff]
  %v173 = vld [vmem:[%s0 + $0x3f8] sm:$0xff]
  %v174 = vld [vmem:[%s0 + $0x400] sm:$0xff]
  %v175 = vld [vmem:[%s0 + $0x408] sm:$0xff]
  %v176 = vld [vmem:[%s0 + $0x410] sm:$0xff]
  %v177 = vld [vmem:[%s0 + $0x418] sm:$0xff]
  %v178 = vld [vmem:[%s0 + $0x420] sm:$0xff]
  %v179 = vld [vmem:[%s0 + $0x428] sm:$0xff]
  %v180 = vld [vmem:[%s0 + $0x430] sm:$0xff]
  %v181 = vld [vmem:[%s0 + $0x438] sm:$0xff]
  %v182 = vld [vmem:[%s0 + $0x440] sm:$0xff]
  %v183 = vld [vmem:[%s0 + $0x448] sm:$0xff]
  %v184 = vld [vmem:[%s0 + $0x450] sm:$0xff]
  %v185 = vld [vmem:[%s0 + $0x458] sm:$0xff]
  %v186 = vld [vmem:[%s0 + $0x460] sm:$0xff]
  %v187 = vld [vmem:[%s0 + $0x468] sm:$0xff]
  %v188 = vld [vmem:[%s0 + $0x470] sm:$0xff]
  %v189 = vld [vmem:[%s0 + $0x478] sm:$0xff]
  %v190 = vld [vmem:[%s0 + $0x480] sm:$0xff]
  %v191 = vld [vmem:[%s0 + $0x488] sm:$0xff]
  %v192 = vld [vmem:[%s0 + $0x490] sm:$0xff]
  %v193 = vld [vmem:[%s0 + $0x498] sm:$0xff]
  %v194 = vld [vmem:[%s0 + $0x4a0] sm:$0xff]
  %v195 = vld [vmem:[%s0 + $0x4a8] sm:$0xff]
  %v196 = vld [vmem:[%s0 + $0x4b0] sm:$0xff]
  %v197 = vld [vmem:[%s0 + $0x4b8] sm:$0xff]
  %v198 = vld [vmem:[%s0 + $0x4c0] sm:$0xff]
  %v199 = vld [vmem:[%s0 + $0x4c8] sm:$0xff]
  %v200 = vld [vmem:[%s0 + $0x4d0] sm:$0xff]
  %v201 = vld [vmem:[%s0 + $0x4d8] sm:$0xff]
  %v202 = vld [vmem:[%s0 + $0x4e0] sm:$0xff]
  %v203 = vld [vmem:[%s0 + $0x4e8] sm:$0xff]
  %v204 = vld [vmem:[%s0 + $0x4f0] sm:$0xff]
  %v205 = vld [vmem:[%s0 + $0x4f8] sm:$0xff]
  %v206 = vld [vmem:[%s0 + $0x500] sm:$0xff]
  %v207 = vld [vmem:[%s0 + $0x508] sm:$0xff]
  %v208 = vld [vmem:[%s0 + $0x510] sm:$0xff]
  %v209 = vld [vmem:[%s0 + $0x518] sm:$0xff]
  %v210 = vld [vmem:[%s0 + $0x520] sm:$0xff]
  %v211 = vld [vmem:[%s0 + $0x528] sm:$0xff]
  %v212 = vld [vmem:[%s0 + $0x530] sm:$0xff]
  %v213 = vld [vmem:[%s0 + $0x538] sm:$0xff]
  %v214 = vld [vmem:[%s0 + $0x540] sm:$0xff]
  %v215 = vld [vmem:[%s0 + $0x548] sm:$0xff]
  %v216 = vld [vmem:[%s0 + $0x550] sm:$0xff]
  %v217 = vld [vmem:[%s0 + $0x558] sm:$0xff]
  %v218 = vld [vmem:[%s0 + $0x560] sm:$0xff]
  %v219 = vld [vmem:[%s0 + $0x568] sm:$0xff]
  %v220 = vld [vmem:[%s0 + $0x570] sm:$0xff]
  %v221 = vld [vmem:[%s0 + $0x578] sm:$0xff]
  %v222 = vld [vmem:[%s0 + $0x580] sm:$0xff]
  %v223 = vld [vmem:[%s0 + $0x588] sm:$0xff]
  %v224 = vld [vmem:[%s0 + $0x590] sm:$0xff]
  %v225 = vld [vmem:[%s0 + $0x598] sm:$0xff]
  %v226 = vld [vmem:[%s0 + $0x5a0] sm:$0xff]
  %v227 = vld [vmem:[%s0 + $0x5a8] sm:$0xff]
  %v228 = vld [vmem:[%s0 + $0x5b0] sm:$0xff]
  %v229 = vld [vmem:[%s0 + $0x5b8] sm:$0xff]
  %v230 = vld [vmem:[%s0 + $0x5c0] sm:$0xff]
  %v231 = vld [vmem:[%s0 + $0x5c8] sm:$0xff]
  %v232 = vld [vmem:[%s0 + $0x5d0] sm:$0xff]
  %v233 = vld [vmem:[%s0 + $0x5d8] sm:$0xff]
  %v234 = vld [vmem:[%s0 + $0x5e0] sm:$0xff]
  %v235 = vld [vmem:[%s0 + $0x5e8] sm:$0xff]
  %v236 = vld [vmem:[%s0 + $0x5f0] sm:$0xff]
  %v237 = vld [vmem:[%s0 + $0x5f8] sm:$0xff]
  %v238 = vld [vmem:[%s0 + $0x600] sm:$0xff]
  %v239 = vld [vmem:[%s0 + $0x608] sm:$0xff]
  %v240 = vld [vmem:[%s0 + $0x610] sm:$0xff]
  %v241 = vld [vmem:[%s0 + $0x618] sm:$0xff]
  %v242 = vld [vmem:[%s0 + $0x620] sm:$0xff]
  %v243 = vld [vmem:[%s0 + $0x628] sm:$0xff]
  %v244 = vld [vmem:[%s0 + $0x630] sm:$0xff]
  %v245 = vld [vmem:[%s0 + $0x638] sm:$0xff]
  %v246 = vld [vmem:[%s0 + $0x640] sm:$0xff]
  %v247 = vld [vmem:[%s0 + $0x648] sm:$0xff]
  %v248 = vld [vmem:[%s0 + $0x650] sm:$0xff]
  %v249 = vld [vmem:[%s0 + $0x658] sm:$0xff]
  %v250 = vld [vmem:[%s0 + $0x660] sm:$0xff]
  %v251 = vld [vmem:[%s0 + $0x668] sm:$0xff]
  %v252 = vld [vmem:[%s0 + $0x670] sm:$0xff]
  %v253 = vld [vmem:[%s0 + $0x678] sm:$0xff]
  %v254 = vld [vmem:[%s0 + $0x680] sm:$0xff]
  %v255 = vld [vmem:[%s0 + $0x688] sm:$0xff]
  %v256 = vld [vmem:[%s0 + $0x690] sm:$0xff]
  %v257 = vld [vmem:[%s0 + $0x698] sm:$0xff]
  %v258 = vld [vmem:[%s0 + $0x6a0] sm:$0xff]
  %v259 = vld [vmem:[%s0 + $0x6a8] sm:$0xff]
  %v260 = vld [vmem:[%s0 + $0x6b0] sm:$0xff]
  %v261 = vld [vmem:[%s0 + $0x6b8] sm:$0xff]
  %v262 = vld [vmem:[%s0 + $0x6c0] sm:$0xff]
  %v263 = vld [vmem:[%s0 + $0x6c8] sm:$0xff]
  %v264 = vld [vmem:[%s0 + $0x6d0] sm:$0xff]
  %v265 = vld [vmem:[%s0 + $0x6d8] sm:$0xff]
  %v266 = vld [vmem:[%s0 + $0x6e0] sm:$0xff]
  %v267 = vld [vmem:[%s0 + $0x6e8] sm:$0xff]
  %v268 = vld [vmem:[%s0 + $0x6f0] sm:$0xff]
  %v269 = vld [vmem:[%s0 + $0x6f8] sm:$0xff]
  %v270 = vld [vmem:[%s0 + $0x700] sm:$0xff]
  %v271 = vld [vmem:[%s0 + $0x708] sm:$0xff]
  %v272 = vld [vmem:[%s0 + $0x710] sm:$0xff]
  %v273 = vld [vmem:[%s0 + $0x718] sm:$0xff]
  %v274 = vld [vmem:[%s0 + $0x720] sm:$0xff]
  %v275 = vld [vmem:[%s0 + $0x728] sm:$0xff]
  %v276 = vld [vmem:[%s0 + $0x730] sm:$0xff]
  %v277 = vld [vmem:[%s0 + $0x738] sm:$0xff]
  %v278 = vld [vmem:[%s0 + $0x740] sm:$0xff]
  %v279 = vld [vmem:[%s0 + $0x748] sm:$0xff]
  %v280 = vld [vmem:[%s0 + $0x750] sm:$0xff]
  %v281 = vld [vmem:[%s0 + $0x758] sm:$0xff]
  %v282 = vld [vmem:[%s0 + $0x760] sm:$0xff]
  %v283 = vld [vmem:[%s0 + $0x768] sm:$0xff]
  %v284 = vld [vmem:[%s0 + $0x770] sm:$0xff]
  %v285 = vld [vmem:[%s0 + $0x778] sm:$0xff]
  %v286 = vld [vmem:[%s0 + $0x780] sm:$0xff]
  %v287 = vld [vmem:[%s0 + $0x788] sm:$0xff]
  %v288 = vld [vmem:[%s0 + $0x790] sm:$0xff]
  %v289 = vld [vmem:[%s0 + $0x798] sm:$0xff]
  %v290 = vld [vmem:[%s0 + $0x7a0] sm:$0xff]
  %v291 = vld [vmem:[%s0 + $0x7a8] sm:$0xff]
  %v292 = vld [vmem:[%s0 + $0x7b0] sm:$0xff]
  %v293 = vld [vmem:[%s0 + $0x7b8] sm:$0xff]
  %v294 = vld [vmem:[%s0 + $0x7c0] sm:$0xff]
  %v295 = vld [vmem:[%s0 + $0x7c8] sm:$0xff]
  %v296 = vld [vmem:[%s0 + $0x7d0] sm:$0xff]
  %v297 = vld [vmem:[%s0 + $0x7d8] sm:$0xff]
  %v298 = vld [vmem:[%s0 + $0x7e0] sm:$0xff]
  %v299 = vld [vmem:[%s0 + $0x7e8] sm:$0xff]
  %v300 = vld [vmem:[%s0 + $0x7f0] sm:$0xff]
  %v301 = vld [vmem:[%s0 + $0x7f8] sm:$0xff]
  %v302 = vld [vmem:[%s0 + $0x800] sm:$0xff]
  %v303 = vld [vmem:[%s0 + $0x808] sm:$0xff]
  %v304 = vld [vmem:[%s0 + $0x810] sm:$0xff]
  %v305 = vld [vmem:[%s0 + $0x818] sm:$0xff]
  %v306 = vld [vmem:[%s0 + $0x820] sm:$0xff]
  %v307 = vld [vmem:[%s0 + $0x828] sm:$0xff]
  %v308 = vld [vmem:[%s0 + $0x830] sm:$0xff]
  %v309 = vld [vmem:[%s0 + $0x838] sm:$0xff]
  %v310 = vld [vmem:[%s0 + $0x840] sm:$0xff]
  %v311 = vld [vmem:[%s0 + $0x848] sm:$0xff]
  %v312 = vld [vmem:[%s0 + $0x850] sm:$0xff]
  %v313 = vld [vmem:[%s0 + $0x858] sm:$0xff]
  %v314 = vld [vmem:[%s0 + $0x860] sm:$0xff]
  %v315 = vld [vmem:[%s0 + $0x868] sm:$0xff]
  %v316 = vld [vmem:[%s0 + $0x870] sm:$0xff]
  %v317 = vld [vmem:[%s0 + $0x878] sm:$0xff]
  %v318 = vld [vmem:[%s0 + $0x880] sm:$0xff]
  %v319 = vld [vmem:[%s0 + $0x888] sm:$0xff]
  %v320 = vld [vmem:[%s0 + $0x890] sm:$0xff]
  %v321 = vld [vmem:[%s0 + $0x898] sm:$0xff]
  %v322 = vld [vmem:[%s0 + $0x8a0] sm:$0xff]
  %v323 = vld [vmem:[%s0 + $0x8a8] sm:$0xff]
  %v324 = vld [vmem:[%s0 + $0x8b0] sm:$0xff]
  %v325 = vld [vmem:[%s0 + $0x8b8] sm:$0xff]
  %v326 = vld [vmem:[%s0 + $0x8c0] sm:$0xff]
  %v327 = vld [vmem:[%s0 + $0x8c8] sm:$0xff]
  %v328 = vld [vmem:[%s0 + $0x8d0] sm:$0xff]
  %v329 = vld [vmem:[%s0 + $0x8d8] sm:$0xff]
  %v330 = vld [vmem:[%s0 + $0x8e0] sm:$0xff]
  %v331 = vld [vmem:[%s0 + $0x8e8] sm:$0xff]
  %v332 = vld [vmem:[%s0 + $0x8f0] sm:$0xff]
  %v333 = vld [vmem:[%s0 + $0x8f8] sm:$0xff]
  %v334 = vld [vmem:[%s0 + $0x900] sm:$0xff]
  %v335 = vld [vmem:[%s0 + $0x908] sm:$0xff]
  %v336 = vld [vmem:[%s0 + $0x910] sm:$0xff]
  %v337 = vld [vmem:[%s0 + $0x918] sm:$0xff]
  %v338 = vld [vmem:[%s0 + $0x920] sm:$0xff]
  %v339 = vld [vmem:[%s0 + $0x928] sm:$0xff]
  %v340 = vld [vmem:[%s0 + $0x930] sm:$0xff]
  %v341 = vld [vmem:[%s0 + $0x938] sm:$0xff]
  %v342 = vld [vmem:[%s0 + $0x940] sm:$0xff]
  %v343 = vld [vmem:[%s0 + $0x948] sm:$0xff]
  %v344 = vld [vmem:[%s0 + $0x950] sm:$0xff]
  %v345 = vld [vmem:[%s0 + $0x958] sm:$0xff]
  %v346 = vld [vmem:[%s0 + $0x960] sm:$0xff]
  %v347 = vld [vmem:[%s0 + $0x968] sm:$0xff]
  %v348 = vld [vmem:[%s0 + $0x970] sm:$0xff]
  %v349 = vld [vmem:[%s0 + $0x978] sm:$0xff]
  %v350 = vld [vmem:[%s0 + $0x980] sm:$0xff]
  %v351 = vld [vmem:[%s0 + $0x988] sm:$0xff]
  %v352 = vld [vmem:[%s0 + $0x990] sm:$0xff]
  %v353 = vld [vmem:[%s0 + $0x998] sm:$0xff]
  %v354 = vld [vmem:[%s0 + $0x9a0] sm:$0xff]
  %v355 = vld [vmem:[%s0 + $0x9a8] sm:$0xff]
  %v356 = vld [vmem:[%s0 + $0x9b0] sm:$0xff]
  %v357 = vld [vmem:[%s0 + $0x9b8] sm:$0xff]
  %v358 = vld [vmem:[%s0 + $0x9c0] sm:$0xff]
  %v359 = vld [vmem:[%s0 + $0x9c8] sm:$0xff]
  %v360 = vld [vmem:[%s0 + $0x9d0] sm:$0xff]
  %v361 = vld [vmem:[%s0 + $0x9d8] sm:$0xff]
  %v362 = vld [vmem:[%s0 + $0x9e0] sm:$0xff]
  %v363 = vld [vmem:[%s0 + $0x9e8] sm:$0xff]
  %v364 = vld [vmem:[%s0 + $0x9f0] sm:$0xff]
  %v365 = vld [vmem:[%s0 + $0x9f8] sm:$0xff]
  %v366 = vld [vmem:[%s0 + $0xa00] sm:$0xff]
  %v367 = vld [vmem:[%s0 + $0xa08] sm:$0xff]
  %v368 = vld [vmem:[%s0 + $0xa10] sm:$0xff]
  %v369 = vld [vmem:[%s0 + $0xa18] sm:$0xff]
  %v370 = vld [vmem:[%s0 + $0xa20] sm:$0xff]
  %v371 = vld [vmem:[%s0 + $0xa28] sm:$0xff]
  %v372 = vld [vmem:[%s0 + $0xa30] sm:$0xff]
  %v373 = vld [vmem:[%s0 + $0xa38] sm:$0xff]
  %v374 = vld [vmem:[%s0 + $0xa40] sm:$0xff]
  %v375 = vld [vmem:[%s0 + $0xa48] sm:$0xff]
  %v376 = vld [vmem:[%s0 + $0xa50] sm:$0xff]
  %v377 = vld [vmem:[%s0 + $0xa58] sm:$0xff]
  %v378 = vld [vmem:[%s0 + $0xa60] sm:$0xff]
  %v379 = vld [vmem:[%s0 + $0xa68] sm:$0xff]
  %v380 = vld [vmem:[%s0 + $0xa70] sm:$0xff]
  %v381 = vld [vmem:[%s0 + $0xa78] sm:$0xff]
  %v382 = vld [vmem:[%s0 + $0xa80] sm:$0xff]
  %v383 = vld [vmem:[%s0 + $0xa88] sm:$0xff]
  %v384 = vld [vmem:[%s0 + $0xa90] sm:$0xff]
  %v385 = vld [vmem:[%s0 + $0xa98] sm:$0xff]
  %v386 = vld [vmem:[%s0 + $0xaa0] sm:$0xff]
  %v387 = vld [vmem:[%s0 + $0xaa8] sm:$0xff]
  %v388 = vld [vmem:[%s0 + $0xab0] sm:$0xff]
  %v389 = vld [vmem:[%s0 + $0xab8] sm:$0xff]
  %v390 = vld [vmem:[%s0 + $0xac0] sm:$0xff]
  %v391 = vld [vmem:[%s0 + $0xac8] sm:$0xff]
  %v392 = vld [vmem:[%s0 + $0xad0] sm:$0xff]
  %v393 = vld [vmem:[%s0 + $0xad8] sm:$0xff]
  %v394 = vld [vmem:[%s0 + $0xae0] sm:$0xff]
  %v395 = vld [vmem:[%s0 + $0xae8] sm:$0xff]
  %v396 = vld [vmem:[%s0 + $0xaf0] sm:$0xff]
  %v397 = vld [vmem:[%s0 + $0xaf8] sm:$0xff]
  %v398 = vld [vmem:[%s0 + $0xb00] sm:$0xff]
  %v399 = vld [vmem:[%s0 + $0xb08] sm:$0xff]
  %v400 = vld [vmem:[%s0 + $0xb10] sm:$0xff]
  %v401 = vld [vmem:[%s0 + $0xb18] sm:$0xff]
  %v402 = vld [vmem:[%s0 + $0xb20] sm:$0xff]
  %v403 = vld [vmem:[%s0 + $0xb28] sm:$0xff]
  %v404 = vld [vmem:[%s0 + $0xb30] sm:$0xff]
  %v405 = vld [vmem:[%s0 + $0xb38] sm:$0xff]
  %v406 = vld [vmem:[%s0 + $0xb40] sm:$0xff]
  %v407 = vld [vmem:[%s0 + $0xb48] sm:$0xff]
  %v408 = vld [vmem:[%s0 + $0xb50] sm:$0xff]
  %v409 = vld [vmem:[%s0 + $0xb58] sm:$0xff]
  %v410 = vld [vmem:[%s0 + $0xb60] sm:$0xff]
  %v411 = vld [vmem:[%s0 + $0xb68] sm:$0xff]
  %v412 = vld [vmem:[%s0 + $0xb70] sm:$0xff]
  %v413 = vld [vmem:[%s0 + $0xb78] sm:$0xff]
  %v414 = vld [vmem:[%s0 + $0xb80] sm:$0xff]
  %v415 = vld [vmem:[%s0 + $0xb88] sm:$0xff]
  %v416 = vld [vmem:[%s0 + $0xb90] sm:$0xff]
  %v417 = vld [vmem:[%s0 + $0xb98] sm:$0xff]
  %v418 = vld [vmem:[%s0 + $0xba0] sm:$0xff]
  %v419 = vld [vmem:[%s0 + $0xba8] sm:$0xff]
  %v420 = vld [vmem:[%s0 + $0xbb0] sm:$0xff]
  %v421 = vld [vmem:[%s0 + $0xbb8] sm:$0xff]
  %v422 = vld [vmem:[%s0 + $0xbc0] sm:$0xff]
  %v423 = vld [vmem:[%s0 + $0xbc8] sm:$0xff]
  %v424 = vld [vmem:[%s0 + $0xbd0] sm:$0xff]
  %v425 = vld [vmem:[%s0 + $0xbd8] sm:$0xff]
  %v426 = vld [vmem:[%s0 + $0xbe0] sm:$0xff]
  %v427 = vld [vmem:[%s0 + $0xbe8] sm:$0xff]
  %v428 = vld [vmem:[%s0 + $0xbf0] sm:$0xff]
  %v429 = vld [vmem:[%s0 + $0xbf8] sm:$0xff]
  %v430 = vld [vmem:[%s1] sm:$0xff]
  %v431 = vld [vmem:[%s1 + $0x8] sm:$0xff]
  %v432 = vld [vmem:[%s1 + $0x10] sm:$0xff]
  %v433 = vld [vmem:[%s1 + $0x18] sm:$0xff]
  %v434 = vld [vmem:[%s1 + $0x20] sm:$0xff]
  %v435 = vld [vmem:[%s1 + $0x28] sm:$0xff]
  %v436 = vld [vmem:[%s1 + $0x30] sm:$0xff]
  %v437 = vld [vmem:[%s1 + $0x38] sm:$0xff]
  %v438 = vld [vmem:[%s1 + $0x40] sm:$0xff]
  %v439 = vld [vmem:[%s1 + $0x48] sm:$0xff]
  %v440 = vld [vmem:[%s1 + $0x50] sm:$0xff]
  %v441 = vld [vmem:[%s1 + $0x58] sm:$0xff]
  %v442 = vld [vmem:[%s1 + $0x60] sm:$0xff]
  %v443 = vld [vmem:[%s1 + $0x68] sm:$0xff]
  %v444 = vld [vmem:[%s1 + $0x70] sm:$0xff]
  %v445 = vld [vmem:[%s1 + $0x78] sm:$0xff]
  %v446 = vld [vmem:[%s1 + $0x80] sm:$0xff]
  %v447 = vld [vmem:[%s1 + $0x88] sm:$0xff]
  %v448 = vld [vmem:[%s1 + $0x90] sm:$0xff]
  %v449 = vld [vmem:[%s1 + $0x98] sm:$0xff]
  %v450 = vld [vmem:[%s1 + $0xa0] sm:$0xff]
  %v451 = vld [vmem:[%s1 + $0xa8] sm:$0xff]
  %v452 = vld [vmem:[%s1 + $0xb0] sm:$0xff]
  %v453 = vld [vmem:[%s1 + $0xb8] sm:$0xff]
  %v454 = vld [vmem:[%s1 + $0xc0] sm:$0xff]
  %v455 = vld [vmem:[%s1 + $0xc8] sm:$0xff]
  %v456 = vld [vmem:[%s1 + $0xd0] sm:$0xff]
  %v457 = vld [vmem:[%s1 + $0xd8] sm:$0xff]
  %v458 = vld [vmem:[%s1 + $0xe0] sm:$0xff]
  %v459 = vld [vmem:[%s1 + $0xe8] sm:$0xff]
  %v460 = vld [vmem:[%s1 + $0xf0] sm:$0xff]
  %v461 = vld [vmem:[%s1 + $0xf8] sm:$0xff]
  %v462 = vld [vmem:[%s1 + $0x100] sm:$0xff]
  %v463 = vld [vmem:[%s1 + $0x108] sm:$0xff]
  %v464 = vld [vmem:[%s1 + $0x110] sm:$0xff]
  %v465 = vld [vmem:[%s1 + $0x118] sm:$0xff]
  %v466 = vld [vmem:[%s1 + $0x120] sm:$0xff]
  %v467 = vld [vmem:[%s1 + $0x128] sm:$0x1]
  %v468 = vld [vmem:[%s3] sm:$0x1]
  %v470 = vperm.slane %v468, 0
  %vm472 = vcmask 334848
  %v474 = vsel %vm472, %v48, 0
  %v477 = vsel %vm472, %v51, 0
  %v480 = vsel %vm472, %v54, 0
  %v483 = vsel %vm472, %v57, 0
  %v486 = vsel %vm472, %v60, 0
  %v489 = vsel %vm472, %v63, 0
  %v492 = vsel %vm472, %v66, 0
  %v495 = vsel %vm472, %v69, 0
  %v498 = vsel %vm472, %v72, 0
  %v501 = vsel %vm472, %v75, 0
  %v504 = vsel %vm472, %v78, 0
  %v507 = vsel %vm472, %v81, 0
  %v510 = vsel %vm472, %v84, 0
  %v513 = vsel %vm472, %v87, 0
  %v516 = vsel %vm472, %v90, 0
  %v519 = vsel %vm472, %v93, 0
  %v522 = vsel %vm472, %v96, 0
  %v525 = vsel %vm472, %v99, 0
  %v528 = vsel %vm472, %v102, 0
  %v531 = vsel %vm472, %v105, 0
  %v534 = vsel %vm472, %v108, 0
  %v537 = vsel %vm472, %v111, 0
  %v540 = vsel %vm472, %v114, 0
  %v543 = vsel %vm472, %v117, 0
  %v546 = vsel %vm472, %v120, 0
  %v549 = vsel %vm472, %v123, 0
  %v552 = vsel %vm472, %v126, 0
  %v555 = vsel %vm472, %v129, 0
  %v558 = vsel %vm472, %v132, 0
  %v561 = vsel %vm472, %v135, 0
  %v564 = vsel %vm472, %v138, 0
  %v567 = vsel %vm472, %v141, 0
  %v570 = vsel %vm472, %v144, 0
  %v573 = vsel %vm472, %v147, 0
  %v576 = vsel %vm472, %v150, 0
  %v579 = vsel %vm472, %v153, 0
  %v582 = vsel %vm472, %v156, 0
  %v585 = vsel %vm472, %v159, 0
  %v588 = vsel %vm472, %v162, 0
  %v591 = vsel %vm472, %v165, 0
  %v594 = vsel %vm472, %v168, 0
  %v597 = vsel %vm472, %v171, 0
  %v600 = vsel %vm472, %v174, 0
  %v603 = vsel %vm472, %v177, 0
  %v606 = vsel %vm472, %v180, 0
  %v609 = vsel %vm472, %v183, 0
  %v612 = vsel %vm472, %v186, 0
  %v615 = vsel %vm472, %v189, 0
  %v618 = vsel %vm472, %v192, 0
  %v621 = vsel %vm472, %v195, 0
  %v624 = vsel %vm472, %v198, 0
  %v627 = vsel %vm472, %v201, 0
  %v630 = vsel %vm472, %v204, 0
  %v633 = vsel %vm472, %v207, 0
  %v636 = vsel %vm472, %v210, 0
  %v639 = vsel %vm472, %v213, 0
  %v642 = vsel %vm472, %v216, 0
  %v645 = vsel %vm472, %v219, 0
  %v648 = vsel %vm472, %v222, 0
  %v651 = vsel %vm472, %v225, 0
  %v654 = vsel %vm472, %v228, 0
  %v657 = vsel %vm472, %v231, 0
  %v660 = vsel %vm472, %v234, 0
  %v663 = vsel %vm472, %v237, 0
  %v666 = vsel %vm472, %v240, 0
  %v669 = vsel %vm472, %v243, 0
  %v672 = vsel %vm472, %v246, 0
  %v675 = vsel %vm472, %v249, 0
  %v678 = vsel %vm472, %v252, 0
  %v681 = vsel %vm472, %v255, 0
  %v684 = vsel %vm472, %v258, 0
  %v687 = vsel %vm472, %v261, 0
  %v690 = vsel %vm472, %v264, 0
  %v693 = vsel %vm472, %v267, 0
  %v696 = vsel %vm472, %v270, 0
  %v699 = vsel %vm472, %v273, 0
  %v702 = vsel %vm472, %v276, 0
  %v705 = vsel %vm472, %v279, 0
  %v708 = vsel %vm472, %v282, 0
  %v711 = vsel %vm472, %v285, 0
  %v714 = vsel %vm472, %v288, 0
  %v717 = vsel %vm472, %v291, 0
  %v720 = vsel %vm472, %v294, 0
  %v723 = vsel %vm472, %v297, 0
  %v726 = vsel %vm472, %v300, 0
  %v729 = vsel %vm472, %v303, 0
  %v732 = vsel %vm472, %v306, 0
  %v735 = vsel %vm472, %v309, 0
  %v738 = vsel %vm472, %v312, 0
  %v741 = vsel %vm472, %v315, 0
  %v744 = vsel %vm472, %v318, 0
  %v747 = vsel %vm472, %v321, 0
  %v750 = vsel %vm472, %v324, 0
  %v753 = vsel %vm472, %v327, 0
  %v756 = vsel %vm472, %v330, 0
  %v759 = vsel %vm472, %v333, 0
  %v762 = vsel %vm472, %v336, 0
  %v765 = vsel %vm472, %v339, 0
  %v768 = vsel %vm472, %v342, 0
  %v771 = vsel %vm472, %v345, 0
  %v774 = vsel %vm472, %v348, 0
  %v777 = vsel %vm472, %v351, 0
  %v780 = vsel %vm472, %v354, 0
  %v783 = vsel %vm472, %v357, 0
  %v786 = vsel %vm472, %v360, 0
  %v789 = vsel %vm472, %v363, 0
  %v792 = vsel %vm472, %v366, 0
  %v795 = vsel %vm472, %v369, 0
  %v798 = vsel %vm472, %v372, 0
  %v801 = vsel %vm472, %v375, 0
  %v804 = vsel %vm472, %v378, 0
  %v807 = vsel %vm472, %v381, 0
  %v810 = vsel %vm472, %v384, 0
  %v813 = vsel %vm472, %v387, 0
  %v816 = vsel %vm472, %v390, 0
  %v819 = vsel %vm472, %v393, 0
  %v822 = vsel %vm472, %v396, 0
  %v825 = vsel %vm472, %v399, 0
  %v828 = vsel %vm472, %v402, 0
  %v831 = vsel %vm472, %v405, 0
  %v834 = vsel %vm472, %v408, 0
  %v837 = vsel %vm472, %v411, 0
  %v840 = vsel %vm472, %v414, 0
  %v843 = vsel %vm472, %v417, 0
  %v846 = vsel %vm472, %v420, 0
  %v849 = vsel %vm472, %v423, 0
  %v852 = vsel %vm472, %v426, 0
  %v855 = vsel %vm472, %v429, 0
  %vm857 = vcmask 1040384
  %v859 = vsel %vm857, %v467, 0
  %861 = vmatpush.msra.mxu0 %v445
  %862 = vmatpush.msra.mxu0 %v444
  %863 = vmatpush.msra.mxu0 %v443
  %864 = vmatpush.msra.mxu0 %v442
  %865 = vmatpush.msra.mxu0 %v441
  %866 = vmatpush.msra.mxu0 %v440
  %867 = vmatpush.msra.mxu0 %v439
  %868 = vmatpush.msra.mxu0 %v438
  %869 = vmatpush.msra.mxu0 %v437
  %870 = vmatpush.msra.mxu0 %v436
  %871 = vmatpush.msra.mxu0 %v435
  %872 = vmatpush.msra.mxu0 %v434
  %873 = vmatpush.msra.mxu0 %v433
  %874 = vmatpush.msra.mxu0 %v432
  %875 = vmatpush.msra.mxu0 %v431
  %876 = vmatpush.msra.mxu0 %v430
  %877 = vmatmul.f32.gmra.mxu0 %v46
  %v878 = vpop.f32.mrf.mxu0
  %v879 = vadd.f32 %v470, %v878
  %880 = vmatmul.f32.gmra.mxu0 %v49
  %v881 = vpop.f32.mrf.mxu0
  %v882 = vadd.f32 %v470, %v881
  %883 = vmatmul.f32.gmra.mxu0 %v52
  %v884 = vpop.f32.mrf.mxu0
  %v885 = vadd.f32 %v470, %v884
  %886 = vmatmul.f32.gmra.mxu0 %v55
  %v887 = vpop.f32.mrf.mxu0
  %v888 = vadd.f32 %v470, %v887
  %889 = vmatmul.f32.gmra.mxu0 %v58
  %v890 = vpop.f32.mrf.mxu0
  %v891 = vadd.f32 %v470, %v890
  %892 = vmatmul.f32.gmra.mxu0 %v61
  %v893 = vpop.f32.mrf.mxu0
  %v894 = vadd.f32 %v470, %v893
  %895 = vmatmul.f32.gmra.mxu0 %v64
  %v896 = vpop.f32.mrf.mxu0
  %v897 = vadd.f32 %v470, %v896
  %898 = vmatmul.f32.gmra.mxu0 %v67
  %v899 = vpop.f32.mrf.mxu0
  %v900 = vadd.f32 %v470, %v899
  %901 = vmatmul.f32.gmra.mxu0 %v70
  %v902 = vpop.f32.mrf.mxu0
  %v903 = vadd.f32 %v470, %v902
  %904 = vmatmul.f32.gmra.mxu0 %v73
  %v905 = vpop.f32.mrf.mxu0
  %v906 = vadd.f32 %v470, %v905
  %907 = vmatmul.f32.gmra.mxu0 %v76
  %v908 = vpop.f32.mrf.mxu0
  %v909 = vadd.f32 %v470, %v908
  %910 = vmatmul.f32.gmra.mxu0 %v79
  %v911 = vpop.f32.mrf.mxu0
  %v912 = vadd.f32 %v470, %v911
  %913 = vmatmul.f32.gmra.mxu0 %v82
  %v914 = vpop.f32.mrf.mxu0
  %v915 = vadd.f32 %v470, %v914
  %916 = vmatmul.f32.gmra.mxu0 %v85
  %v917 = vpop.f32.mrf.mxu0
  %v918 = vadd.f32 %v470, %v917
  %919 = vmatmul.f32.gmra.mxu0 %v88
  %v920 = vpop.f32.mrf.mxu0
  %v921 = vadd.f32 %v470, %v920
  %922 = vmatmul.f32.gmra.mxu0 %v91
  %v923 = vpop.f32.mrf.mxu0
  %v924 = vadd.f32 %v470, %v923
  %925 = vmatmul.f32.gmra.mxu0 %v94
  %v926 = vpop.f32.mrf.mxu0
  %v927 = vadd.f32 %v470, %v926
  %928 = vmatmul.f32.gmra.mxu0 %v97
  %v929 = vpop.f32.mrf.mxu0
  %v930 = vadd.f32 %v470, %v929
  %931 = vmatmul.f32.gmra.mxu0 %v100
  %v932 = vpop.f32.mrf.mxu0
  %v933 = vadd.f32 %v470, %v932
  %934 = vmatmul.f32.gmra.mxu0 %v103
  %v935 = vpop.f32.mrf.mxu0
  %v936 = vadd.f32 %v470, %v935
  %937 = vmatmul.f32.gmra.mxu0 %v106
  %v938 = vpop.f32.mrf.mxu0
  %v939 = vadd.f32 %v470, %v938
  %940 = vmatmul.f32.gmra.mxu0 %v109
  %v941 = vpop.f32.mrf.mxu0
  %v942 = vadd.f32 %v470, %v941
  %943 = vmatmul.f32.gmra.mxu0 %v112
  %v944 = vpop.f32.mrf.mxu0
  %v945 = vadd.f32 %v470, %v944
  %946 = vmatmul.f32.gmra.mxu0 %v115
  %v947 = vpop.f32.mrf.mxu0
  %v948 = vadd.f32 %v470, %v947
  %949 = vmatmul.f32.gmra.mxu0 %v118
  %v950 = vpop.f32.mrf.mxu0
  %v951 = vadd.f32 %v470, %v950
  %952 = vmatmul.f32.gmra.mxu0 %v121
  %v953 = vpop.f32.mrf.mxu0
  %v954 = vadd.f32 %v470, %v953
  %955 = vmatmul.f32.gmra.mxu0 %v124
  %v956 = vpop.f32.mrf.mxu0
  %v957 = vadd.f32 %v470, %v956
  %958 = vmatmul.f32.gmra.mxu0 %v127
  %v959 = vpop.f32.mrf.mxu0
  %v960 = vadd.f32 %v470, %v959
  %961 = vmatmul.f32.gmra.mxu0 %v130
  %v962 = vpop.f32.mrf.mxu0
  %v963 = vadd.f32 %v470, %v962
  %964 = vmatmul.f32.gmra.mxu0 %v133
  %v965 = vpop.f32.mrf.mxu0
  %v966 = vadd.f32 %v470, %v965
  %967 = vmatmul.f32.gmra.mxu0 %v136
  %v968 = vpop.f32.mrf.mxu0
  %v969 = vadd.f32 %v470, %v968
  %970 = vmatmul.f32.gmra.mxu0 %v139
  %v971 = vpop.f32.mrf.mxu0
  %v972 = vadd.f32 %v470, %v971
  %973 = vmatmul.f32.gmra.mxu0 %v142
  %v974 = vpop.f32.mrf.mxu0
  %v975 = vadd.f32 %v470, %v974
  %976 = vmatmul.f32.gmra.mxu0 %v145
  %v977 = vpop.f32.mrf.mxu0
  %v978 = vadd.f32 %v470, %v977
  %979 = vmatmul.f32.gmra.mxu0 %v148
  %v980 = vpop.f32.mrf.mxu0
  %v981 = vadd.f32 %v470, %v980
  %982 = vmatmul.f32.gmra.mxu0 %v151
  %v983 = vpop.f32.mrf.mxu0
  %v984 = vadd.f32 %v470, %v983
  %985 = vmatmul.f32.gmra.mxu0 %v154
  %v986 = vpop.f32.mrf.mxu0
  %v987 = vadd.f32 %v470, %v986
  %988 = vmatmul.f32.gmra.mxu0 %v157
  %v989 = vpop.f32.mrf.mxu0
  %v990 = vadd.f32 %v470, %v989
  %991 = vmatmul.f32.gmra.mxu0 %v160
  %v992 = vpop.f32.mrf.mxu0
  %v993 = vadd.f32 %v470, %v992
  %994 = vmatmul.f32.gmra.mxu0 %v163
  %v995 = vpop.f32.mrf.mxu0
  %v996 = vadd.f32 %v470, %v995
  %997 = vmatmul.f32.gmra.mxu0 %v166
  %v998 = vpop.f32.mrf.mxu0
  %v999 = vadd.f32 %v470, %v998
  %1000 = vmatmul.f32.gmra.mxu0 %v169
  %v1001 = vpop.f32.mrf.mxu0
  %v1002 = vadd.f32 %v470, %v1001
  %1003 = vmatmul.f32.gmra.mxu0 %v172
  %v1004 = vpop.f32.mrf.mxu0
  %v1005 = vadd.f32 %v470, %v1004
  %1006 = vmatmul.f32.gmra.mxu0 %v175
  %v1007 = vpop.f32.mrf.mxu0
  %v1008 = vadd.f32 %v470, %v1007
  %1009 = vmatmul.f32.gmra.mxu0 %v178
  %v1010 = vpop.f32.mrf.mxu0
  %v1011 = vadd.f32 %v470, %v1010
  %1012 = vmatmul.f32.gmra.mxu0 %v181
  %v1013 = vpop.f32.mrf.mxu0
  %v1014 = vadd.f32 %v470, %v1013
  %1015 = vmatmul.f32.gmra.mxu0 %v184
  %v1016 = vpop.f32.mrf.mxu0
  %v1017 = vadd.f32 %v470, %v1016
  %1018 = vmatmul.f32.gmra.mxu0 %v187
  %v1019 = vpop.f32.mrf.mxu0
  %v1020 = vadd.f32 %v470, %v1019
  %1021 = vmatmul.f32.gmra.mxu0 %v190
  %v1022 = vpop.f32.mrf.mxu0
  %v1023 = vadd.f32 %v470, %v1022
  %1024 = vmatmul.f32.gmra.mxu0 %v193
  %v1025 = vpop.f32.mrf.mxu0
  %v1026 = vadd.f32 %v470, %v1025
  %1027 = vmatmul.f32.gmra.mxu0 %v196
  %v1028 = vpop.f32.mrf.mxu0
  %v1029 = vadd.f32 %v470, %v1028
  %1030 = vmatmul.f32.gmra.mxu0 %v199
  %v1031 = vpop.f32.mrf.mxu0
  %v1032 = vadd.f32 %v470, %v1031
  %1033 = vmatmul.f32.gmra.mxu0 %v202
  %v1034 = vpop.f32.mrf.mxu0
  %v1035 = vadd.f32 %v470, %v1034
  %1036 = vmatmul.f32.gmra.mxu0 %v205
  %v1037 = vpop.f32.mrf.mxu0
  %v1038 = vadd.f32 %v470, %v1037
  %1039 = vmatmul.f32.gmra.mxu0 %v208
  %v1040 = vpop.f32.mrf.mxu0
  %v1041 = vadd.f32 %v470, %v1040
  %1042 = vmatmul.f32.gmra.mxu0 %v211
  %v1043 = vpop.f32.mrf.mxu0
  %v1044 = vadd.f32 %v470, %v1043
  %1045 = vmatmul.f32.gmra.mxu0 %v214
  %v1046 = vpop.f32.mrf.mxu0
  %v1047 = vadd.f32 %v470, %v1046
  %1048 = vmatmul.f32.gmra.mxu0 %v217
  %v1049 = vpop.f32.mrf.mxu0
  %v1050 = vadd.f32 %v470, %v1049
  %1051 = vmatmul.f32.gmra.mxu0 %v220
  %v1052 = vpop.f32.mrf.mxu0
  %v1053 = vadd.f32 %v470, %v1052
  %1054 = vmatmul.f32.gmra.mxu0 %v223
  %v1055 = vpop.f32.mrf.mxu0
  %v1056 = vadd.f32 %v470, %v1055
  %1057 = vmatmul.f32.gmra.mxu0 %v226
  %v1058 = vpop.f32.mrf.mxu0
  %v1059 = vadd.f32 %v470, %v1058
  %1060 = vmatmul.f32.gmra.mxu0 %v229
  %v1061 = vpop.f32.mrf.mxu0
  %v1062 = vadd.f32 %v470, %v1061
  %1063 = vmatmul.f32.gmra.mxu0 %v232
  %v1064 = vpop.f32.mrf.mxu0
  %v1065 = vadd.f32 %v470, %v1064
  %1066 = vmatmul.f32.gmra.mxu0 %v235
  %v1067 = vpop.f32.mrf.mxu0
  %v1068 = vadd.f32 %v470, %v1067
  %1069 = vmatmul.f32.gmra.mxu0 %v238
  %v1070 = vpop.f32.mrf.mxu0
  %v1071 = vadd.f32 %v470, %v1070
  %1072 = vmatmul.f32.gmra.mxu0 %v241
  %v1073 = vpop.f32.mrf.mxu0
  %v1074 = vadd.f32 %v470, %v1073
  %1075 = vmatmul.f32.gmra.mxu0 %v244
  %v1076 = vpop.f32.mrf.mxu0
  %v1077 = vadd.f32 %v470, %v1076
  %1078 = vmatmul.f32.gmra.mxu0 %v247
  %v1079 = vpop.f32.mrf.mxu0
  %v1080 = vadd.f32 %v470, %v1079
  %1081 = vmatmul.f32.gmra.mxu0 %v250
  %v1082 = vpop.f32.mrf.mxu0
  %v1083 = vadd.f32 %v470, %v1082
  %1084 = vmatmul.f32.gmra.mxu0 %v253
  %v1085 = vpop.f32.mrf.mxu0
  %v1086 = vadd.f32 %v470, %v1085
  %1087 = vmatmul.f32.gmra.mxu0 %v256
  %v1088 = vpop.f32.mrf.mxu0
  %v1089 = vadd.f32 %v470, %v1088
  %1090 = vmatmul.f32.gmra.mxu0 %v259
  %v1091 = vpop.f32.mrf.mxu0
  %v1092 = vadd.f32 %v470, %v1091
  %1093 = vmatmul.f32.gmra.mxu0 %v262
  %v1094 = vpop.f32.mrf.mxu0
  %v1095 = vadd.f32 %v470, %v1094
  %1096 = vmatmul.f32.gmra.mxu0 %v265
  %v1097 = vpop.f32.mrf.mxu0
  %v1098 = vadd.f32 %v470, %v1097
  %1099 = vmatmul.f32.gmra.mxu0 %v268
  %v1100 = vpop.f32.mrf.mxu0
  %v1101 = vadd.f32 %v470, %v1100
  %1102 = vmatmul.f32.gmra.mxu0 %v271
  %v1103 = vpop.f32.mrf.mxu0
  %v1104 = vadd.f32 %v470, %v1103
  %1105 = vmatmul.f32.gmra.mxu0 %v274
  %v1106 = vpop.f32.mrf.mxu0
  %v1107 = vadd.f32 %v470, %v1106
  %1108 = vmatmul.f32.gmra.mxu0 %v277
  %v1109 = vpop.f32.mrf.mxu0
  %v1110 = vadd.f32 %v470, %v1109
  %1111 = vmatmul.f32.gmra.mxu0 %v280
  %v1112 = vpop.f32.mrf.mxu0
  %v1113 = vadd.f32 %v470, %v1112
  %1114 = vmatmul.f32.gmra.mxu0 %v283
  %v1115 = vpop.f32.mrf.mxu0
  %v1116 = vadd.f32 %v470, %v1115
  %1117 = vmatmul.f32.gmra.mxu0 %v286
  %v1118 = vpop.f32.mrf.mxu0
  %v1119 = vadd.f32 %v470, %v1118
  %1120 = vmatmul.f32.gmra.mxu0 %v289
  %v1121 = vpop.f32.mrf.mxu0
  %v1122 = vadd.f32 %v470, %v1121
  %1123 = vmatmul.f32.gmra.mxu0 %v292
  %v1124 = vpop.f32.mrf.mxu0
  %v1125 = vadd.f32 %v470, %v1124
  %1126 = vmatmul.f32.gmra.mxu0 %v295
  %v1127 = vpop.f32.mrf.mxu0
  %v1128 = vadd.f32 %v470, %v1127
  %1129 = vmatmul.f32.gmra.mxu0 %v298
  %v1130 = vpop.f32.mrf.mxu0
  %v1131 = vadd.f32 %v470, %v1130
  %1132 = vmatmul.f32.gmra.mxu0 %v301
  %v1133 = vpop.f32.mrf.mxu0
  %v1134 = vadd.f32 %v470, %v1133
  %1135 = vmatmul.f32.gmra.mxu0 %v304
  %v1136 = vpop.f32.mrf.mxu0
  %v1137 = vadd.f32 %v470, %v1136
  %1138 = vmatmul.f32.gmra.mxu0 %v307
  %v1139 = vpop.f32.mrf.mxu0
  %v1140 = vadd.f32 %v470, %v1139
  %1141 = vmatmul.f32.gmra.mxu0 %v310
  %v1142 = vpop.f32.mrf.mxu0
  %v1143 = vadd.f32 %v470, %v1142
  %1144 = vmatmul.f32.gmra.mxu0 %v313
  %v1145 = vpop.f32.mrf.mxu0
  %v1146 = vadd.f32 %v470, %v1145
  %1147 = vmatmul.f32.gmra.mxu0 %v316
  %v1148 = vpop.f32.mrf.mxu0
  %v1149 = vadd.f32 %v470, %v1148
  %1150 = vmatmul.f32.gmra.mxu0 %v319
  %v1151 = vpop.f32.mrf.mxu0
  %v1152 = vadd.f32 %v470, %v1151
  %1153 = vmatmul.f32.gmra.mxu0 %v322
  %v1154 = vpop.f32.mrf.mxu0
  %v1155 = vadd.f32 %v470, %v1154
  %1156 = vmatmul.f32.gmra.mxu0 %v325
  %v1157 = vpop.f32.mrf.mxu0
  %v1158 = vadd.f32 %v470, %v1157
  %1159 = vmatmul.f32.gmra.mxu0 %v328
  %v1160 = vpop.f32.mrf.mxu0
  %v1161 = vadd.f32 %v470, %v1160
  %1162 = vmatmul.f32.gmra.mxu0 %v331
  %v1163 = vpop.f32.mrf.mxu0
  %v1164 = vadd.f32 %v470, %v1163
  %1165 = vmatmul.f32.gmra.mxu0 %v334
  %v1166 = vpop.f32.mrf.mxu0
  %v1167 = vadd.f32 %v470, %v1166
  %1168 = vmatmul.f32.gmra.mxu0 %v337
  %v1169 = vpop.f32.mrf.mxu0
  %v1170 = vadd.f32 %v470, %v1169
  %1171 = vmatmul.f32.gmra.mxu0 %v340
  %v1172 = vpop.f32.mrf.mxu0
  %v1173 = vadd.f32 %v470, %v1172
  %1174 = vmatmul.f32.gmra.mxu0 %v343
  %v1175 = vpop.f32.mrf.mxu0
  %v1176 = vadd.f32 %v470, %v1175
  %1177 = vmatmul.f32.gmra.mxu0 %v346
  %v1178 = vpop.f32.mrf.mxu0
  %v1179 = vadd.f32 %v470, %v1178
  %1180 = vmatmul.f32.gmra.mxu0 %v349
  %v1181 = vpop.f32.mrf.mxu0
  %v1182 = vadd.f32 %v470, %v1181
  %1183 = vmatmul.f32.gmra.mxu0 %v352
  %v1184 = vpop.f32.mrf.mxu0
  %v1185 = vadd.f32 %v470, %v1184
  %1186 = vmatmul.f32.gmra.mxu0 %v355
  %v1187 = vpop.f32.mrf.mxu0
  %v1188 = vadd.f32 %v470, %v1187
  %1189 = vmatmul.f32.gmra.mxu0 %v358
  %v1190 = vpop.f32.mrf.mxu0
  %v1191 = vadd.f32 %v470, %v1190
  %1192 = vmatmul.f32.gmra.mxu0 %v361
  %v1193 = vpop.f32.mrf.mxu0
  %v1194 = vadd.f32 %v470, %v1193
  %1195 = vmatmul.f32.gmra.mxu0 %v364
  %v1196 = vpop.f32.mrf.mxu0
  %v1197 = vadd.f32 %v470, %v1196
  %1198 = vmatmul.f32.gmra.mxu0 %v367
  %v1199 = vpop.f32.mrf.mxu0
  %v1200 = vadd.f32 %v470, %v1199
  %1201 = vmatmul.f32.gmra.mxu0 %v370
  %v1202 = vpop.f32.mrf.mxu0
  %v1203 = vadd.f32 %v470, %v1202
  %1204 = vmatmul.f32.gmra.mxu0 %v373
  %v1205 = vpop.f32.mrf.mxu0
  %v1206 = vadd.f32 %v470, %v1205
  %1207 = vmatmul.f32.gmra.mxu0 %v376
  %v1208 = vpop.f32.mrf.mxu0
  %v1209 = vadd.f32 %v470, %v1208
  %1210 = vmatmul.f32.gmra.mxu0 %v379
  %v1211 = vpop.f32.mrf.mxu0
  %v1212 = vadd.f32 %v470, %v1211
  %1213 = vmatmul.f32.gmra.mxu0 %v382
  %v1214 = vpop.f32.mrf.mxu0
  %v1215 = vadd.f32 %v470, %v1214
  %1216 = vmatmul.f32.gmra.mxu0 %v385
  %v1217 = vpop.f32.mrf.mxu0
  %v1218 = vadd.f32 %v470, %v1217
  %1219 = vmatmul.f32.gmra.mxu0 %v388
  %v1220 = vpop.f32.mrf.mxu0
  %v1221 = vadd.f32 %v470, %v1220
  %1222 = vmatmul.f32.gmra.mxu0 %v391
  %v1223 = vpop.f32.mrf.mxu0
  %v1224 = vadd.f32 %v470, %v1223
  %1225 = vmatmul.f32.gmra.mxu0 %v394
  %v1226 = vpop.f32.mrf.mxu0
  %v1227 = vadd.f32 %v470, %v1226
  %1228 = vmatmul.f32.gmra.mxu0 %v397
  %v1229 = vpop.f32.mrf.mxu0
  %v1230 = vadd.f32 %v470, %v1229
  %1231 = vmatmul.f32.gmra.mxu0 %v400
  %v1232 = vpop.f32.mrf.mxu0
  %v1233 = vadd.f32 %v470, %v1232
  %1234 = vmatmul.f32.gmra.mxu0 %v403
  %v1235 = vpop.f32.mrf.mxu0
  %v1236 = vadd.f32 %v470, %v1235
  %1237 = vmatmul.f32.gmra.mxu0 %v406
  %v1238 = vpop.f32.mrf.mxu0
  %v1239 = vadd.f32 %v470, %v1238
  %1240 = vmatmul.f32.gmra.mxu0 %v409
  %v1241 = vpop.f32.mrf.mxu0
  %v1242 = vadd.f32 %v470, %v1241
  %1243 = vmatmul.f32.gmra.mxu0 %v412
  %v1244 = vpop.f32.mrf.mxu0
  %v1245 = vadd.f32 %v470, %v1244
  %1246 = vmatmul.f32.gmra.mxu0 %v415
  %v1247 = vpop.f32.mrf.mxu0
  %v1248 = vadd.f32 %v470, %v1247
  %1249 = vmatmul.f32.gmra.mxu0 %v418
  %v1250 = vpop.f32.mrf.mxu0
  %v1251 = vadd.f32 %v470, %v1250
  %1252 = vmatmul.f32.gmra.mxu0 %v421
  %v1253 = vpop.f32.mrf.mxu0
  %v1254 = vadd.f32 %v470, %v1253
  %1255 = vmatmul.f32.gmra.mxu0 %v424
  %v1256 = vpop.f32.mrf.mxu0
  %v1257 = vadd.f32 %v470, %v1256
  %1258 = vmatmul.f32.gmra.mxu0 %v427
  %v1259 = vpop.f32.mrf.mxu0
  %v1260 = vadd.f32 %v470, %v1259
  %1261 = vdwg.mxu0
  %1262 = vmatpush.msra.mxu0 %v461
  %1263 = vmatpush.msra.mxu0 %v460
  %1264 = vmatpush.msra.mxu0 %v459
  %1265 = vmatpush.msra.mxu0 %v458
  %1266 = vmatpush.msra.mxu0 %v457
  %1267 = vmatpush.msra.mxu0 %v456
  %1268 = vmatpush.msra.mxu0 %v455
  %1269 = vmatpush.msra.mxu0 %v454
  %1270 = vmatpush.msra.mxu0 %v453
  %1271 = vmatpush.msra.mxu0 %v452
  %1272 = vmatpush.msra.mxu0 %v451
  %1273 = vmatpush.msra.mxu0 %v450
  %1274 = vmatpush.msra.mxu0 %v449
  %1275 = vmatpush.msra.mxu0 %v448
  %1276 = vmatpush.msra.mxu0 %v447
  %1277 = vmatpush.msra.mxu0 %v446
  %1278 = vmatmul.f32.gmra.mxu0 %v47
  %v1279 = vpop.f32.mrf.mxu0
  %v1280 = vadd.f32 %v879, %v1279
  %1281 = vmatmul.f32.gmra.mxu0 %v50
  %v1282 = vpop.f32.mrf.mxu0
  %v1283 = vadd.f32 %v882, %v1282
  %1284 = vmatmul.f32.gmra.mxu0 %v53
  %v1285 = vpop.f32.mrf.mxu0
  %v1286 = vadd.f32 %v885, %v1285
  %1287 = vmatmul.f32.gmra.mxu0 %v56
  %v1288 = vpop.f32.mrf.mxu0
  %v1289 = vadd.f32 %v888, %v1288
  %1290 = vmatmul.f32.gmra.mxu0 %v59
  %v1291 = vpop.f32.mrf.mxu0
  %v1292 = vadd.f32 %v891, %v1291
  %1293 = vmatmul.f32.gmra.mxu0 %v62
  %v1294 = vpop.f32.mrf.mxu0
  %v1295 = vadd.f32 %v894, %v1294
  %1296 = vmatmul.f32.gmra.mxu0 %v65
  %v1297 = vpop.f32.mrf.mxu0
  %v1298 = vadd.f32 %v897, %v1297
  %1299 = vmatmul.f32.gmra.mxu0 %v68
  %v1300 = vpop.f32.mrf.mxu0
  %v1301 = vadd.f32 %v900, %v1300
  %1302 = vmatmul.f32.gmra.mxu0 %v71
  %v1303 = vpop.f32.mrf.mxu0
  %v1304 = vadd.f32 %v903, %v1303
  %1305 = vmatmul.f32.gmra.mxu0 %v74
  %v1306 = vpop.f32.mrf.mxu0
  %v1307 = vadd.f32 %v906, %v1306
  %1308 = vmatmul.f32.gmra.mxu0 %v77
  %v1309 = vpop.f32.mrf.mxu0
  %v1310 = vadd.f32 %v909, %v1309
  %1311 = vmatmul.f32.gmra.mxu0 %v80
  %v1312 = vpop.f32.mrf.mxu0
  %v1313 = vadd.f32 %v912, %v1312
  %1314 = vmatmul.f32.gmra.mxu0 %v83
  %v1315 = vpop.f32.mrf.mxu0
  %v1316 = vadd.f32 %v915, %v1315
  %1317 = vmatmul.f32.gmra.mxu0 %v86
  %v1318 = vpop.f32.mrf.mxu0
  %v1319 = vadd.f32 %v918, %v1318
  %1320 = vmatmul.f32.gmra.mxu0 %v89
  %v1321 = vpop.f32.mrf.mxu0
  %v1322 = vadd.f32 %v921, %v1321
  %1323 = vmatmul.f32.gmra.mxu0 %v92
  %v1324 = vpop.f32.mrf.mxu0
  %v1325 = vadd.f32 %v924, %v1324
  %1326 = vmatmul.f32.gmra.mxu0 %v95
  %v1327 = vpop.f32.mrf.mxu0
  %v1328 = vadd.f32 %v927, %v1327
  %1329 = vmatmul.f32.gmra.mxu0 %v98
  %v1330 = vpop.f32.mrf.mxu0
  %v1331 = vadd.f32 %v930, %v1330
  %1332 = vmatmul.f32.gmra.mxu0 %v101
  %v1333 = vpop.f32.mrf.mxu0
  %v1334 = vadd.f32 %v933, %v1333
  %1335 = vmatmul.f32.gmra.mxu0 %v104
  %v1336 = vpop.f32.mrf.mxu0
  %v1337 = vadd.f32 %v936, %v1336
  %1338 = vmatmul.f32.gmra.mxu0 %v107
  %v1339 = vpop.f32.mrf.mxu0
  %v1340 = vadd.f32 %v939, %v1339
  %1341 = vmatmul.f32.gmra.mxu0 %v110
  %v1342 = vpop.f32.mrf.mxu0
  %v1343 = vadd.f32 %v942, %v1342
  %1344 = vmatmul.f32.gmra.mxu0 %v113
  %v1345 = vpop.f32.mrf.mxu0
  %v1346 = vadd.f32 %v945, %v1345
  %1347 = vmatmul.f32.gmra.mxu0 %v116
  %v1348 = vpop.f32.mrf.mxu0
  %v1349 = vadd.f32 %v948, %v1348
  %1350 = vmatmul.f32.gmra.mxu0 %v119
  %v1351 = vpop.f32.mrf.mxu0
  %v1352 = vadd.f32 %v951, %v1351
  %1353 = vmatmul.f32.gmra.mxu0 %v122
  %v1354 = vpop.f32.mrf.mxu0
  %v1355 = vadd.f32 %v954, %v1354
  %1356 = vmatmul.f32.gmra.mxu0 %v125
  %v1357 = vpop.f32.mrf.mxu0
  %v1358 = vadd.f32 %v957, %v1357
  %1359 = vmatmul.f32.gmra.mxu0 %v128
  %v1360 = vpop.f32.mrf.mxu0
  %v1361 = vadd.f32 %v960, %v1360
  %1362 = vmatmul.f32.gmra.mxu0 %v131
  %v1363 = vpop.f32.mrf.mxu0
  %v1364 = vadd.f32 %v963, %v1363
  %1365 = vmatmul.f32.gmra.mxu0 %v134
  %v1366 = vpop.f32.mrf.mxu0
  %v1367 = vadd.f32 %v966, %v1366
  %1368 = vmatmul.f32.gmra.mxu0 %v137
  %v1369 = vpop.f32.mrf.mxu0
  %v1370 = vadd.f32 %v969, %v1369
  %1371 = vmatmul.f32.gmra.mxu0 %v140
  %v1372 = vpop.f32.mrf.mxu0
  %v1373 = vadd.f32 %v972, %v1372
  %1374 = vmatmul.f32.gmra.mxu0 %v143
  %v1375 = vpop.f32.mrf.mxu0
  %v1376 = vadd.f32 %v975, %v1375
  %1377 = vmatmul.f32.gmra.mxu0 %v146
  %v1378 = vpop.f32.mrf.mxu0
  %v1379 = vadd.f32 %v978, %v1378
  %1380 = vmatmul.f32.gmra.mxu0 %v149
  %v1381 = vpop.f32.mrf.mxu0
  %v1382 = vadd.f32 %v981, %v1381
  %1383 = vmatmul.f32.gmra.mxu0 %v152
  %v1384 = vpop.f32.mrf.mxu0
  %v1385 = vadd.f32 %v984, %v1384
  %1386 = vmatmul.f32.gmra.mxu0 %v155
  %v1387 = vpop.f32.mrf.mxu0
  %v1388 = vadd.f32 %v987, %v1387
  %1389 = vmatmul.f32.gmra.mxu0 %v158
  %v1390 = vpop.f32.mrf.mxu0
  %v1391 = vadd.f32 %v990, %v1390
  %1392 = vmatmul.f32.gmra.mxu0 %v161
  %v1393 = vpop.f32.mrf.mxu0
  %v1394 = vadd.f32 %v993, %v1393
  %1395 = vmatmul.f32.gmra.mxu0 %v164
  %v1396 = vpop.f32.mrf.mxu0
  %v1397 = vadd.f32 %v996, %v1396
  %1398 = vmatmul.f32.gmra.mxu0 %v167
  %v1399 = vpop.f32.mrf.mxu0
  %v1400 = vadd.f32 %v999, %v1399
  %1401 = vmatmul.f32.gmra.mxu0 %v170
  %v1402 = vpop.f32.mrf.mxu0
  %v1403 = vadd.f32 %v1002, %v1402
  %1404 = vmatmul.f32.gmra.mxu0 %v173
  %v1405 = vpop.f32.mrf.mxu0
  %v1406 = vadd.f32 %v1005, %v1405
  %1407 = vmatmul.f32.gmra.mxu0 %v176
  %v1408 = vpop.f32.mrf.mxu0
  %v1409 = vadd.f32 %v1008, %v1408
  %1410 = vmatmul.f32.gmra.mxu0 %v179
  %v1411 = vpop.f32.mrf.mxu0
  %v1412 = vadd.f32 %v1011, %v1411
  %1413 = vmatmul.f32.gmra.mxu0 %v182
  %v1414 = vpop.f32.mrf.mxu0
  %v1415 = vadd.f32 %v1014, %v1414
  %1416 = vmatmul.f32.gmra.mxu0 %v185
  %v1417 = vpop.f32.mrf.mxu0
  %v1418 = vadd.f32 %v1017, %v1417
  %1419 = vmatmul.f32.gmra.mxu0 %v188
  %v1420 = vpop.f32.mrf.mxu0
  %v1421 = vadd.f32 %v1020, %v1420
  %1422 = vmatmul.f32.gmra.mxu0 %v191
  %v1423 = vpop.f32.mrf.mxu0
  %v1424 = vadd.f32 %v1023, %v1423
  %1425 = vmatmul.f32.gmra.mxu0 %v194
  %v1426 = vpop.f32.mrf.mxu0
  %v1427 = vadd.f32 %v1026, %v1426
  %1428 = vmatmul.f32.gmra.mxu0 %v197
  %v1429 = vpop.f32.mrf.mxu0
  %v1430 = vadd.f32 %v1029, %v1429
  %1431 = vmatmul.f32.gmra.mxu0 %v200
  %v1432 = vpop.f32.mrf.mxu0
  %v1433 = vadd.f32 %v1032, %v1432
  %1434 = vmatmul.f32.gmra.mxu0 %v203
  %v1435 = vpop.f32.mrf.mxu0
  %v1436 = vadd.f32 %v1035, %v1435
  %1437 = vmatmul.f32.gmra.mxu0 %v206
  %v1438 = vpop.f32.mrf.mxu0
  %v1439 = vadd.f32 %v1038, %v1438
  %1440 = vmatmul.f32.gmra.mxu0 %v209
  %v1441 = vpop.f32.mrf.mxu0
  %v1442 = vadd.f32 %v1041, %v1441
  %1443 = vmatmul.f32.gmra.mxu0 %v212
  %v1444 = vpop.f32.mrf.mxu0
  %v1445 = vadd.f32 %v1044, %v1444
  %1446 = vmatmul.f32.gmra.mxu0 %v215
  %v1447 = vpop.f32.mrf.mxu0
  %v1448 = vadd.f32 %v1047, %v1447
  %1449 = vmatmul.f32.gmra.mxu0 %v218
  %v1450 = vpop.f32.mrf.mxu0
  %v1451 = vadd.f32 %v1050, %v1450
  %1452 = vmatmul.f32.gmra.mxu0 %v221
  %v1453 = vpop.f32.mrf.mxu0
  %v1454 = vadd.f32 %v1053, %v1453
  %1455 = vmatmul.f32.gmra.mxu0 %v224
  %v1456 = vpop.f32.mrf.mxu0
  %v1457 = vadd.f32 %v1056, %v1456
  %1458 = vmatmul.f32.gmra.mxu0 %v227
  %v1459 = vpop.f32.mrf.mxu0
  %v1460 = vadd.f32 %v1059, %v1459
  %1461 = vmatmul.f32.gmra.mxu0 %v230
  %v1462 = vpop.f32.mrf.mxu0
  %v1463 = vadd.f32 %v1062, %v1462
  %1464 = vmatmul.f32.gmra.mxu0 %v233
  %v1465 = vpop.f32.mrf.mxu0
  %v1466 = vadd.f32 %v1065, %v1465
  %1467 = vmatmul.f32.gmra.mxu0 %v236
  %v1468 = vpop.f32.mrf.mxu0
  %v1469 = vadd.f32 %v1068, %v1468
  %1470 = vmatmul.f32.gmra.mxu0 %v239
  %v1471 = vpop.f32.mrf.mxu0
  %v1472 = vadd.f32 %v1071, %v1471
  %1473 = vmatmul.f32.gmra.mxu0 %v242
  %v1474 = vpop.f32.mrf.mxu0
  %v1475 = vadd.f32 %v1074, %v1474
  %1476 = vmatmul.f32.gmra.mxu0 %v245
  %v1477 = vpop.f32.mrf.mxu0
  %v1478 = vadd.f32 %v1077, %v1477
  %1479 = vmatmul.f32.gmra.mxu0 %v248
  %v1480 = vpop.f32.mrf.mxu0
  %v1481 = vadd.f32 %v1080, %v1480
  %1482 = vmatmul.f32.gmra.mxu0 %v251
  %v1483 = vpop.f32.mrf.mxu0
  %v1484 = vadd.f32 %v1083, %v1483
  %1485 = vmatmul.f32.gmra.mxu0 %v254
  %v1486 = vpop.f32.mrf.mxu0
  %v1487 = vadd.f32 %v1086, %v1486
  %1488 = vmatmul.f32.gmra.mxu0 %v257
  %v1489 = vpop.f32.mrf.mxu0
  %v1490 = vadd.f32 %v1089, %v1489
  %1491 = vmatmul.f32.gmra.mxu0 %v260
  %v1492 = vpop.f32.mrf.mxu0
  %v1493 = vadd.f32 %v1092, %v1492
  %1494 = vmatmul.f32.gmra.mxu0 %v263
  %v1495 = vpop.f32.mrf.mxu0
  %v1496 = vadd.f32 %v1095, %v1495
  %1497 = vmatmul.f32.gmra.mxu0 %v266
  %v1498 = vpop.f32.mrf.mxu0
  %v1499 = vadd.f32 %v1098, %v1498
  %1500 = vmatmul.f32.gmra.mxu0 %v269
  %v1501 = vpop.f32.mrf.mxu0
  %v1502 = vadd.f32 %v1101, %v1501
  %1503 = vmatmul.f32.gmra.mxu0 %v272
  %v1504 = vpop.f32.mrf.mxu0
  %v1505 = vadd.f32 %v1104, %v1504
  %1506 = vmatmul.f32.gmra.mxu0 %v275
  %v1507 = vpop.f32.mrf.mxu0
  %v1508 = vadd.f32 %v1107, %v1507
  %1509 = vmatmul.f32.gmra.mxu0 %v278
  %v1510 = vpop.f32.mrf.mxu0
  %v1511 = vadd.f32 %v1110, %v1510
  %1512 = vmatmul.f32.gmra.mxu0 %v281
  %v1513 = vpop.f32.mrf.mxu0
  %v1514 = vadd.f32 %v1113, %v1513
  %1515 = vmatmul.f32.gmra.mxu0 %v284
  %v1516 = vpop.f32.mrf.mxu0
  %v1517 = vadd.f32 %v1116, %v1516
  %1518 = vmatmul.f32.gmra.mxu0 %v287
  %v1519 = vpop.f32.mrf.mxu0
  %v1520 = vadd.f32 %v1119, %v1519
  %1521 = vmatmul.f32.gmra.mxu0 %v290
  %v1522 = vpop.f32.mrf.mxu0
  %v1523 = vadd.f32 %v1122, %v1522
  %1524 = vmatmul.f32.gmra.mxu0 %v293
  %v1525 = vpop.f32.mrf.mxu0
  %v1526 = vadd.f32 %v1125, %v1525
  %1527 = vmatmul.f32.gmra.mxu0 %v296
  %v1528 = vpop.f32.mrf.mxu0
  %v1529 = vadd.f32 %v1128, %v1528
  %1530 = vmatmul.f32.gmra.mxu0 %v299
  %v1531 = vpop.f32.mrf.mxu0
  %v1532 = vadd.f32 %v1131, %v1531
  %1533 = vmatmul.f32.gmra.mxu0 %v302
  %v1534 = vpop.f32.mrf.mxu0
  %v1535 = vadd.f32 %v1134, %v1534
  %1536 = vmatmul.f32.gmra.mxu0 %v305
  %v1537 = vpop.f32.mrf.mxu0
  %v1538 = vadd.f32 %v1137, %v1537
  %1539 = vmatmul.f32.gmra.mxu0 %v308
  %v1540 = vpop.f32.mrf.mxu0
  %v1541 = vadd.f32 %v1140, %v1540
  %1542 = vmatmul.f32.gmra.mxu0 %v311
  %v1543 = vpop.f32.mrf.mxu0
  %v1544 = vadd.f32 %v1143, %v1543
  %1545 = vmatmul.f32.gmra.mxu0 %v314
  %v1546 = vpop.f32.mrf.mxu0
  %v1547 = vadd.f32 %v1146, %v1546
  %1548 = vmatmul.f32.gmra.mxu0 %v317
  %v1549 = vpop.f32.mrf.mxu0
  %v1550 = vadd.f32 %v1149, %v1549
  %1551 = vmatmul.f32.gmra.mxu0 %v320
  %v1552 = vpop.f32.mrf.mxu0
  %v1553 = vadd.f32 %v1152, %v1552
  %1554 = vmatmul.f32.gmra.mxu0 %v323
  %v1555 = vpop.f32.mrf.mxu0
  %v1556 = vadd.f32 %v1155, %v1555
  %1557 = vmatmul.f32.gmra.mxu0 %v326
  %v1558 = vpop.f32.mrf.mxu0
  %v1559 = vadd.f32 %v1158, %v1558
  %1560 = vmatmul.f32.gmra.mxu0 %v329
  %v1561 = vpop.f32.mrf.mxu0
  %v1562 = vadd.f32 %v1161, %v1561
  %1563 = vmatmul.f32.gmra.mxu0 %v332
  %v1564 = vpop.f32.mrf.mxu0
  %v1565 = vadd.f32 %v1164, %v1564
  %1566 = vmatmul.f32.gmra.mxu0 %v335
  %v1567 = vpop.f32.mrf.mxu0
  %v1568 = vadd.f32 %v1167, %v1567
  %1569 = vmatmul.f32.gmra.mxu0 %v338
  %v1570 = vpop.f32.mrf.mxu0
  %v1571 = vadd.f32 %v1170, %v1570
  %1572 = vmatmul.f32.gmra.mxu0 %v341
  %v1573 = vpop.f32.mrf.mxu0
  %v1574 = vadd.f32 %v1173, %v1573
  %1575 = vmatmul.f32.gmra.mxu0 %v344
  %v1576 = vpop.f32.mrf.mxu0
  %v1577 = vadd.f32 %v1176, %v1576
  %1578 = vmatmul.f32.gmra.mxu0 %v347
  %v1579 = vpop.f32.mrf.mxu0
  %v1580 = vadd.f32 %v1179, %v1579
  %1581 = vmatmul.f32.gmra.mxu0 %v350
  %v1582 = vpop.f32.mrf.mxu0
  %v1583 = vadd.f32 %v1182, %v1582
  %1584 = vmatmul.f32.gmra.mxu0 %v353
  %v1585 = vpop.f32.mrf.mxu0
  %v1586 = vadd.f32 %v1185, %v1585
  %1587 = vmatmul.f32.gmra.mxu0 %v356
  %v1588 = vpop.f32.mrf.mxu0
  %v1589 = vadd.f32 %v1188, %v1588
  %1590 = vmatmul.f32.gmra.mxu0 %v359
  %v1591 = vpop.f32.mrf.mxu0
  %v1592 = vadd.f32 %v1191, %v1591
  %1593 = vmatmul.f32.gmra.mxu0 %v362
  %v1594 = vpop.f32.mrf.mxu0
  %v1595 = vadd.f32 %v1194, %v1594
  %1596 = vmatmul.f32.gmra.mxu0 %v365
  %v1597 = vpop.f32.mrf.mxu0
  %v1598 = vadd.f32 %v1197, %v1597
  %1599 = vmatmul.f32.gmra.mxu0 %v368
  %v1600 = vpop.f32.mrf.mxu0
  %v1601 = vadd.f32 %v1200, %v1600
  %1602 = vmatmul.f32.gmra.mxu0 %v371
  %v1603 = vpop.f32.mrf.mxu0
  %v1604 = vadd.f32 %v1203, %v1603
  %1605 = vmatmul.f32.gmra.mxu0 %v374
  %v1606 = vpop.f32.mrf.mxu0
  %v1607 = vadd.f32 %v1206, %v1606
  %1608 = vmatmul.f32.gmra.mxu0 %v377
  %v1609 = vpop.f32.mrf.mxu0
  %v1610 = vadd.f32 %v1209, %v1609
  %1611 = vmatmul.f32.gmra.mxu0 %v380
  %v1612 = vpop.f32.mrf.mxu0
  %v1613 = vadd.f32 %v1212, %v1612
  %1614 = vmatmul.f32.gmra.mxu0 %v383
  %v1615 = vpop.f32.mrf.mxu0
  %v1616 = vadd.f32 %v1215, %v1615
  %1617 = vmatmul.f32.gmra.mxu0 %v386
  %v1618 = vpop.f32.mrf.mxu0
  %v1619 = vadd.f32 %v1218, %v1618
  %1620 = vmatmul.f32.gmra.mxu0 %v389
  %v1621 = vpop.f32.mrf.mxu0
  %v1622 = vadd.f32 %v1221, %v1621
  %1623 = vmatmul.f32.gmra.mxu0 %v392
  %v1624 = vpop.f32.mrf.mxu0
  %v1625 = vadd.f32 %v1224, %v1624
  %1626 = vmatmul.f32.gmra.mxu0 %v395
  %v1627 = vpop.f32.mrf.mxu0
  %v1628 = vadd.f32 %v1227, %v1627
  %1629 = vmatmul.f32.gmra.mxu0 %v398
  %v1630 = vpop.f32.mrf.mxu0
  %v1631 = vadd.f32 %v1230, %v1630
  %1632 = vmatmul.f32.gmra.mxu0 %v401
  %v1633 = vpop.f32.mrf.mxu0
  %v1634 = vadd.f32 %v1233, %v1633
  %1635 = vmatmul.f32.gmra.mxu0 %v404
  %v1636 = vpop.f32.mrf.mxu0
  %v1637 = vadd.f32 %v1236, %v1636
  %1638 = vmatmul.f32.gmra.mxu0 %v407
  %v1639 = vpop.f32.mrf.mxu0
  %v1640 = vadd.f32 %v1239, %v1639
  %1641 = vmatmul.f32.gmra.mxu0 %v410
  %v1642 = vpop.f32.mrf.mxu0
  %v1643 = vadd.f32 %v1242, %v1642
  %1644 = vmatmul.f32.gmra.mxu0 %v413
  %v1645 = vpop.f32.mrf.mxu0
  %v1646 = vadd.f32 %v1245, %v1645
  %1647 = vmatmul.f32.gmra.mxu0 %v416
  %v1648 = vpop.f32.mrf.mxu0
  %v1649 = vadd.f32 %v1248, %v1648
  %1650 = vmatmul.f32.gmra.mxu0 %v419
  %v1651 = vpop.f32.mrf.mxu0
  %v1652 = vadd.f32 %v1251, %v1651
  %1653 = vmatmul.f32.gmra.mxu0 %v422
  %v1654 = vpop.f32.mrf.mxu0
  %v1655 = vadd.f32 %v1254, %v1654
  %1656 = vmatmul.f32.gmra.mxu0 %v425
  %v1657 = vpop.f32.mrf.mxu0
  %v1658 = vadd.f32 %v1257, %v1657
  %1659 = vmatmul.f32.gmra.mxu0 %v428
  %v1660 = vpop.f32.mrf.mxu0
  %v1661 = vadd.f32 %v1260, %v1660
  %1662 = vdwg.mxu0
  %1663 = vmatpush.msra.mxu0 0.0
  %1664 = vmatpush.msra.mxu0 0.0
  %1665 = vmatpush.msra.mxu0 0.0
  %1666 = vmatpush.msra.mxu0 0.0
  %1667 = vmatpush.msra.mxu0 0.0
  %1668 = vmatpush.msra.mxu0 0.0
  %1669 = vmatpush.msra.mxu0 0.0
  %1670 = vmatpush.msra.mxu0 0.0
  %1671 = vmatpush.msra.mxu0 0.0
  %1672 = vmatpush.msra.mxu0 0.0
  %1673 = vmatpush.msra.mxu0 %v859
  %1674 = vmatpush.msra.mxu0 %v466
  %1675 = vmatpush.msra.mxu0 %v465
  %1676 = vmatpush.msra.mxu0 %v464
  %1677 = vmatpush.msra.mxu0 %v463
  %1678 = vmatpush.msra.mxu0 %v462
  %1679 = vmatmul.f32.gmra.mxu0 %v474
  %v1680 = vpop.f32.mrf.mxu0
  %v1681 = vadd.f32 %v1280, %v1680
  %1682 = vmatmul.f32.gmra.mxu0 %v477
  %v1683 = vpop.f32.mrf.mxu0
  %v1684 = vadd.f32 %v1283, %v1683
  %1685 = vmatmul.f32.gmra.mxu0 %v480
  %v1686 = vpop.f32.mrf.mxu0
  %v1687 = vadd.f32 %v1286, %v1686
  %1688 = vmatmul.f32.gmra.mxu0 %v483
  %v1689 = vpop.f32.mrf.mxu0
  %v1690 = vadd.f32 %v1289, %v1689
  %1691 = vmatmul.f32.gmra.mxu0 %v486
  %v1692 = vpop.f32.mrf.mxu0
  %v1693 = vadd.f32 %v1292, %v1692
  %1694 = vmatmul.f32.gmra.mxu0 %v489
  %v1695 = vpop.f32.mrf.mxu0
  %v1696 = vadd.f32 %v1295, %v1695
  %1697 = vmatmul.f32.gmra.mxu0 %v492
  %v1698 = vpop.f32.mrf.mxu0
  %v1699 = vadd.f32 %v1298, %v1698
  %1700 = vmatmul.f32.gmra.mxu0 %v495
  %v1701 = vpop.f32.mrf.mxu0
  %v1702 = vadd.f32 %v1301, %v1701
  %1703 = vmatmul.f32.gmra.mxu0 %v498
  %v1704 = vpop.f32.mrf.mxu0
  %v1705 = vadd.f32 %v1304, %v1704
  %1706 = vmatmul.f32.gmra.mxu0 %v501
  %v1707 = vpop.f32.mrf.mxu0
  %v1708 = vadd.f32 %v1307, %v1707
  %1709 = vmatmul.f32.gmra.mxu0 %v504
  %v1710 = vpop.f32.mrf.mxu0
  %v1711 = vadd.f32 %v1310, %v1710
  %1712 = vmatmul.f32.gmra.mxu0 %v507
  %v1713 = vpop.f32.mrf.mxu0
  %v1714 = vadd.f32 %v1313, %v1713
  %1715 = vmatmul.f32.gmra.mxu0 %v510
  %v1716 = vpop.f32.mrf.mxu0
  %v1717 = vadd.f32 %v1316, %v1716
  %1718 = vmatmul.f32.gmra.mxu0 %v513
  %v1719 = vpop.f32.mrf.mxu0
  %v1720 = vadd.f32 %v1319, %v1719
  %1721 = vmatmul.f32.gmra.mxu0 %v516
  %v1722 = vpop.f32.mrf.mxu0
  %v1723 = vadd.f32 %v1322, %v1722
  %1724 = vmatmul.f32.gmra.mxu0 %v519
  %v1725 = vpop.f32.mrf.mxu0
  %v1726 = vadd.f32 %v1325, %v1725
  %1727 = vmatmul.f32.gmra.mxu0 %v522
  %v1728 = vpop.f32.mrf.mxu0
  %v1729 = vadd.f32 %v1328, %v1728
  %1730 = vmatmul.f32.gmra.mxu0 %v525
  %v1731 = vpop.f32.mrf.mxu0
  %v1732 = vadd.f32 %v1331, %v1731
  %1733 = vmatmul.f32.gmra.mxu0 %v528
  %v1734 = vpop.f32.mrf.mxu0
  %v1735 = vadd.f32 %v1334, %v1734
  %1736 = vmatmul.f32.gmra.mxu0 %v531
  %v1737 = vpop.f32.mrf.mxu0
  %v1738 = vadd.f32 %v1337, %v1737
  %1739 = vmatmul.f32.gmra.mxu0 %v534
  %v1740 = vpop.f32.mrf.mxu0
  %v1741 = vadd.f32 %v1340, %v1740
  %1742 = vmatmul.f32.gmra.mxu0 %v537
  %v1743 = vpop.f32.mrf.mxu0
  %v1744 = vadd.f32 %v1343, %v1743
  %1745 = vmatmul.f32.gmra.mxu0 %v540
  %v1746 = vpop.f32.mrf.mxu0
  %v1747 = vadd.f32 %v1346, %v1746
  %1748 = vmatmul.f32.gmra.mxu0 %v543
  %v1749 = vpop.f32.mrf.mxu0
  %v1750 = vadd.f32 %v1349, %v1749
  %1751 = vmatmul.f32.gmra.mxu0 %v546
  %v1752 = vpop.f32.mrf.mxu0
  %v1753 = vadd.f32 %v1352, %v1752
  %1754 = vmatmul.f32.gmra.mxu0 %v549
  %v1755 = vpop.f32.mrf.mxu0
  %v1756 = vadd.f32 %v1355, %v1755
  %1757 = vmatmul.f32.gmra.mxu0 %v552
  %v1758 = vpop.f32.mrf.mxu0
  %v1759 = vadd.f32 %v1358, %v1758
  %1760 = vmatmul.f32.gmra.mxu0 %v555
  %v1761 = vpop.f32.mrf.mxu0
  %v1762 = vadd.f32 %v1361, %v1761
  %1763 = vmatmul.f32.gmra.mxu0 %v558
  %v1764 = vpop.f32.mrf.mxu0
  %v1765 = vadd.f32 %v1364, %v1764
  %1766 = vmatmul.f32.gmra.mxu0 %v561
  %v1767 = vpop.f32.mrf.mxu0
  %v1768 = vadd.f32 %v1367, %v1767
  %1769 = vmatmul.f32.gmra.mxu0 %v564
  %v1770 = vpop.f32.mrf.mxu0
  %v1771 = vadd.f32 %v1370, %v1770
  %1772 = vmatmul.f32.gmra.mxu0 %v567
  %v1773 = vpop.f32.mrf.mxu0
  %v1774 = vadd.f32 %v1373, %v1773
  %1775 = vmatmul.f32.gmra.mxu0 %v570
  %v1776 = vpop.f32.mrf.mxu0
  %v1777 = vadd.f32 %v1376, %v1776
  %1778 = vmatmul.f32.gmra.mxu0 %v573
  %v1779 = vpop.f32.mrf.mxu0
  %v1780 = vadd.f32 %v1379, %v1779
  %1781 = vmatmul.f32.gmra.mxu0 %v576
  %v1782 = vpop.f32.mrf.mxu0
  %v1783 = vadd.f32 %v1382, %v1782
  %1784 = vmatmul.f32.gmra.mxu0 %v579
  %v1785 = vpop.f32.mrf.mxu0
  %v1786 = vadd.f32 %v1385, %v1785
  %1787 = vmatmul.f32.gmra.mxu0 %v582
  %v1788 = vpop.f32.mrf.mxu0
  %v1789 = vadd.f32 %v1388, %v1788
  %1790 = vmatmul.f32.gmra.mxu0 %v585
  %v1791 = vpop.f32.mrf.mxu0
  %v1792 = vadd.f32 %v1391, %v1791
  %1793 = vmatmul.f32.gmra.mxu0 %v588
  %v1794 = vpop.f32.mrf.mxu0
  %v1795 = vadd.f32 %v1394, %v1794
  %1796 = vmatmul.f32.gmra.mxu0 %v591
  %v1797 = vpop.f32.mrf.mxu0
  %v1798 = vadd.f32 %v1397, %v1797
  %1799 = vmatmul.f32.gmra.mxu0 %v594
  %v1800 = vpop.f32.mrf.mxu0
  %v1801 = vadd.f32 %v1400, %v1800
  %1802 = vmatmul.f32.gmra.mxu0 %v597
  %v1803 = vpop.f32.mrf.mxu0
  %v1804 = vadd.f32 %v1403, %v1803
  %1805 = vmatmul.f32.gmra.mxu0 %v600
  %v1806 = vpop.f32.mrf.mxu0
  %v1807 = vadd.f32 %v1406, %v1806
  %1808 = vmatmul.f32.gmra.mxu0 %v603
  %v1809 = vpop.f32.mrf.mxu0
  %v1810 = vadd.f32 %v1409, %v1809
  %1811 = vmatmul.f32.gmra.mxu0 %v606
  %v1812 = vpop.f32.mrf.mxu0
  %v1813 = vadd.f32 %v1412, %v1812
  %1814 = vmatmul.f32.gmra.mxu0 %v609
  %v1815 = vpop.f32.mrf.mxu0
  %v1816 = vadd.f32 %v1415, %v1815
  %1817 = vmatmul.f32.gmra.mxu0 %v612
  %v1818 = vpop.f32.mrf.mxu0
  %v1819 = vadd.f32 %v1418, %v1818
  %1820 = vmatmul.f32.gmra.mxu0 %v615
  %v1821 = vpop.f32.mrf.mxu0
  %v1822 = vadd.f32 %v1421, %v1821
  %1823 = vmatmul.f32.gmra.mxu0 %v618
  %v1824 = vpop.f32.mrf.mxu0
  %v1825 = vadd.f32 %v1424, %v1824
  %1826 = vmatmul.f32.gmra.mxu0 %v621
  %v1827 = vpop.f32.mrf.mxu0
  %v1828 = vadd.f32 %v1427, %v1827
  %1829 = vmatmul.f32.gmra.mxu0 %v624
  %v1830 = vpop.f32.mrf.mxu0
  %v1831 = vadd.f32 %v1430, %v1830
  %1832 = vmatmul.f32.gmra.mxu0 %v627
  %v1833 = vpop.f32.mrf.mxu0
  %v1834 = vadd.f32 %v1433, %v1833
  %1835 = vmatmul.f32.gmra.mxu0 %v630
  %v1836 = vpop.f32.mrf.mxu0
  %v1837 = vadd.f32 %v1436, %v1836
  %1838 = vmatmul.f32.gmra.mxu0 %v633
  %v1839 = vpop.f32.mrf.mxu0
  %v1840 = vadd.f32 %v1439, %v1839
  %1841 = vmatmul.f32.gmra.mxu0 %v636
  %v1842 = vpop.f32.mrf.mxu0
  %v1843 = vadd.f32 %v1442, %v1842
  %1844 = vmatmul.f32.gmra.mxu0 %v639
  %v1845 = vpop.f32.mrf.mxu0
  %v1846 = vadd.f32 %v1445, %v1845
  %1847 = vmatmul.f32.gmra.mxu0 %v642
  %v1848 = vpop.f32.mrf.mxu0
  %v1849 = vadd.f32 %v1448, %v1848
  %1850 = vmatmul.f32.gmra.mxu0 %v645
  %v1851 = vpop.f32.mrf.mxu0
  %v1852 = vadd.f32 %v1451, %v1851
  %1853 = vmatmul.f32.gmra.mxu0 %v648
  %v1854 = vpop.f32.mrf.mxu0
  %v1855 = vadd.f32 %v1454, %v1854
  %1856 = vmatmul.f32.gmra.mxu0 %v651
  %v1857 = vpop.f32.mrf.mxu0
  %v1858 = vadd.f32 %v1457, %v1857
  %1859 = vmatmul.f32.gmra.mxu0 %v654
  %v1860 = vpop.f32.mrf.mxu0
  %v1861 = vadd.f32 %v1460, %v1860
  %1862 = vmatmul.f32.gmra.mxu0 %v657
  %v1863 = vpop.f32.mrf.mxu0
  %v1864 = vadd.f32 %v1463, %v1863
  %1865 = vmatmul.f32.gmra.mxu0 %v660
  %v1866 = vpop.f32.mrf.mxu0
  %v1867 = vadd.f32 %v1466, %v1866
  %1868 = vmatmul.f32.gmra.mxu0 %v663
  %v1869 = vpop.f32.mrf.mxu0
  %v1870 = vadd.f32 %v1469, %v1869
  %1871 = vmatmul.f32.gmra.mxu0 %v666
  %v1872 = vpop.f32.mrf.mxu0
  %v1873 = vadd.f32 %v1472, %v1872
  %1874 = vmatmul.f32.gmra.mxu0 %v669
  %v1875 = vpop.f32.mrf.mxu0
  %v1876 = vadd.f32 %v1475, %v1875
  %1877 = vmatmul.f32.gmra.mxu0 %v672
  %v1878 = vpop.f32.mrf.mxu0
  %v1879 = vadd.f32 %v1478, %v1878
  %1880 = vmatmul.f32.gmra.mxu0 %v675
  %v1881 = vpop.f32.mrf.mxu0
  %v1882 = vadd.f32 %v1481, %v1881
  %1883 = vmatmul.f32.gmra.mxu0 %v678
  %v1884 = vpop.f32.mrf.mxu0
  %v1885 = vadd.f32 %v1484, %v1884
  %1886 = vmatmul.f32.gmra.mxu0 %v681
  %v1887 = vpop.f32.mrf.mxu0
  %v1888 = vadd.f32 %v1487, %v1887
  %1889 = vmatmul.f32.gmra.mxu0 %v684
  %v1890 = vpop.f32.mrf.mxu0
  %v1891 = vadd.f32 %v1490, %v1890
  %1892 = vmatmul.f32.gmra.mxu0 %v687
  %v1893 = vpop.f32.mrf.mxu0
  %v1894 = vadd.f32 %v1493, %v1893
  %1895 = vmatmul.f32.gmra.mxu0 %v690
  %v1896 = vpop.f32.mrf.mxu0
  %v1897 = vadd.f32 %v1496, %v1896
  %1898 = vmatmul.f32.gmra.mxu0 %v693
  %v1899 = vpop.f32.mrf.mxu0
  %v1900 = vadd.f32 %v1499, %v1899
  %1901 = vmatmul.f32.gmra.mxu0 %v696
  %v1902 = vpop.f32.mrf.mxu0
  %v1903 = vadd.f32 %v1502, %v1902
  %1904 = vmatmul.f32.gmra.mxu0 %v699
  %v1905 = vpop.f32.mrf.mxu0
  %v1906 = vadd.f32 %v1505, %v1905
  %1907 = vmatmul.f32.gmra.mxu0 %v702
  %v1908 = vpop.f32.mrf.mxu0
  %v1909 = vadd.f32 %v1508, %v1908
  %1910 = vmatmul.f32.gmra.mxu0 %v705
  %v1911 = vpop.f32.mrf.mxu0
  %v1912 = vadd.f32 %v1511, %v1911
  %1913 = vmatmul.f32.gmra.mxu0 %v708
  %v1914 = vpop.f32.mrf.mxu0
  %v1915 = vadd.f32 %v1514, %v1914
  %1916 = vmatmul.f32.gmra.mxu0 %v711
  %v1917 = vpop.f32.mrf.mxu0
  %v1918 = vadd.f32 %v1517, %v1917
  %1919 = vmatmul.f32.gmra.mxu0 %v714
  %v1920 = vpop.f32.mrf.mxu0
  %v1921 = vadd.f32 %v1520, %v1920
  %1922 = vmatmul.f32.gmra.mxu0 %v717
  %v1923 = vpop.f32.mrf.mxu0
  %v1924 = vadd.f32 %v1523, %v1923
  %1925 = vmatmul.f32.gmra.mxu0 %v720
  %v1926 = vpop.f32.mrf.mxu0
  %v1927 = vadd.f32 %v1526, %v1926
  %1928 = vmatmul.f32.gmra.mxu0 %v723
  %v1929 = vpop.f32.mrf.mxu0
  %v1930 = vadd.f32 %v1529, %v1929
  %1931 = vmatmul.f32.gmra.mxu0 %v726
  %v1932 = vpop.f32.mrf.mxu0
  %v1933 = vadd.f32 %v1532, %v1932
  %1934 = vmatmul.f32.gmra.mxu0 %v729
  %v1935 = vpop.f32.mrf.mxu0
  %v1936 = vadd.f32 %v1535, %v1935
  %1937 = vmatmul.f32.gmra.mxu0 %v732
  %v1938 = vpop.f32.mrf.mxu0
  %v1939 = vadd.f32 %v1538, %v1938
  %1940 = vmatmul.f32.gmra.mxu0 %v735
  %v1941 = vpop.f32.mrf.mxu0
  %v1942 = vadd.f32 %v1541, %v1941
  %1943 = vmatmul.f32.gmra.mxu0 %v738
  %v1944 = vpop.f32.mrf.mxu0
  %v1945 = vadd.f32 %v1544, %v1944
  %1946 = vmatmul.f32.gmra.mxu0 %v741
  %v1947 = vpop.f32.mrf.mxu0
  %v1948 = vadd.f32 %v1547, %v1947
  %1949 = vmatmul.f32.gmra.mxu0 %v744
  %v1950 = vpop.f32.mrf.mxu0
  %v1951 = vadd.f32 %v1550, %v1950
  %1952 = vmatmul.f32.gmra.mxu0 %v747
  %v1953 = vpop.f32.mrf.mxu0
  %v1954 = vadd.f32 %v1553, %v1953
  %1955 = vmatmul.f32.gmra.mxu0 %v750
  %v1956 = vpop.f32.mrf.mxu0
  %v1957 = vadd.f32 %v1556, %v1956
  %1958 = vmatmul.f32.gmra.mxu0 %v753
  %v1959 = vpop.f32.mrf.mxu0
  %v1960 = vadd.f32 %v1559, %v1959
  %1961 = vmatmul.f32.gmra.mxu0 %v756
  %v1962 = vpop.f32.mrf.mxu0
  %v1963 = vadd.f32 %v1562, %v1962
  %1964 = vmatmul.f32.gmra.mxu0 %v759
  %v1965 = vpop.f32.mrf.mxu0
  %v1966 = vadd.f32 %v1565, %v1965
  %1967 = vmatmul.f32.gmra.mxu0 %v762
  %v1968 = vpop.f32.mrf.mxu0
  %v1969 = vadd.f32 %v1568, %v1968
  %1970 = vmatmul.f32.gmra.mxu0 %v765
  %v1971 = vpop.f32.mrf.mxu0
  %v1972 = vadd.f32 %v1571, %v1971
  %1973 = vmatmul.f32.gmra.mxu0 %v768
  %v1974 = vpop.f32.mrf.mxu0
  %v1975 = vadd.f32 %v1574, %v1974
  %1976 = vmatmul.f32.gmra.mxu0 %v771
  %v1977 = vpop.f32.mrf.mxu0
  %v1978 = vadd.f32 %v1577, %v1977
  %1979 = vmatmul.f32.gmra.mxu0 %v774
  %v1980 = vpop.f32.mrf.mxu0
  %v1981 = vadd.f32 %v1580, %v1980
  %1982 = vmatmul.f32.gmra.mxu0 %v777
  %v1983 = vpop.f32.mrf.mxu0
  %v1984 = vadd.f32 %v1583, %v1983
  %1985 = vmatmul.f32.gmra.mxu0 %v780
  %v1986 = vpop.f32.mrf.mxu0
  %v1987 = vadd.f32 %v1586, %v1986
  %1988 = vmatmul.f32.gmra.mxu0 %v783
  %v1989 = vpop.f32.mrf.mxu0
  %v1990 = vadd.f32 %v1589, %v1989
  %1991 = vmatmul.f32.gmra.mxu0 %v786
  %v1992 = vpop.f32.mrf.mxu0
  %v1993 = vadd.f32 %v1592, %v1992
  %1994 = vmatmul.f32.gmra.mxu0 %v789
  %v1995 = vpop.f32.mrf.mxu0
  %v1996 = vadd.f32 %v1595, %v1995
  %1997 = vmatmul.f32.gmra.mxu0 %v792
  %v1998 = vpop.f32.mrf.mxu0
  %v1999 = vadd.f32 %v1598, %v1998
  %2000 = vmatmul.f32.gmra.mxu0 %v795
  %v2001 = vpop.f32.mrf.mxu0
  %v2002 = vadd.f32 %v1601, %v2001
  %2003 = vmatmul.f32.gmra.mxu0 %v798
  %v2004 = vpop.f32.mrf.mxu0
  %v2005 = vadd.f32 %v1604, %v2004
  %2006 = vmatmul.f32.gmra.mxu0 %v801
  %v2007 = vpop.f32.mrf.mxu0
  %v2008 = vadd.f32 %v1607, %v2007
  %2009 = vmatmul.f32.gmra.mxu0 %v804
  %v2010 = vpop.f32.mrf.mxu0
  %v2011 = vadd.f32 %v1610, %v2010
  %2012 = vmatmul.f32.gmra.mxu0 %v807
  %v2013 = vpop.f32.mrf.mxu0
  %v2014 = vadd.f32 %v1613, %v2013
  %2015 = vmatmul.f32.gmra.mxu0 %v810
  %v2016 = vpop.f32.mrf.mxu0
  %v2017 = vadd.f32 %v1616, %v2016
  %2018 = vmatmul.f32.gmra.mxu0 %v813
  %v2019 = vpop.f32.mrf.mxu0
  %v2020 = vadd.f32 %v1619, %v2019
  %2021 = vmatmul.f32.gmra.mxu0 %v816
  %v2022 = vpop.f32.mrf.mxu0
  %v2023 = vadd.f32 %v1622, %v2022
  %2024 = vmatmul.f32.gmra.mxu0 %v819
  %v2025 = vpop.f32.mrf.mxu0
  %v2026 = vadd.f32 %v1625, %v2025
  %2027 = vmatmul.f32.gmra.mxu0 %v822
  %v2028 = vpop.f32.mrf.mxu0
  %v2029 = vadd.f32 %v1628, %v2028
  %2030 = vmatmul.f32.gmra.mxu0 %v825
  %v2031 = vpop.f32.mrf.mxu0
  %v2032 = vadd.f32 %v1631, %v2031
  %2033 = vmatmul.f32.gmra.mxu0 %v828
  %v2034 = vpop.f32.mrf.mxu0
  %v2035 = vadd.f32 %v1634, %v2034
  %2036 = vmatmul.f32.gmra.mxu0 %v831
  %v2037 = vpop.f32.mrf.mxu0
  %v2038 = vadd.f32 %v1637, %v2037
  %2039 = vmatmul.f32.gmra.mxu0 %v834
  %v2040 = vpop.f32.mrf.mxu0
  %v2041 = vadd.f32 %v1640, %v2040
  %2042 = vmatmul.f32.gmra.mxu0 %v837
  %v2043 = vpop.f32.mrf.mxu0
  %v2044 = vadd.f32 %v1643, %v2043
  %2045 = vmatmul.f32.gmra.mxu0 %v840
  %v2046 = vpop.f32.mrf.mxu0
  %v2047 = vadd.f32 %v1646, %v2046
  %2048 = vmatmul.f32.gmra.mxu0 %v843
  %v2049 = vpop.f32.mrf.mxu0
  %v2050 = vadd.f32 %v1649, %v2049
  %2051 = vmatmul.f32.gmra.mxu0 %v846
  %v2052 = vpop.f32.mrf.mxu0
  %v2053 = vadd.f32 %v1652, %v2052
  %2054 = vmatmul.f32.gmra.mxu0 %v849
  %v2055 = vpop.f32.mrf.mxu0
  %v2056 = vadd.f32 %v1655, %v2055
  %2057 = vmatmul.f32.gmra.mxu0 %v852
  %v2058 = vpop.f32.mrf.mxu0
  %v2059 = vadd.f32 %v1658, %v2058
  %2060 = vmatmul.f32.gmra.mxu0 %v855
  %v2061 = vpop.f32.mrf.mxu0
  %v2062 = vadd.f32 %v1661, %v2061
  %2063 = vdwg.mxu0
  %v2064 = vmax.f32 %v1681, 0.0
  %v2065 = vmax.f32 %v1684, 0.0
  %v2066 = vmax.f32 %v1687, 0.0
  %v2067 = vmax.f32 %v1690, 0.0
  %v2068 = vmax.f32 %v1693, 0.0
  %v2069 = vmax.f32 %v1696, 0.0
  %v2070 = vmax.f32 %v1699, 0.0
  %v2071 = vmax.f32 %v1702, 0.0
  %v2072 = vmax.f32 %v1705, 0.0
  %v2073 = vmax.f32 %v1708, 0.0
  %v2074 = vmax.f32 %v1711, 0.0
  %v2075 = vmax.f32 %v1714, 0.0
  %v2076 = vmax.f32 %v1717, 0.0
  %v2077 = vmax.f32 %v1720, 0.0
  %v2078 = vmax.f32 %v1723, 0.0
  %v2079 = vmax.f32 %v1726, 0.0
  %v2080 = vmax.f32 %v1729, 0.0
  %v2081 = vmax.f32 %v1732, 0.0
  %v2082 = vmax.f32 %v1735, 0.0
  %v2083 = vmax.f32 %v1738, 0.0
  %v2084 = vmax.f32 %v1741, 0.0
  %v2085 = vmax.f32 %v1744, 0.0
  %v2086 = vmax.f32 %v1747, 0.0
  %v2087 = vmax.f32 %v1750, 0.0
  %v2088 = vmax.f32 %v1753, 0.0
  %v2089 = vmax.f32 %v1756, 0.0
  %v2090 = vmax.f32 %v1759, 0.0
  %v2091 = vmax.f32 %v1762, 0.0
  %v2092 = vmax.f32 %v1765, 0.0
  %v2093 = vmax.f32 %v1768, 0.0
  %v2094 = vmax.f32 %v1771, 0.0
  %v2095 = vmax.f32 %v1774, 0.0
  %v2096 = vmax.f32 %v1777, 0.0
  %v2097 = vmax.f32 %v1780, 0.0
  %v2098 = vmax.f32 %v1783, 0.0
  %v2099 = vmax.f32 %v1786, 0.0
  %v2100 = vmax.f32 %v1789, 0.0
  %v2101 = vmax.f32 %v1792, 0.0
  %v2102 = vmax.f32 %v1795, 0.0
  %v2103 = vmax.f32 %v1798, 0.0
  %v2104 = vmax.f32 %v1801, 0.0
  %v2105 = vmax.f32 %v1804, 0.0
  %v2106 = vmax.f32 %v1807, 0.0
  %v2107 = vmax.f32 %v1810, 0.0
  %v2108 = vmax.f32 %v1813, 0.0
  %v2109 = vmax.f32 %v1816, 0.0
  %v2110 = vmax.f32 %v1819, 0.0
  %v2111 = vmax.f32 %v1822, 0.0
  %v2112 = vmax.f32 %v1825, 0.0
  %v2113 = vmax.f32 %v1828, 0.0
  %v2114 = vmax.f32 %v1831, 0.0
  %v2115 = vmax.f32 %v1834, 0.0
  %v2116 = vmax.f32 %v1837, 0.0
  %v2117 = vmax.f32 %v1840, 0.0
  %v2118 = vmax.f32 %v1843, 0.0
  %v2119 = vmax.f32 %v1846, 0.0
  %v2120 = vmax.f32 %v1849, 0.0
  %v2121 = vmax.f32 %v1852, 0.0
  %v2122 = vmax.f32 %v1855, 0.0
  %v2123 = vmax.f32 %v1858, 0.0
  %v2124 = vmax.f32 %v1861, 0.0
  %v2125 = vmax.f32 %v1864, 0.0
  %v2126 = vmax.f32 %v1867, 0.0
  %v2127 = vmax.f32 %v1870, 0.0
  %v2128 = vmax.f32 %v1873, 0.0
  %v2129 = vmax.f32 %v1876, 0.0
  %v2130 = vmax.f32 %v1879, 0.0
  %v2131 = vmax.f32 %v1882, 0.0
  %v2132 = vmax.f32 %v1885, 0.0
  %v2133 = vmax.f32 %v1888, 0.0
  %v2134 = vmax.f32 %v1891, 0.0
  %v2135 = vmax.f32 %v1894, 0.0
  %v2136 = vmax.f32 %v1897, 0.0
  %v2137 = vmax.f32 %v1900, 0.0
  %v2138 = vmax.f32 %v1903, 0.0
  %v2139 = vmax.f32 %v1906, 0.0
  %v2140 = vmax.f32 %v1909, 0.0
  %v2141 = vmax.f32 %v1912, 0.0
  %v2142 = vmax.f32 %v1915, 0.0
  %v2143 = vmax.f32 %v1918, 0.0
  %v2144 = vmax.f32 %v1921, 0.0
  %v2145 = vmax.f32 %v1924, 0.0
  %v2146 = vmax.f32 %v1927, 0.0
  %v2147 = vmax.f32 %v1930, 0.0
  %v2148 = vmax.f32 %v1933, 0.0
  %v2149 = vmax.f32 %v1936, 0.0
  %v2150 = vmax.f32 %v1939, 0.0
  %v2151 = vmax.f32 %v1942, 0.0
  %v2152 = vmax.f32 %v1945, 0.0
  %v2153 = vmax.f32 %v1948, 0.0
  %v2154 = vmax.f32 %v1951, 0.0
  %v2155 = vmax.f32 %v1954, 0.0
  %v2156 = vmax.f32 %v1957, 0.0
  %v2157 = vmax.f32 %v1960, 0.0
  %v2158 = vmax.f32 %v1963, 0.0
  %v2159 = vmax.f32 %v1966, 0.0
  %v2160 = vmax.f32 %v1969, 0.0
  %v2161 = vmax.f32 %v1972, 0.0
  %v2162 = vmax.f32 %v1975, 0.0
  %v2163 = vmax.f32 %v1978, 0.0
  %v2164 = vmax.f32 %v1981, 0.0
  %v2165 = vmax.f32 %v1984, 0.0
  %v2166 = vmax.f32 %v1987, 0.0
  %v2167 = vmax.f32 %v1990, 0.0
  %v2168 = vmax.f32 %v1993, 0.0
  %v2169 = vmax.f32 %v1996, 0.0
  %v2170 = vmax.f32 %v1999, 0.0
  %v2171 = vmax.f32 %v2002, 0.0
  %v2172 = vmax.f32 %v2005, 0.0
  %v2173 = vmax.f32 %v2008, 0.0
  %v2174 = vmax.f32 %v2011, 0.0
  %v2175 = vmax.f32 %v2014, 0.0
  %v2176 = vmax.f32 %v2017, 0.0
  %v2177 = vmax.f32 %v2020, 0.0
  %v2178 = vmax.f32 %v2023, 0.0
  %v2179 = vmax.f32 %v2026, 0.0
  %v2180 = vmax.f32 %v2029, 0.0
  %v2181 = vmax.f32 %v2032, 0.0
  %v2182 = vmax.f32 %v2035, 0.0
  %v2183 = vmax.f32 %v2038, 0.0
  %v2184 = vmax.f32 %v2041, 0.0
  %v2185 = vmax.f32 %v2044, 0.0
  %v2186 = vmax.f32 %v2047, 0.0
  %v2187 = vmax.f32 %v2050, 0.0
  %v2188 = vmax.f32 %v2053, 0.0
  %v2189 = vmax.f32 %v2056, 0.0
  %v2190 = vmax.f32 %v2059, 0.0
  %v2191 = vmax.f32 %v2062, 0.0
  %v2192 = vld [vmem:[%s2] sm:$0xff]
  %v2193 = vld [vmem:[%s2 + $0x8] sm:$0xff]
  %v2194 = vld [vmem:[%s2 + $0x10] sm:$0xff]
  %v2195 = vld [vmem:[%s2 + $0x18] sm:$0xff]
  %v2196 = vld [vmem:[%s2 + $0x20] sm:$0xff]
  %v2197 = vld [vmem:[%s2 + $0x28] sm:$0xff]
  %v2198 = vld [vmem:[%s2 + $0x30] sm:$0xff]
  %v2199 = vld [vmem:[%s2 + $0x38] sm:$0xff]
  %v2200 = vld [vmem:[%s2 + $0x40] sm:$0xff]
  %v2201 = vld [vmem:[%s2 + $0x48] sm:$0xff]
  %v2202 = vld [vmem:[%s2 + $0x50] sm:$0xff]
  %v2203 = vld [vmem:[%s2 + $0x58] sm:$0xff]
  %v2204 = vld [vmem:[%s2 + $0x60] sm:$0xff]
  %v2205 = vld [vmem:[%s2 + $0x68] sm:$0xff]
  %v2206 = vld [vmem:[%s2 + $0x70] sm:$0xff]
  %v2207 = vld [vmem:[%s2 + $0x78] sm:$0xff]
  %v2208 = vld [vmem:[%s2 + $0x80] sm:$0xff]
  %v2209 = vld [vmem:[%s2 + $0x88] sm:$0xff]
  %v2210 = vld [vmem:[%s2 + $0x90] sm:$0xff]
  %v2211 = vld [vmem:[%s2 + $0x98] sm:$0xff]
  %v2212 = vld [vmem:[%s2 + $0xa0] sm:$0xff]
  %v2213 = vld [vmem:[%s2 + $0xa8] sm:$0xff]
  %v2214 = vld [vmem:[%s2 + $0xb0] sm:$0xff]
  %v2215 = vld [vmem:[%s2 + $0xb8] sm:$0xff]
  %v2216 = vld [vmem:[%s2 + $0xc0] sm:$0xff]
  %v2217 = vld [vmem:[%s2 + $0xc8] sm:$0xff]
  %v2218 = vld [vmem:[%s2 + $0xd0] sm:$0xff]
  %v2219 = vld [vmem:[%s2 + $0xd8] sm:$0xff]
  %v2220 = vld [vmem:[%s2 + $0xe0] sm:$0xff]
  %v2221 = vld [vmem:[%s2 + $0xe8] sm:$0xff]
  %v2222 = vld [vmem:[%s2 + $0xf0] sm:$0xff]
  %v2223 = vld [vmem:[%s2 + $0xf8] sm:$0xff]
  %v2224 = vld [vmem:[%s2 + $0x100] sm:$0xff]
  %v2225 = vld [vmem:[%s2 + $0x108] sm:$0xff]
  %v2226 = vld [vmem:[%s2 + $0x110] sm:$0xff]
  %v2227 = vld [vmem:[%s2 + $0x118] sm:$0xff]
  %v2228 = vld [vmem:[%s2 + $0x120] sm:$0xff]
  %v2229 = vld [vmem:[%s2 + $0x128] sm:$0x1]
  %v2231 = vsel %vm857, %v2229, 0
  %2233 = vmatpush.msra.mxu0 %v2207
  %2234 = vmatpush.msra.mxu0 %v2206
  %2235 = vmatpush.msra.mxu0 %v2205
  %2236 = vmatpush.msra.mxu0 %v2204
  %2237 = vmatpush.msra.mxu0 %v2203
  %2238 = vmatpush.msra.mxu0 %v2202
  %2239 = vmatpush.msra.mxu0 %v2201
  %2240 = vmatpush.msra.mxu0 %v2200
  %2241 = vmatpush.msra.mxu0 %v2199
  %2242 = vmatpush.msra.mxu0 %v2198
  %2243 = vmatpush.msra.mxu0 %v2197
  %2244 = vmatpush.msra.mxu0 %v2196
  %2245 = vmatpush.msra.mxu0 %v2195
  %2246 = vmatpush.msra.mxu0 %v2194
  %2247 = vmatpush.msra.mxu0 %v2193
  %2248 = vmatpush.msra.mxu0 %v2192
  %2249 = vmatmul.f32.gmra.mxu0 %v46
  %v2250 = vpop.f32.mrf.mxu0
  %v2251 = vadd.f32 %v470, %v2250
  %2252 = vmatmul.f32.gmra.mxu0 %v49
  %v2253 = vpop.f32.mrf.mxu0
  %v2254 = vadd.f32 %v470, %v2253
  %2255 = vmatmul.f32.gmra.mxu0 %v52
  %v2256 = vpop.f32.mrf.mxu0
  %v2257 = vadd.f32 %v470, %v2256
  %2258 = vmatmul.f32.gmra.mxu0 %v55
  %v2259 = vpop.f32.mrf.mxu0
  %v2260 = vadd.f32 %v470, %v2259
  %2261 = vmatmul.f32.gmra.mxu0 %v58
  %v2262 = vpop.f32.mrf.mxu0
  %v2263 = vadd.f32 %v470, %v2262
  %2264 = vmatmul.f32.gmra.mxu0 %v61
  %v2265 = vpop.f32.mrf.mxu0
  %v2266 = vadd.f32 %v470, %v2265
  %2267 = vmatmul.f32.gmra.mxu0 %v64
  %v2268 = vpop.f32.mrf.mxu0
  %v2269 = vadd.f32 %v470, %v2268
  %2270 = vmatmul.f32.gmra.mxu0 %v67
  %v2271 = vpop.f32.mrf.mxu0
  %v2272 = vadd.f32 %v470, %v2271
  %2273 = vmatmul.f32.gmra.mxu0 %v70
  %v2274 = vpop.f32.mrf.mxu0
  %v2275 = vadd.f32 %v470, %v2274
  %2276 = vmatmul.f32.gmra.mxu0 %v73
  %v2277 = vpop.f32.mrf.mxu0
  %v2278 = vadd.f32 %v470, %v2277
  %2279 = vmatmul.f32.gmra.mxu0 %v76
  %v2280 = vpop.f32.mrf.mxu0
  %v2281 = vadd.f32 %v470, %v2280
  %2282 = vmatmul.f32.gmra.mxu0 %v79
  %v2283 = vpop.f32.mrf.mxu0
  %v2284 = vadd.f32 %v470, %v2283
  %2285 = vmatmul.f32.gmra.mxu0 %v82
  %v2286 = vpop.f32.mrf.mxu0
  %v2287 = vadd.f32 %v470, %v2286
  %2288 = vmatmul.f32.gmra.mxu0 %v85
  %v2289 = vpop.f32.mrf.mxu0
  %v2290 = vadd.f32 %v470, %v2289
  %2291 = vmatmul.f32.gmra.mxu0 %v88
  %v2292 = vpop.f32.mrf.mxu0
  %v2293 = vadd.f32 %v470, %v2292
  %2294 = vmatmul.f32.gmra.mxu0 %v91
  %v2295 = vpop.f32.mrf.mxu0
  %v2296 = vadd.f32 %v470, %v2295
  %2297 = vmatmul.f32.gmra.mxu0 %v94
  %v2298 = vpop.f32.mrf.mxu0
  %v2299 = vadd.f32 %v470, %v2298
  %2300 = vmatmul.f32.gmra.mxu0 %v97
  %v2301 = vpop.f32.mrf.mxu0
  %v2302 = vadd.f32 %v470, %v2301
  %2303 = vmatmul.f32.gmra.mxu0 %v100
  %v2304 = vpop.f32.mrf.mxu0
  %v2305 = vadd.f32 %v470, %v2304
  %2306 = vmatmul.f32.gmra.mxu0 %v103
  %v2307 = vpop.f32.mrf.mxu0
  %v2308 = vadd.f32 %v470, %v2307
  %2309 = vmatmul.f32.gmra.mxu0 %v106
  %v2310 = vpop.f32.mrf.mxu0
  %v2311 = vadd.f32 %v470, %v2310
  %2312 = vmatmul.f32.gmra.mxu0 %v109
  %v2313 = vpop.f32.mrf.mxu0
  %v2314 = vadd.f32 %v470, %v2313
  %2315 = vmatmul.f32.gmra.mxu0 %v112
  %v2316 = vpop.f32.mrf.mxu0
  %v2317 = vadd.f32 %v470, %v2316
  %2318 = vmatmul.f32.gmra.mxu0 %v115
  %v2319 = vpop.f32.mrf.mxu0
  %v2320 = vadd.f32 %v470, %v2319
  %2321 = vmatmul.f32.gmra.mxu0 %v118
  %v2322 = vpop.f32.mrf.mxu0
  %v2323 = vadd.f32 %v470, %v2322
  %2324 = vmatmul.f32.gmra.mxu0 %v121
  %v2325 = vpop.f32.mrf.mxu0
  %v2326 = vadd.f32 %v470, %v2325
  %2327 = vmatmul.f32.gmra.mxu0 %v124
  %v2328 = vpop.f32.mrf.mxu0
  %v2329 = vadd.f32 %v470, %v2328
  %2330 = vmatmul.f32.gmra.mxu0 %v127
  %v2331 = vpop.f32.mrf.mxu0
  %v2332 = vadd.f32 %v470, %v2331
  %2333 = vmatmul.f32.gmra.mxu0 %v130
  %v2334 = vpop.f32.mrf.mxu0
  %v2335 = vadd.f32 %v470, %v2334
  %2336 = vmatmul.f32.gmra.mxu0 %v133
  %v2337 = vpop.f32.mrf.mxu0
  %v2338 = vadd.f32 %v470, %v2337
  %2339 = vmatmul.f32.gmra.mxu0 %v136
  %v2340 = vpop.f32.mrf.mxu0
  %v2341 = vadd.f32 %v470, %v2340
  %2342 = vmatmul.f32.gmra.mxu0 %v139
  %v2343 = vpop.f32.mrf.mxu0
  %v2344 = vadd.f32 %v470, %v2343
  %2345 = vmatmul.f32.gmra.mxu0 %v142
  %v2346 = vpop.f32.mrf.mxu0
  %v2347 = vadd.f32 %v470, %v2346
  %2348 = vmatmul.f32.gmra.mxu0 %v145
  %v2349 = vpop.f32.mrf.mxu0
  %v2350 = vadd.f32 %v470, %v2349
  %2351 = vmatmul.f32.gmra.mxu0 %v148
  %v2352 = vpop.f32.mrf.mxu0
  %v2353 = vadd.f32 %v470, %v2352
  %2354 = vmatmul.f32.gmra.mxu0 %v151
  %v2355 = vpop.f32.mrf.mxu0
  %v2356 = vadd.f32 %v470, %v2355
  %2357 = vmatmul.f32.gmra.mxu0 %v154
  %v2358 = vpop.f32.mrf.mxu0
  %v2359 = vadd.f32 %v470, %v2358
  %2360 = vmatmul.f32.gmra.mxu0 %v157
  %v2361 = vpop.f32.mrf.mxu0
  %v2362 = vadd.f32 %v470, %v2361
  %2363 = vmatmul.f32.gmra.mxu0 %v160
  %v2364 = vpop.f32.mrf.mxu0
  %v2365 = vadd.f32 %v470, %v2364
  %2366 = vmatmul.f32.gmra.mxu0 %v163
  %v2367 = vpop.f32.mrf.mxu0
  %v2368 = vadd.f32 %v470, %v2367
  %2369 = vmatmul.f32.gmra.mxu0 %v166
  %v2370 = vpop.f32.mrf.mxu0
  %v2371 = vadd.f32 %v470, %v2370
  %2372 = vmatmul.f32.gmra.mxu0 %v169
  %v2373 = vpop.f32.mrf.mxu0
  %v2374 = vadd.f32 %v470, %v2373
  %2375 = vmatmul.f32.gmra.mxu0 %v172
  %v2376 = vpop.f32.mrf.mxu0
  %v2377 = vadd.f32 %v470, %v2376
  %2378 = vmatmul.f32.gmra.mxu0 %v175
  %v2379 = vpop.f32.mrf.mxu0
  %v2380 = vadd.f32 %v470, %v2379
  %2381 = vmatmul.f32.gmra.mxu0 %v178
  %v2382 = vpop.f32.mrf.mxu0
  %v2383 = vadd.f32 %v470, %v2382
  %2384 = vmatmul.f32.gmra.mxu0 %v181
  %v2385 = vpop.f32.mrf.mxu0
  %v2386 = vadd.f32 %v470, %v2385
  %2387 = vmatmul.f32.gmra.mxu0 %v184
  %v2388 = vpop.f32.mrf.mxu0
  %v2389 = vadd.f32 %v470, %v2388
  %2390 = vmatmul.f32.gmra.mxu0 %v187
  %v2391 = vpop.f32.mrf.mxu0
  %v2392 = vadd.f32 %v470, %v2391
  %2393 = vmatmul.f32.gmra.mxu0 %v190
  %v2394 = vpop.f32.mrf.mxu0
  %v2395 = vadd.f32 %v470, %v2394
  %2396 = vmatmul.f32.gmra.mxu0 %v193
  %v2397 = vpop.f32.mrf.mxu0
  %v2398 = vadd.f32 %v470, %v2397
  %2399 = vmatmul.f32.gmra.mxu0 %v196
  %v2400 = vpop.f32.mrf.mxu0
  %v2401 = vadd.f32 %v470, %v2400
  %2402 = vmatmul.f32.gmra.mxu0 %v199
  %v2403 = vpop.f32.mrf.mxu0
  %v2404 = vadd.f32 %v470, %v2403
  %2405 = vmatmul.f32.gmra.mxu0 %v202
  %v2406 = vpop.f32.mrf.mxu0
  %v2407 = vadd.f32 %v470, %v2406
  %2408 = vmatmul.f32.gmra.mxu0 %v205
  %v2409 = vpop.f32.mrf.mxu0
  %v2410 = vadd.f32 %v470, %v2409
  %2411 = vmatmul.f32.gmra.mxu0 %v208
  %v2412 = vpop.f32.mrf.mxu0
  %v2413 = vadd.f32 %v470, %v2412
  %2414 = vmatmul.f32.gmra.mxu0 %v211
  %v2415 = vpop.f32.mrf.mxu0
  %v2416 = vadd.f32 %v470, %v2415
  %2417 = vmatmul.f32.gmra.mxu0 %v214
  %v2418 = vpop.f32.mrf.mxu0
  %v2419 = vadd.f32 %v470, %v2418
  %2420 = vmatmul.f32.gmra.mxu0 %v217
  %v2421 = vpop.f32.mrf.mxu0
  %v2422 = vadd.f32 %v470, %v2421
  %2423 = vmatmul.f32.gmra.mxu0 %v220
  %v2424 = vpop.f32.mrf.mxu0
  %v2425 = vadd.f32 %v470, %v2424
  %2426 = vmatmul.f32.gmra.mxu0 %v223
  %v2427 = vpop.f32.mrf.mxu0
  %v2428 = vadd.f32 %v470, %v2427
  %2429 = vmatmul.f32.gmra.mxu0 %v226
  %v2430 = vpop.f32.mrf.mxu0
  %v2431 = vadd.f32 %v470, %v2430
  %2432 = vmatmul.f32.gmra.mxu0 %v229
  %v2433 = vpop.f32.mrf.mxu0
  %v2434 = vadd.f32 %v470, %v2433
  %2435 = vmatmul.f32.gmra.mxu0 %v232
  %v2436 = vpop.f32.mrf.mxu0
  %v2437 = vadd.f32 %v470, %v2436
  %2438 = vmatmul.f32.gmra.mxu0 %v235
  %v2439 = vpop.f32.mrf.mxu0
  %v2440 = vadd.f32 %v470, %v2439
  %2441 = vmatmul.f32.gmra.mxu0 %v238
  %v2442 = vpop.f32.mrf.mxu0
  %v2443 = vadd.f32 %v470, %v2442
  %2444 = vmatmul.f32.gmra.mxu0 %v241
  %v2445 = vpop.f32.mrf.mxu0
  %v2446 = vadd.f32 %v470, %v2445
  %2447 = vmatmul.f32.gmra.mxu0 %v244
  %v2448 = vpop.f32.mrf.mxu0
  %v2449 = vadd.f32 %v470, %v2448
  %2450 = vmatmul.f32.gmra.mxu0 %v247
  %v2451 = vpop.f32.mrf.mxu0
  %v2452 = vadd.f32 %v470, %v2451
  %2453 = vmatmul.f32.gmra.mxu0 %v250
  %v2454 = vpop.f32.mrf.mxu0
  %v2455 = vadd.f32 %v470, %v2454
  %2456 = vmatmul.f32.gmra.mxu0 %v253
  %v2457 = vpop.f32.mrf.mxu0
  %v2458 = vadd.f32 %v470, %v2457
  %2459 = vmatmul.f32.gmra.mxu0 %v256
  %v2460 = vpop.f32.mrf.mxu0
  %v2461 = vadd.f32 %v470, %v2460
  %2462 = vmatmul.f32.gmra.mxu0 %v259
  %v2463 = vpop.f32.mrf.mxu0
  %v2464 = vadd.f32 %v470, %v2463
  %2465 = vmatmul.f32.gmra.mxu0 %v262
  %v2466 = vpop.f32.mrf.mxu0
  %v2467 = vadd.f32 %v470, %v2466
  %2468 = vmatmul.f32.gmra.mxu0 %v265
  %v2469 = vpop.f32.mrf.mxu0
  %v2470 = vadd.f32 %v470, %v2469
  %2471 = vmatmul.f32.gmra.mxu0 %v268
  %v2472 = vpop.f32.mrf.mxu0
  %v2473 = vadd.f32 %v470, %v2472
  %2474 = vmatmul.f32.gmra.mxu0 %v271
  %v2475 = vpop.f32.mrf.mxu0
  %v2476 = vadd.f32 %v470, %v2475
  %2477 = vmatmul.f32.gmra.mxu0 %v274
  %v2478 = vpop.f32.mrf.mxu0
  %v2479 = vadd.f32 %v470, %v2478
  %2480 = vmatmul.f32.gmra.mxu0 %v277
  %v2481 = vpop.f32.mrf.mxu0
  %v2482 = vadd.f32 %v470, %v2481
  %2483 = vmatmul.f32.gmra.mxu0 %v280
  %v2484 = vpop.f32.mrf.mxu0
  %v2485 = vadd.f32 %v470, %v2484
  %2486 = vmatmul.f32.gmra.mxu0 %v283
  %v2487 = vpop.f32.mrf.mxu0
  %v2488 = vadd.f32 %v470, %v2487
  %2489 = vmatmul.f32.gmra.mxu0 %v286
  %v2490 = vpop.f32.mrf.mxu0
  %v2491 = vadd.f32 %v470, %v2490
  %2492 = vmatmul.f32.gmra.mxu0 %v289
  %v2493 = vpop.f32.mrf.mxu0
  %v2494 = vadd.f32 %v470, %v2493
  %2495 = vmatmul.f32.gmra.mxu0 %v292
  %v2496 = vpop.f32.mrf.mxu0
  %v2497 = vadd.f32 %v470, %v2496
  %2498 = vmatmul.f32.gmra.mxu0 %v295
  %v2499 = vpop.f32.mrf.mxu0
  %v2500 = vadd.f32 %v470, %v2499
  %2501 = vmatmul.f32.gmra.mxu0 %v298
  %v2502 = vpop.f32.mrf.mxu0
  %v2503 = vadd.f32 %v470, %v2502
  %2504 = vmatmul.f32.gmra.mxu0 %v301
  %v2505 = vpop.f32.mrf.mxu0
  %v2506 = vadd.f32 %v470, %v2505
  %2507 = vmatmul.f32.gmra.mxu0 %v304
  %v2508 = vpop.f32.mrf.mxu0
  %v2509 = vadd.f32 %v470, %v2508
  %2510 = vmatmul.f32.gmra.mxu0 %v307
  %v2511 = vpop.f32.mrf.mxu0
  %v2512 = vadd.f32 %v470, %v2511
  %2513 = vmatmul.f32.gmra.mxu0 %v310
  %v2514 = vpop.f32.mrf.mxu0
  %v2515 = vadd.f32 %v470, %v2514
  %2516 = vmatmul.f32.gmra.mxu0 %v313
  %v2517 = vpop.f32.mrf.mxu0
  %v2518 = vadd.f32 %v470, %v2517
  %2519 = vmatmul.f32.gmra.mxu0 %v316
  %v2520 = vpop.f32.mrf.mxu0
  %v2521 = vadd.f32 %v470, %v2520
  %2522 = vmatmul.f32.gmra.mxu0 %v319
  %v2523 = vpop.f32.mrf.mxu0
  %v2524 = vadd.f32 %v470, %v2523
  %2525 = vmatmul.f32.gmra.mxu0 %v322
  %v2526 = vpop.f32.mrf.mxu0
  %v2527 = vadd.f32 %v470, %v2526
  %2528 = vmatmul.f32.gmra.mxu0 %v325
  %v2529 = vpop.f32.mrf.mxu0
  %v2530 = vadd.f32 %v470, %v2529
  %2531 = vmatmul.f32.gmra.mxu0 %v328
  %v2532 = vpop.f32.mrf.mxu0
  %v2533 = vadd.f32 %v470, %v2532
  %2534 = vmatmul.f32.gmra.mxu0 %v331
  %v2535 = vpop.f32.mrf.mxu0
  %v2536 = vadd.f32 %v470, %v2535
  %2537 = vmatmul.f32.gmra.mxu0 %v334
  %v2538 = vpop.f32.mrf.mxu0
  %v2539 = vadd.f32 %v470, %v2538
  %2540 = vmatmul.f32.gmra.mxu0 %v337
  %v2541 = vpop.f32.mrf.mxu0
  %v2542 = vadd.f32 %v470, %v2541
  %2543 = vmatmul.f32.gmra.mxu0 %v340
  %v2544 = vpop.f32.mrf.mxu0
  %v2545 = vadd.f32 %v470, %v2544
  %2546 = vmatmul.f32.gmra.mxu0 %v343
  %v2547 = vpop.f32.mrf.mxu0
  %v2548 = vadd.f32 %v470, %v2547
  %2549 = vmatmul.f32.gmra.mxu0 %v346
  %v2550 = vpop.f32.mrf.mxu0
  %v2551 = vadd.f32 %v470, %v2550
  %2552 = vmatmul.f32.gmra.mxu0 %v349
  %v2553 = vpop.f32.mrf.mxu0
  %v2554 = vadd.f32 %v470, %v2553
  %2555 = vmatmul.f32.gmra.mxu0 %v352
  %v2556 = vpop.f32.mrf.mxu0
  %v2557 = vadd.f32 %v470, %v2556
  %2558 = vmatmul.f32.gmra.mxu0 %v355
  %v2559 = vpop.f32.mrf.mxu0
  %v2560 = vadd.f32 %v470, %v2559
  %2561 = vmatmul.f32.gmra.mxu0 %v358
  %v2562 = vpop.f32.mrf.mxu0
  %v2563 = vadd.f32 %v470, %v2562
  %2564 = vmatmul.f32.gmra.mxu0 %v361
  %v2565 = vpop.f32.mrf.mxu0
  %v2566 = vadd.f32 %v470, %v2565
  %2567 = vmatmul.f32.gmra.mxu0 %v364
  %v2568 = vpop.f32.mrf.mxu0
  %v2569 = vadd.f32 %v470, %v2568
  %2570 = vmatmul.f32.gmra.mxu0 %v367
  %v2571 = vpop.f32.mrf.mxu0
  %v2572 = vadd.f32 %v470, %v2571
  %2573 = vmatmul.f32.gmra.mxu0 %v370
  %v2574 = vpop.f32.mrf.mxu0
  %v2575 = vadd.f32 %v470, %v2574
  %2576 = vmatmul.f32.gmra.mxu0 %v373
  %v2577 = vpop.f32.mrf.mxu0
  %v2578 = vadd.f32 %v470, %v2577
  %2579 = vmatmul.f32.gmra.mxu0 %v376
  %v2580 = vpop.f32.mrf.mxu0
  %v2581 = vadd.f32 %v470, %v2580
  %2582 = vmatmul.f32.gmra.mxu0 %v379
  %v2583 = vpop.f32.mrf.mxu0
  %v2584 = vadd.f32 %v470, %v2583
  %2585 = vmatmul.f32.gmra.mxu0 %v382
  %v2586 = vpop.f32.mrf.mxu0
  %v2587 = vadd.f32 %v470, %v2586
  %2588 = vmatmul.f32.gmra.mxu0 %v385
  %v2589 = vpop.f32.mrf.mxu0
  %v2590 = vadd.f32 %v470, %v2589
  %2591 = vmatmul.f32.gmra.mxu0 %v388
  %v2592 = vpop.f32.mrf.mxu0
  %v2593 = vadd.f32 %v470, %v2592
  %2594 = vmatmul.f32.gmra.mxu0 %v391
  %v2595 = vpop.f32.mrf.mxu0
  %v2596 = vadd.f32 %v470, %v2595
  %2597 = vmatmul.f32.gmra.mxu0 %v394
  %v2598 = vpop.f32.mrf.mxu0
  %v2599 = vadd.f32 %v470, %v2598
  %2600 = vmatmul.f32.gmra.mxu0 %v397
  %v2601 = vpop.f32.mrf.mxu0
  %v2602 = vadd.f32 %v470, %v2601
  %2603 = vmatmul.f32.gmra.mxu0 %v400
  %v2604 = vpop.f32.mrf.mxu0
  %v2605 = vadd.f32 %v470, %v2604
  %2606 = vmatmul.f32.gmra.mxu0 %v403
  %v2607 = vpop.f32.mrf.mxu0
  %v2608 = vadd.f32 %v470, %v2607
  %2609 = vmatmul.f32.gmra.mxu0 %v406
  %v2610 = vpop.f32.mrf.mxu0
  %v2611 = vadd.f32 %v470, %v2610
  %2612 = vmatmul.f32.gmra.mxu0 %v409
  %v2613 = vpop.f32.mrf.mxu0
  %v2614 = vadd.f32 %v470, %v2613
  %2615 = vmatmul.f32.gmra.mxu0 %v412
  %v2616 = vpop.f32.mrf.mxu0
  %v2617 = vadd.f32 %v470, %v2616
  %2618 = vmatmul.f32.gmra.mxu0 %v415
  %v2619 = vpop.f32.mrf.mxu0
  %v2620 = vadd.f32 %v470, %v2619
  %2621 = vmatmul.f32.gmra.mxu0 %v418
  %v2622 = vpop.f32.mrf.mxu0
  %v2623 = vadd.f32 %v470, %v2622
  %2624 = vmatmul.f32.gmra.mxu0 %v421
  %v2625 = vpop.f32.mrf.mxu0
  %v2626 = vadd.f32 %v470, %v2625
  %2627 = vmatmul.f32.gmra.mxu0 %v424
  %v2628 = vpop.f32.mrf.mxu0
  %v2629 = vadd.f32 %v470, %v2628
  %2630 = vmatmul.f32.gmra.mxu0 %v427
  %v2631 = vpop.f32.mrf.mxu0
  %v2632 = vadd.f32 %v470, %v2631
  %2633 = vdwg.mxu0
  %2634 = vmatpush.msra.mxu0 %v2223
  %2635 = vmatpush.msra.mxu0 %v2222
  %2636 = vmatpush.msra.mxu0 %v2221
  %2637 = vmatpush.msra.mxu0 %v2220
  %2638 = vmatpush.msra.mxu0 %v2219
  %2639 = vmatpush.msra.mxu0 %v2218
  %2640 = vmatpush.msra.mxu0 %v2217
  %2641 = vmatpush.msra.mxu0 %v2216
  %2642 = vmatpush.msra.mxu0 %v2215
  %2643 = vmatpush.msra.mxu0 %v2214
  %2644 = vmatpush.msra.mxu0 %v2213
  %2645 = vmatpush.msra.mxu0 %v2212
  %2646 = vmatpush.msra.mxu0 %v2211
  %2647 = vmatpush.msra.mxu0 %v2210
  %2648 = vmatpush.msra.mxu0 %v2209
  %2649 = vmatpush.msra.mxu0 %v2208
  %2650 = vmatmul.f32.gmra.mxu0 %v47
  %v2651 = vpop.f32.mrf.mxu0
  %v2652 = vadd.f32 %v2251, %v2651
  %2653 = vmatmul.f32.gmra.mxu0 %v50
  %v2654 = vpop.f32.mrf.mxu0
  %v2655 = vadd.f32 %v2254, %v2654
  %2656 = vmatmul.f32.gmra.mxu0 %v53
  %v2657 = vpop.f32.mrf.mxu0
  %v2658 = vadd.f32 %v2257, %v2657
  %2659 = vmatmul.f32.gmra.mxu0 %v56
  %v2660 = vpop.f32.mrf.mxu0
  %v2661 = vadd.f32 %v2260, %v2660
  %2662 = vmatmul.f32.gmra.mxu0 %v59
  %v2663 = vpop.f32.mrf.mxu0
  %v2664 = vadd.f32 %v2263, %v2663
  %2665 = vmatmul.f32.gmra.mxu0 %v62
  %v2666 = vpop.f32.mrf.mxu0
  %v2667 = vadd.f32 %v2266, %v2666
  %2668 = vmatmul.f32.gmra.mxu0 %v65
  %v2669 = vpop.f32.mrf.mxu0
  %v2670 = vadd.f32 %v2269, %v2669
  %2671 = vmatmul.f32.gmra.mxu0 %v68
  %v2672 = vpop.f32.mrf.mxu0
  %v2673 = vadd.f32 %v2272, %v2672
  %2674 = vmatmul.f32.gmra.mxu0 %v71
  %v2675 = vpop.f32.mrf.mxu0
  %v2676 = vadd.f32 %v2275, %v2675
  %2677 = vmatmul.f32.gmra.mxu0 %v74
  %v2678 = vpop.f32.mrf.mxu0
  %v2679 = vadd.f32 %v2278, %v2678
  %2680 = vmatmul.f32.gmra.mxu0 %v77
  %v2681 = vpop.f32.mrf.mxu0
  %v2682 = vadd.f32 %v2281, %v2681
  %2683 = vmatmul.f32.gmra.mxu0 %v80
  %v2684 = vpop.f32.mrf.mxu0
  %v2685 = vadd.f32 %v2284, %v2684
  %2686 = vmatmul.f32.gmra.mxu0 %v83
  %v2687 = vpop.f32.mrf.mxu0
  %v2688 = vadd.f32 %v2287, %v2687
  %2689 = vmatmul.f32.gmra.mxu0 %v86
  %v2690 = vpop.f32.mrf.mxu0
  %v2691 = vadd.f32 %v2290, %v2690
  %2692 = vmatmul.f32.gmra.mxu0 %v89
  %v2693 = vpop.f32.mrf.mxu0
  %v2694 = vadd.f32 %v2293, %v2693
  %2695 = vmatmul.f32.gmra.mxu0 %v92
  %v2696 = vpop.f32.mrf.mxu0
  %v2697 = vadd.f32 %v2296, %v2696
  %2698 = vmatmul.f32.gmra.mxu0 %v95
  %v2699 = vpop.f32.mrf.mxu0
  %v2700 = vadd.f32 %v2299, %v2699
  %2701 = vmatmul.f32.gmra.mxu0 %v98
  %v2702 = vpop.f32.mrf.mxu0
  %v2703 = vadd.f32 %v2302, %v2702
  %2704 = vmatmul.f32.gmra.mxu0 %v101
  %v2705 = vpop.f32.mrf.mxu0
  %v2706 = vadd.f32 %v2305, %v2705
  %2707 = vmatmul.f32.gmra.mxu0 %v104
  %v2708 = vpop.f32.mrf.mxu0
  %v2709 = vadd.f32 %v2308, %v2708
  %2710 = vmatmul.f32.gmra.mxu0 %v107
  %v2711 = vpop.f32.mrf.mxu0
  %v2712 = vadd.f32 %v2311, %v2711
  %2713 = vmatmul.f32.gmra.mxu0 %v110
  %v2714 = vpop.f32.mrf.mxu0
  %v2715 = vadd.f32 %v2314, %v2714
  %2716 = vmatmul.f32.gmra.mxu0 %v113
  %v2717 = vpop.f32.mrf.mxu0
  %v2718 = vadd.f32 %v2317, %v2717
  %2719 = vmatmul.f32.gmra.mxu0 %v116
  %v2720 = vpop.f32.mrf.mxu0
  %v2721 = vadd.f32 %v2320, %v2720
  %2722 = vmatmul.f32.gmra.mxu0 %v119
  %v2723 = vpop.f32.mrf.mxu0
  %v2724 = vadd.f32 %v2323, %v2723
  %2725 = vmatmul.f32.gmra.mxu0 %v122
  %v2726 = vpop.f32.mrf.mxu0
  %v2727 = vadd.f32 %v2326, %v2726
  %2728 = vmatmul.f32.gmra.mxu0 %v125
  %v2729 = vpop.f32.mrf.mxu0
  %v2730 = vadd.f32 %v2329, %v2729
  %2731 = vmatmul.f32.gmra.mxu0 %v128
  %v2732 = vpop.f32.mrf.mxu0
  %v2733 = vadd.f32 %v2332, %v2732
  %2734 = vmatmul.f32.gmra.mxu0 %v131
  %v2735 = vpop.f32.mrf.mxu0
  %v2736 = vadd.f32 %v2335, %v2735
  %2737 = vmatmul.f32.gmra.mxu0 %v134
  %v2738 = vpop.f32.mrf.mxu0
  %v2739 = vadd.f32 %v2338, %v2738
  %2740 = vmatmul.f32.gmra.mxu0 %v137
  %v2741 = vpop.f32.mrf.mxu0
  %v2742 = vadd.f32 %v2341, %v2741
  %2743 = vmatmul.f32.gmra.mxu0 %v140
  %v2744 = vpop.f32.mrf.mxu0
  %v2745 = vadd.f32 %v2344, %v2744
  %2746 = vmatmul.f32.gmra.mxu0 %v143
  %v2747 = vpop.f32.mrf.mxu0
  %v2748 = vadd.f32 %v2347, %v2747
  %2749 = vmatmul.f32.gmra.mxu0 %v146
  %v2750 = vpop.f32.mrf.mxu0
  %v2751 = vadd.f32 %v2350, %v2750
  %2752 = vmatmul.f32.gmra.mxu0 %v149
  %v2753 = vpop.f32.mrf.mxu0
  %v2754 = vadd.f32 %v2353, %v2753
  %2755 = vmatmul.f32.gmra.mxu0 %v152
  %v2756 = vpop.f32.mrf.mxu0
  %v2757 = vadd.f32 %v2356, %v2756
  %2758 = vmatmul.f32.gmra.mxu0 %v155
  %v2759 = vpop.f32.mrf.mxu0
  %v2760 = vadd.f32 %v2359, %v2759
  %2761 = vmatmul.f32.gmra.mxu0 %v158
  %v2762 = vpop.f32.mrf.mxu0
  %v2763 = vadd.f32 %v2362, %v2762
  %2764 = vmatmul.f32.gmra.mxu0 %v161
  %v2765 = vpop.f32.mrf.mxu0
  %v2766 = vadd.f32 %v2365, %v2765
  %2767 = vmatmul.f32.gmra.mxu0 %v164
  %v2768 = vpop.f32.mrf.mxu0
  %v2769 = vadd.f32 %v2368, %v2768
  %2770 = vmatmul.f32.gmra.mxu0 %v167
  %v2771 = vpop.f32.mrf.mxu0
  %v2772 = vadd.f32 %v2371, %v2771
  %2773 = vmatmul.f32.gmra.mxu0 %v170
  %v2774 = vpop.f32.mrf.mxu0
  %v2775 = vadd.f32 %v2374, %v2774
  %2776 = vmatmul.f32.gmra.mxu0 %v173
  %v2777 = vpop.f32.mrf.mxu0
  %v2778 = vadd.f32 %v2377, %v2777
  %2779 = vmatmul.f32.gmra.mxu0 %v176
  %v2780 = vpop.f32.mrf.mxu0
  %v2781 = vadd.f32 %v2380, %v2780
  %2782 = vmatmul.f32.gmra.mxu0 %v179
  %v2783 = vpop.f32.mrf.mxu0
  %v2784 = vadd.f32 %v2383, %v2783
  %2785 = vmatmul.f32.gmra.mxu0 %v182
  %v2786 = vpop.f32.mrf.mxu0
  %v2787 = vadd.f32 %v2386, %v2786
  %2788 = vmatmul.f32.gmra.mxu0 %v185
  %v2789 = vpop.f32.mrf.mxu0
  %v2790 = vadd.f32 %v2389, %v2789
  %2791 = vmatmul.f32.gmra.mxu0 %v188
  %v2792 = vpop.f32.mrf.mxu0
  %v2793 = vadd.f32 %v2392, %v2792
  %2794 = vmatmul.f32.gmra.mxu0 %v191
  %v2795 = vpop.f32.mrf.mxu0
  %v2796 = vadd.f32 %v2395, %v2795
  %2797 = vmatmul.f32.gmra.mxu0 %v194
  %v2798 = vpop.f32.mrf.mxu0
  %v2799 = vadd.f32 %v2398, %v2798
  %2800 = vmatmul.f32.gmra.mxu0 %v197
  %v2801 = vpop.f32.mrf.mxu0
  %v2802 = vadd.f32 %v2401, %v2801
  %2803 = vmatmul.f32.gmra.mxu0 %v200
  %v2804 = vpop.f32.mrf.mxu0
  %v2805 = vadd.f32 %v2404, %v2804
  %2806 = vmatmul.f32.gmra.mxu0 %v203
  %v2807 = vpop.f32.mrf.mxu0
  %v2808 = vadd.f32 %v2407, %v2807
  %2809 = vmatmul.f32.gmra.mxu0 %v206
  %v2810 = vpop.f32.mrf.mxu0
  %v2811 = vadd.f32 %v2410, %v2810
  %2812 = vmatmul.f32.gmra.mxu0 %v209
  %v2813 = vpop.f32.mrf.mxu0
  %v2814 = vadd.f32 %v2413, %v2813
  %2815 = vmatmul.f32.gmra.mxu0 %v212
  %v2816 = vpop.f32.mrf.mxu0
  %v2817 = vadd.f32 %v2416, %v2816
  %2818 = vmatmul.f32.gmra.mxu0 %v215
  %v2819 = vpop.f32.mrf.mxu0
  %v2820 = vadd.f32 %v2419, %v2819
  %2821 = vmatmul.f32.gmra.mxu0 %v218
  %v2822 = vpop.f32.mrf.mxu0
  %v2823 = vadd.f32 %v2422, %v2822
  %2824 = vmatmul.f32.gmra.mxu0 %v221
  %v2825 = vpop.f32.mrf.mxu0
  %v2826 = vadd.f32 %v2425, %v2825
  %2827 = vmatmul.f32.gmra.mxu0 %v224
  %v2828 = vpop.f32.mrf.mxu0
  %v2829 = vadd.f32 %v2428, %v2828
  %2830 = vmatmul.f32.gmra.mxu0 %v227
  %v2831 = vpop.f32.mrf.mxu0
  %v2832 = vadd.f32 %v2431, %v2831
  %2833 = vmatmul.f32.gmra.mxu0 %v230
  %v2834 = vpop.f32.mrf.mxu0
  %v2835 = vadd.f32 %v2434, %v2834
  %2836 = vmatmul.f32.gmra.mxu0 %v233
  %v2837 = vpop.f32.mrf.mxu0
  %v2838 = vadd.f32 %v2437, %v2837
  %2839 = vmatmul.f32.gmra.mxu0 %v236
  %v2840 = vpop.f32.mrf.mxu0
  %v2841 = vadd.f32 %v2440, %v2840
  %2842 = vmatmul.f32.gmra.mxu0 %v239
  %v2843 = vpop.f32.mrf.mxu0
  %v2844 = vadd.f32 %v2443, %v2843
  %2845 = vmatmul.f32.gmra.mxu0 %v242
  %v2846 = vpop.f32.mrf.mxu0
  %v2847 = vadd.f32 %v2446, %v2846
  %2848 = vmatmul.f32.gmra.mxu0 %v245
  %v2849 = vpop.f32.mrf.mxu0
  %v2850 = vadd.f32 %v2449, %v2849
  %2851 = vmatmul.f32.gmra.mxu0 %v248
  %v2852 = vpop.f32.mrf.mxu0
  %v2853 = vadd.f32 %v2452, %v2852
  %2854 = vmatmul.f32.gmra.mxu0 %v251
  %v2855 = vpop.f32.mrf.mxu0
  %v2856 = vadd.f32 %v2455, %v2855
  %2857 = vmatmul.f32.gmra.mxu0 %v254
  %v2858 = vpop.f32.mrf.mxu0
  %v2859 = vadd.f32 %v2458, %v2858
  %2860 = vmatmul.f32.gmra.mxu0 %v257
  %v2861 = vpop.f32.mrf.mxu0
  %v2862 = vadd.f32 %v2461, %v2861
  %2863 = vmatmul.f32.gmra.mxu0 %v260
  %v2864 = vpop.f32.mrf.mxu0
  %v2865 = vadd.f32 %v2464, %v2864
  %2866 = vmatmul.f32.gmra.mxu0 %v263
  %v2867 = vpop.f32.mrf.mxu0
  %v2868 = vadd.f32 %v2467, %v2867
  %2869 = vmatmul.f32.gmra.mxu0 %v266
  %v2870 = vpop.f32.mrf.mxu0
  %v2871 = vadd.f32 %v2470, %v2870
  %2872 = vmatmul.f32.gmra.mxu0 %v269
  %v2873 = vpop.f32.mrf.mxu0
  %v2874 = vadd.f32 %v2473, %v2873
  %2875 = vmatmul.f32.gmra.mxu0 %v272
  %v2876 = vpop.f32.mrf.mxu0
  %v2877 = vadd.f32 %v2476, %v2876
  %2878 = vmatmul.f32.gmra.mxu0 %v275
  %v2879 = vpop.f32.mrf.mxu0
  %v2880 = vadd.f32 %v2479, %v2879
  %2881 = vmatmul.f32.gmra.mxu0 %v278
  %v2882 = vpop.f32.mrf.mxu0
  %v2883 = vadd.f32 %v2482, %v2882
  %2884 = vmatmul.f32.gmra.mxu0 %v281
  %v2885 = vpop.f32.mrf.mxu0
  %v2886 = vadd.f32 %v2485, %v2885
  %2887 = vmatmul.f32.gmra.mxu0 %v284
  %v2888 = vpop.f32.mrf.mxu0
  %v2889 = vadd.f32 %v2488, %v2888
  %2890 = vmatmul.f32.gmra.mxu0 %v287
  %v2891 = vpop.f32.mrf.mxu0
  %v2892 = vadd.f32 %v2491, %v2891
  %2893 = vmatmul.f32.gmra.mxu0 %v290
  %v2894 = vpop.f32.mrf.mxu0
  %v2895 = vadd.f32 %v2494, %v2894
  %2896 = vmatmul.f32.gmra.mxu0 %v293
  %v2897 = vpop.f32.mrf.mxu0
  %v2898 = vadd.f32 %v2497, %v2897
  %2899 = vmatmul.f32.gmra.mxu0 %v296
  %v2900 = vpop.f32.mrf.mxu0
  %v2901 = vadd.f32 %v2500, %v2900
  %2902 = vmatmul.f32.gmra.mxu0 %v299
  %v2903 = vpop.f32.mrf.mxu0
  %v2904 = vadd.f32 %v2503, %v2903
  %2905 = vmatmul.f32.gmra.mxu0 %v302
  %v2906 = vpop.f32.mrf.mxu0
  %v2907 = vadd.f32 %v2506, %v2906
  %2908 = vmatmul.f32.gmra.mxu0 %v305
  %v2909 = vpop.f32.mrf.mxu0
  %v2910 = vadd.f32 %v2509, %v2909
  %2911 = vmatmul.f32.gmra.mxu0 %v308
  %v2912 = vpop.f32.mrf.mxu0
  %v2913 = vadd.f32 %v2512, %v2912
  %2914 = vmatmul.f32.gmra.mxu0 %v311
  %v2915 = vpop.f32.mrf.mxu0
  %v2916 = vadd.f32 %v2515, %v2915
  %2917 = vmatmul.f32.gmra.mxu0 %v314
  %v2918 = vpop.f32.mrf.mxu0
  %v2919 = vadd.f32 %v2518, %v2918
  %2920 = vmatmul.f32.gmra.mxu0 %v317
  %v2921 = vpop.f32.mrf.mxu0
  %v2922 = vadd.f32 %v2521, %v2921
  %2923 = vmatmul.f32.gmra.mxu0 %v320
  %v2924 = vpop.f32.mrf.mxu0
  %v2925 = vadd.f32 %v2524, %v2924
  %2926 = vmatmul.f32.gmra.mxu0 %v323
  %v2927 = vpop.f32.mrf.mxu0
  %v2928 = vadd.f32 %v2527, %v2927
  %2929 = vmatmul.f32.gmra.mxu0 %v326
  %v2930 = vpop.f32.mrf.mxu0
  %v2931 = vadd.f32 %v2530, %v2930
  %2932 = vmatmul.f32.gmra.mxu0 %v329
  %v2933 = vpop.f32.mrf.mxu0
  %v2934 = vadd.f32 %v2533, %v2933
  %2935 = vmatmul.f32.gmra.mxu0 %v332
  %v2936 = vpop.f32.mrf.mxu0
  %v2937 = vadd.f32 %v2536, %v2936
  %2938 = vmatmul.f32.gmra.mxu0 %v335
  %v2939 = vpop.f32.mrf.mxu0
  %v2940 = vadd.f32 %v2539, %v2939
  %2941 = vmatmul.f32.gmra.mxu0 %v338
  %v2942 = vpop.f32.mrf.mxu0
  %v2943 = vadd.f32 %v2542, %v2942
  %2944 = vmatmul.f32.gmra.mxu0 %v341
  %v2945 = vpop.f32.mrf.mxu0
  %v2946 = vadd.f32 %v2545, %v2945
  %2947 = vmatmul.f32.gmra.mxu0 %v344
  %v2948 = vpop.f32.mrf.mxu0
  %v2949 = vadd.f32 %v2548, %v2948
  %2950 = vmatmul.f32.gmra.mxu0 %v347
  %v2951 = vpop.f32.mrf.mxu0
  %v2952 = vadd.f32 %v2551, %v2951
  %2953 = vmatmul.f32.gmra.mxu0 %v350
  %v2954 = vpop.f32.mrf.mxu0
  %v2955 = vadd.f32 %v2554, %v2954
  %2956 = vmatmul.f32.gmra.mxu0 %v353
  %v2957 = vpop.f32.mrf.mxu0
  %v2958 = vadd.f32 %v2557, %v2957
  %2959 = vmatmul.f32.gmra.mxu0 %v356
  %v2960 = vpop.f32.mrf.mxu0
  %v2961 = vadd.f32 %v2560, %v2960
  %2962 = vmatmul.f32.gmra.mxu0 %v359
  %v2963 = vpop.f32.mrf.mxu0
  %v2964 = vadd.f32 %v2563, %v2963
  %2965 = vmatmul.f32.gmra.mxu0 %v362
  %v2966 = vpop.f32.mrf.mxu0
  %v2967 = vadd.f32 %v2566, %v2966
  %2968 = vmatmul.f32.gmra.mxu0 %v365
  %v2969 = vpop.f32.mrf.mxu0
  %v2970 = vadd.f32 %v2569, %v2969
  %2971 = vmatmul.f32.gmra.mxu0 %v368
  %v2972 = vpop.f32.mrf.mxu0
  %v2973 = vadd.f32 %v2572, %v2972
  %2974 = vmatmul.f32.gmra.mxu0 %v371
  %v2975 = vpop.f32.mrf.mxu0
  %v2976 = vadd.f32 %v2575, %v2975
  %2977 = vmatmul.f32.gmra.mxu0 %v374
  %v2978 = vpop.f32.mrf.mxu0
  %v2979 = vadd.f32 %v2578, %v2978
  %2980 = vmatmul.f32.gmra.mxu0 %v377
  %v2981 = vpop.f32.mrf.mxu0
  %v2982 = vadd.f32 %v2581, %v2981
  %2983 = vmatmul.f32.gmra.mxu0 %v380
  %v2984 = vpop.f32.mrf.mxu0
  %v2985 = vadd.f32 %v2584, %v2984
  %2986 = vmatmul.f32.gmra.mxu0 %v383
  %v2987 = vpop.f32.mrf.mxu0
  %v2988 = vadd.f32 %v2587, %v2987
  %2989 = vmatmul.f32.gmra.mxu0 %v386
  %v2990 = vpop.f32.mrf.mxu0
  %v2991 = vadd.f32 %v2590, %v2990
  %2992 = vmatmul.f32.gmra.mxu0 %v389
  %v2993 = vpop.f32.mrf.mxu0
  %v2994 = vadd.f32 %v2593, %v2993
  %2995 = vmatmul.f32.gmra.mxu0 %v392
  %v2996 = vpop.f32.mrf.mxu0
  %v2997 = vadd.f32 %v2596, %v2996
  %2998 = vmatmul.f32.gmra.mxu0 %v395
  %v2999 = vpop.f32.mrf.mxu0
  %v3000 = vadd.f32 %v2599, %v2999
  %3001 = vmatmul.f32.gmra.mxu0 %v398
  %v3002 = vpop.f32.mrf.mxu0
  %v3003 = vadd.f32 %v2602, %v3002
  %3004 = vmatmul.f32.gmra.mxu0 %v401
  %v3005 = vpop.f32.mrf.mxu0
  %v3006 = vadd.f32 %v2605, %v3005
  %3007 = vmatmul.f32.gmra.mxu0 %v404
  %v3008 = vpop.f32.mrf.mxu0
  %v3009 = vadd.f32 %v2608, %v3008
  %3010 = vmatmul.f32.gmra.mxu0 %v407
  %v3011 = vpop.f32.mrf.mxu0
  %v3012 = vadd.f32 %v2611, %v3011
  %3013 = vmatmul.f32.gmra.mxu0 %v410
  %v3014 = vpop.f32.mrf.mxu0
  %v3015 = vadd.f32 %v2614, %v3014
  %3016 = vmatmul.f32.gmra.mxu0 %v413
  %v3017 = vpop.f32.mrf.mxu0
  %v3018 = vadd.f32 %v2617, %v3017
  %3019 = vmatmul.f32.gmra.mxu0 %v416
  %v3020 = vpop.f32.mrf.mxu0
  %v3021 = vadd.f32 %v2620, %v3020
  %3022 = vmatmul.f32.gmra.mxu0 %v419
  %v3023 = vpop.f32.mrf.mxu0
  %v3024 = vadd.f32 %v2623, %v3023
  %3025 = vmatmul.f32.gmra.mxu0 %v422
  %v3026 = vpop.f32.mrf.mxu0
  %v3027 = vadd.f32 %v2626, %v3026
  %3028 = vmatmul.f32.gmra.mxu0 %v425
  %v3029 = vpop.f32.mrf.mxu0
  %v3030 = vadd.f32 %v2629, %v3029
  %3031 = vmatmul.f32.gmra.mxu0 %v428
  %v3032 = vpop.f32.mrf.mxu0
  %v3033 = vadd.f32 %v2632, %v3032
  %3034 = vdwg.mxu0
  %3035 = vmatpush.msra.mxu0 0.0
  %3036 = vmatpush.msra.mxu0 0.0
  %3037 = vmatpush.msra.mxu0 0.0
  %3038 = vmatpush.msra.mxu0 0.0
  %3039 = vmatpush.msra.mxu0 0.0
  %3040 = vmatpush.msra.mxu0 0.0
  %3041 = vmatpush.msra.mxu0 0.0
  %3042 = vmatpush.msra.mxu0 0.0
  %3043 = vmatpush.msra.mxu0 0.0
  %3044 = vmatpush.msra.mxu0 0.0
  %3045 = vmatpush.msra.mxu0 %v2231
  %3046 = vmatpush.msra.mxu0 %v2228
  %3047 = vmatpush.msra.mxu0 %v2227
  %3048 = vmatpush.msra.mxu0 %v2226
  %3049 = vmatpush.msra.mxu0 %v2225
  %3050 = vmatpush.msra.mxu0 %v2224
  %3051 = vmatmul.f32.gmra.mxu0 %v474
  %v3052 = vpop.f32.mrf.mxu0
  %v3053 = vadd.f32 %v2652, %v3052
  %3054 = vmatmul.f32.gmra.mxu0 %v477
  %v3055 = vpop.f32.mrf.mxu0
  %v3056 = vadd.f32 %v2655, %v3055
  %3057 = vmatmul.f32.gmra.mxu0 %v480
  %v3058 = vpop.f32.mrf.mxu0
  %v3059 = vadd.f32 %v2658, %v3058
  %3060 = vmatmul.f32.gmra.mxu0 %v483
  %v3061 = vpop.f32.mrf.mxu0
  %v3062 = vadd.f32 %v2661, %v3061
  %3063 = vmatmul.f32.gmra.mxu0 %v486
  %v3064 = vpop.f32.mrf.mxu0
  %v3065 = vadd.f32 %v2664, %v3064
  %3066 = vmatmul.f32.gmra.mxu0 %v489
  %v3067 = vpop.f32.mrf.mxu0
  %v3068 = vadd.f32 %v2667, %v3067
  %3069 = vmatmul.f32.gmra.mxu0 %v492
  %v3070 = vpop.f32.mrf.mxu0
  %v3071 = vadd.f32 %v2670, %v3070
  %3072 = vmatmul.f32.gmra.mxu0 %v495
  %v3073 = vpop.f32.mrf.mxu0
  %v3074 = vadd.f32 %v2673, %v3073
  %3075 = vmatmul.f32.gmra.mxu0 %v498
  %v3076 = vpop.f32.mrf.mxu0
  %v3077 = vadd.f32 %v2676, %v3076
  %3078 = vmatmul.f32.gmra.mxu0 %v501
  %v3079 = vpop.f32.mrf.mxu0
  %v3080 = vadd.f32 %v2679, %v3079
  %3081 = vmatmul.f32.gmra.mxu0 %v504
  %v3082 = vpop.f32.mrf.mxu0
  %v3083 = vadd.f32 %v2682, %v3082
  %3084 = vmatmul.f32.gmra.mxu0 %v507
  %v3085 = vpop.f32.mrf.mxu0
  %v3086 = vadd.f32 %v2685, %v3085
  %3087 = vmatmul.f32.gmra.mxu0 %v510
  %v3088 = vpop.f32.mrf.mxu0
  %v3089 = vadd.f32 %v2688, %v3088
  %3090 = vmatmul.f32.gmra.mxu0 %v513
  %v3091 = vpop.f32.mrf.mxu0
  %v3092 = vadd.f32 %v2691, %v3091
  %3093 = vmatmul.f32.gmra.mxu0 %v516
  %v3094 = vpop.f32.mrf.mxu0
  %v3095 = vadd.f32 %v2694, %v3094
  %3096 = vmatmul.f32.gmra.mxu0 %v519
  %v3097 = vpop.f32.mrf.mxu0
  %v3098 = vadd.f32 %v2697, %v3097
  %3099 = vmatmul.f32.gmra.mxu0 %v522
  %v3100 = vpop.f32.mrf.mxu0
  %v3101 = vadd.f32 %v2700, %v3100
  %3102 = vmatmul.f32.gmra.mxu0 %v525
  %v3103 = vpop.f32.mrf.mxu0
  %v3104 = vadd.f32 %v2703, %v3103
  %3105 = vmatmul.f32.gmra.mxu0 %v528
  %v3106 = vpop.f32.mrf.mxu0
  %v3107 = vadd.f32 %v2706, %v3106
  %3108 = vmatmul.f32.gmra.mxu0 %v531
  %v3109 = vpop.f32.mrf.mxu0
  %v3110 = vadd.f32 %v2709, %v3109
  %3111 = vmatmul.f32.gmra.mxu0 %v534
  %v3112 = vpop.f32.mrf.mxu0
  %v3113 = vadd.f32 %v2712, %v3112
  %3114 = vmatmul.f32.gmra.mxu0 %v537
  %v3115 = vpop.f32.mrf.mxu0
  %v3116 = vadd.f32 %v2715, %v3115
  %3117 = vmatmul.f32.gmra.mxu0 %v540
  %v3118 = vpop.f32.mrf.mxu0
  %v3119 = vadd.f32 %v2718, %v3118
  %3120 = vmatmul.f32.gmra.mxu0 %v543
  %v3121 = vpop.f32.mrf.mxu0
  %v3122 = vadd.f32 %v2721, %v3121
  %3123 = vmatmul.f32.gmra.mxu0 %v546
  %v3124 = vpop.f32.mrf.mxu0
  %v3125 = vadd.f32 %v2724, %v3124
  %3126 = vmatmul.f32.gmra.mxu0 %v549
  %v3127 = vpop.f32.mrf.mxu0
  %v3128 = vadd.f32 %v2727, %v3127
  %3129 = vmatmul.f32.gmra.mxu0 %v552
  %v3130 = vpop.f32.mrf.mxu0
  %v3131 = vadd.f32 %v2730, %v3130
  %3132 = vmatmul.f32.gmra.mxu0 %v555
  %v3133 = vpop.f32.mrf.mxu0
  %v3134 = vadd.f32 %v2733, %v3133
  %3135 = vmatmul.f32.gmra.mxu0 %v558
  %v3136 = vpop.f32.mrf.mxu0
  %v3137 = vadd.f32 %v2736, %v3136
  %3138 = vmatmul.f32.gmra.mxu0 %v561
  %v3139 = vpop.f32.mrf.mxu0
  %v3140 = vadd.f32 %v2739, %v3139
  %3141 = vmatmul.f32.gmra.mxu0 %v564
  %v3142 = vpop.f32.mrf.mxu0
  %v3143 = vadd.f32 %v2742, %v3142
  %3144 = vmatmul.f32.gmra.mxu0 %v567
  %v3145 = vpop.f32.mrf.mxu0
  %v3146 = vadd.f32 %v2745, %v3145
  %3147 = vmatmul.f32.gmra.mxu0 %v570
  %v3148 = vpop.f32.mrf.mxu0
  %v3149 = vadd.f32 %v2748, %v3148
  %3150 = vmatmul.f32.gmra.mxu0 %v573
  %v3151 = vpop.f32.mrf.mxu0
  %v3152 = vadd.f32 %v2751, %v3151
  %3153 = vmatmul.f32.gmra.mxu0 %v576
  %v3154 = vpop.f32.mrf.mxu0
  %v3155 = vadd.f32 %v2754, %v3154
  %3156 = vmatmul.f32.gmra.mxu0 %v579
  %v3157 = vpop.f32.mrf.mxu0
  %v3158 = vadd.f32 %v2757, %v3157
  %3159 = vmatmul.f32.gmra.mxu0 %v582
  %v3160 = vpop.f32.mrf.mxu0
  %v3161 = vadd.f32 %v2760, %v3160
  %3162 = vmatmul.f32.gmra.mxu0 %v585
  %v3163 = vpop.f32.mrf.mxu0
  %v3164 = vadd.f32 %v2763, %v3163
  %3165 = vmatmul.f32.gmra.mxu0 %v588
  %v3166 = vpop.f32.mrf.mxu0
  %v3167 = vadd.f32 %v2766, %v3166
  %3168 = vmatmul.f32.gmra.mxu0 %v591
  %v3169 = vpop.f32.mrf.mxu0
  %v3170 = vadd.f32 %v2769, %v3169
  %3171 = vmatmul.f32.gmra.mxu0 %v594
  %v3172 = vpop.f32.mrf.mxu0
  %v3173 = vadd.f32 %v2772, %v3172
  %3174 = vmatmul.f32.gmra.mxu0 %v597
  %v3175 = vpop.f32.mrf.mxu0
  %v3176 = vadd.f32 %v2775, %v3175
  %3177 = vmatmul.f32.gmra.mxu0 %v600
  %v3178 = vpop.f32.mrf.mxu0
  %v3179 = vadd.f32 %v2778, %v3178
  %3180 = vmatmul.f32.gmra.mxu0 %v603
  %v3181 = vpop.f32.mrf.mxu0
  %v3182 = vadd.f32 %v2781, %v3181
  %3183 = vmatmul.f32.gmra.mxu0 %v606
  %v3184 = vpop.f32.mrf.mxu0
  %v3185 = vadd.f32 %v2784, %v3184
  %3186 = vmatmul.f32.gmra.mxu0 %v609
  %v3187 = vpop.f32.mrf.mxu0
  %v3188 = vadd.f32 %v2787, %v3187
  %3189 = vmatmul.f32.gmra.mxu0 %v612
  %v3190 = vpop.f32.mrf.mxu0
  %v3191 = vadd.f32 %v2790, %v3190
  %3192 = vmatmul.f32.gmra.mxu0 %v615
  %v3193 = vpop.f32.mrf.mxu0
  %v3194 = vadd.f32 %v2793, %v3193
  %3195 = vmatmul.f32.gmra.mxu0 %v618
  %v3196 = vpop.f32.mrf.mxu0
  %v3197 = vadd.f32 %v2796, %v3196
  %3198 = vmatmul.f32.gmra.mxu0 %v621
  %v3199 = vpop.f32.mrf.mxu0
  %v3200 = vadd.f32 %v2799, %v3199
  %3201 = vmatmul.f32.gmra.mxu0 %v624
  %v3202 = vpop.f32.mrf.mxu0
  %v3203 = vadd.f32 %v2802, %v3202
  %3204 = vmatmul.f32.gmra.mxu0 %v627
  %v3205 = vpop.f32.mrf.mxu0
  %v3206 = vadd.f32 %v2805, %v3205
  %3207 = vmatmul.f32.gmra.mxu0 %v630
  %v3208 = vpop.f32.mrf.mxu0
  %v3209 = vadd.f32 %v2808, %v3208
  %3210 = vmatmul.f32.gmra.mxu0 %v633
  %v3211 = vpop.f32.mrf.mxu0
  %v3212 = vadd.f32 %v2811, %v3211
  %3213 = vmatmul.f32.gmra.mxu0 %v636
  %v3214 = vpop.f32.mrf.mxu0
  %v3215 = vadd.f32 %v2814, %v3214
  %3216 = vmatmul.f32.gmra.mxu0 %v639
  %v3217 = vpop.f32.mrf.mxu0
  %v3218 = vadd.f32 %v2817, %v3217
  %3219 = vmatmul.f32.gmra.mxu0 %v642
  %v3220 = vpop.f32.mrf.mxu0
  %v3221 = vadd.f32 %v2820, %v3220
  %3222 = vmatmul.f32.gmra.mxu0 %v645
  %v3223 = vpop.f32.mrf.mxu0
  %v3224 = vadd.f32 %v2823, %v3223
  %3225 = vmatmul.f32.gmra.mxu0 %v648
  %v3226 = vpop.f32.mrf.mxu0
  %v3227 = vadd.f32 %v2826, %v3226
  %3228 = vmatmul.f32.gmra.mxu0 %v651
  %v3229 = vpop.f32.mrf.mxu0
  %v3230 = vadd.f32 %v2829, %v3229
  %3231 = vmatmul.f32.gmra.mxu0 %v654
  %v3232 = vpop.f32.mrf.mxu0
  %v3233 = vadd.f32 %v2832, %v3232
  %3234 = vmatmul.f32.gmra.mxu0 %v657
  %v3235 = vpop.f32.mrf.mxu0
  %v3236 = vadd.f32 %v2835, %v3235
  %3237 = vmatmul.f32.gmra.mxu0 %v660
  %v3238 = vpop.f32.mrf.mxu0
  %v3239 = vadd.f32 %v2838, %v3238
  %3240 = vmatmul.f32.gmra.mxu0 %v663
  %v3241 = vpop.f32.mrf.mxu0
  %v3242 = vadd.f32 %v2841, %v3241
  %3243 = vmatmul.f32.gmra.mxu0 %v666
  %v3244 = vpop.f32.mrf.mxu0
  %v3245 = vadd.f32 %v2844, %v3244
  %3246 = vmatmul.f32.gmra.mxu0 %v669
  %v3247 = vpop.f32.mrf.mxu0
  %v3248 = vadd.f32 %v2847, %v3247
  %3249 = vmatmul.f32.gmra.mxu0 %v672
  %v3250 = vpop.f32.mrf.mxu0
  %v3251 = vadd.f32 %v2850, %v3250
  %3252 = vmatmul.f32.gmra.mxu0 %v675
  %v3253 = vpop.f32.mrf.mxu0
  %v3254 = vadd.f32 %v2853, %v3253
  %3255 = vmatmul.f32.gmra.mxu0 %v678
  %v3256 = vpop.f32.mrf.mxu0
  %v3257 = vadd.f32 %v2856, %v3256
  %3258 = vmatmul.f32.gmra.mxu0 %v681
  %v3259 = vpop.f32.mrf.mxu0
  %v3260 = vadd.f32 %v2859, %v3259
  %3261 = vmatmul.f32.gmra.mxu0 %v684
  %v3262 = vpop.f32.mrf.mxu0
  %v3263 = vadd.f32 %v2862, %v3262
  %3264 = vmatmul.f32.gmra.mxu0 %v687
  %v3265 = vpop.f32.mrf.mxu0
  %v3266 = vadd.f32 %v2865, %v3265
  %3267 = vmatmul.f32.gmra.mxu0 %v690
  %v3268 = vpop.f32.mrf.mxu0
  %v3269 = vadd.f32 %v2868, %v3268
  %3270 = vmatmul.f32.gmra.mxu0 %v693
  %v3271 = vpop.f32.mrf.mxu0
  %v3272 = vadd.f32 %v2871, %v3271
  %3273 = vmatmul.f32.gmra.mxu0 %v696
  %v3274 = vpop.f32.mrf.mxu0
  %v3275 = vadd.f32 %v2874, %v3274
  %3276 = vmatmul.f32.gmra.mxu0 %v699
  %v3277 = vpop.f32.mrf.mxu0
  %v3278 = vadd.f32 %v2877, %v3277
  %3279 = vmatmul.f32.gmra.mxu0 %v702
  %v3280 = vpop.f32.mrf.mxu0
  %v3281 = vadd.f32 %v2880, %v3280
  %3282 = vmatmul.f32.gmra.mxu0 %v705
  %v3283 = vpop.f32.mrf.mxu0
  %v3284 = vadd.f32 %v2883, %v3283
  %3285 = vmatmul.f32.gmra.mxu0 %v708
  %v3286 = vpop.f32.mrf.mxu0
  %v3287 = vadd.f32 %v2886, %v3286
  %3288 = vmatmul.f32.gmra.mxu0 %v711
  %v3289 = vpop.f32.mrf.mxu0
  %v3290 = vadd.f32 %v2889, %v3289
  %3291 = vmatmul.f32.gmra.mxu0 %v714
  %v3292 = vpop.f32.mrf.mxu0
  %v3293 = vadd.f32 %v2892, %v3292
  %3294 = vmatmul.f32.gmra.mxu0 %v717
  %v3295 = vpop.f32.mrf.mxu0
  %v3296 = vadd.f32 %v2895, %v3295
  %3297 = vmatmul.f32.gmra.mxu0 %v720
  %v3298 = vpop.f32.mrf.mxu0
  %v3299 = vadd.f32 %v2898, %v3298
  %3300 = vmatmul.f32.gmra.mxu0 %v723
  %v3301 = vpop.f32.mrf.mxu0
  %v3302 = vadd.f32 %v2901, %v3301
  %3303 = vmatmul.f32.gmra.mxu0 %v726
  %v3304 = vpop.f32.mrf.mxu0
  %v3305 = vadd.f32 %v2904, %v3304
  %3306 = vmatmul.f32.gmra.mxu0 %v729
  %v3307 = vpop.f32.mrf.mxu0
  %v3308 = vadd.f32 %v2907, %v3307
  %3309 = vmatmul.f32.gmra.mxu0 %v732
  %v3310 = vpop.f32.mrf.mxu0
  %v3311 = vadd.f32 %v2910, %v3310
  %3312 = vmatmul.f32.gmra.mxu0 %v735
  %v3313 = vpop.f32.mrf.mxu0
  %v3314 = vadd.f32 %v2913, %v3313
  %3315 = vmatmul.f32.gmra.mxu0 %v738
  %v3316 = vpop.f32.mrf.mxu0
  %v3317 = vadd.f32 %v2916, %v3316
  %3318 = vmatmul.f32.gmra.mxu0 %v741
  %v3319 = vpop.f32.mrf.mxu0
  %v3320 = vadd.f32 %v2919, %v3319
  %3321 = vmatmul.f32.gmra.mxu0 %v744
  %v3322 = vpop.f32.mrf.mxu0
  %v3323 = vadd.f32 %v2922, %v3322
  %3324 = vmatmul.f32.gmra.mxu0 %v747
  %v3325 = vpop.f32.mrf.mxu0
  %v3326 = vadd.f32 %v2925, %v3325
  %3327 = vmatmul.f32.gmra.mxu0 %v750
  %v3328 = vpop.f32.mrf.mxu0
  %v3329 = vadd.f32 %v2928, %v3328
  %3330 = vmatmul.f32.gmra.mxu0 %v753
  %v3331 = vpop.f32.mrf.mxu0
  %v3332 = vadd.f32 %v2931, %v3331
  %3333 = vmatmul.f32.gmra.mxu0 %v756
  %v3334 = vpop.f32.mrf.mxu0
  %v3335 = vadd.f32 %v2934, %v3334
  %3336 = vmatmul.f32.gmra.mxu0 %v759
  %v3337 = vpop.f32.mrf.mxu0
  %v3338 = vadd.f32 %v2937, %v3337
  %3339 = vmatmul.f32.gmra.mxu0 %v762
  %v3340 = vpop.f32.mrf.mxu0
  %v3341 = vadd.f32 %v2940, %v3340
  %3342 = vmatmul.f32.gmra.mxu0 %v765
  %v3343 = vpop.f32.mrf.mxu0
  %v3344 = vadd.f32 %v2943, %v3343
  %3345 = vmatmul.f32.gmra.mxu0 %v768
  %v3346 = vpop.f32.mrf.mxu0
  %v3347 = vadd.f32 %v2946, %v3346
  %3348 = vmatmul.f32.gmra.mxu0 %v771
  %v3349 = vpop.f32.mrf.mxu0
  %v3350 = vadd.f32 %v2949, %v3349
  %3351 = vmatmul.f32.gmra.mxu0 %v774
  %v3352 = vpop.f32.mrf.mxu0
  %v3353 = vadd.f32 %v2952, %v3352
  %3354 = vmatmul.f32.gmra.mxu0 %v777
  %v3355 = vpop.f32.mrf.mxu0
  %v3356 = vadd.f32 %v2955, %v3355
  %3357 = vmatmul.f32.gmra.mxu0 %v780
  %v3358 = vpop.f32.mrf.mxu0
  %v3359 = vadd.f32 %v2958, %v3358
  %3360 = vmatmul.f32.gmra.mxu0 %v783
  %v3361 = vpop.f32.mrf.mxu0
  %v3362 = vadd.f32 %v2961, %v3361
  %3363 = vmatmul.f32.gmra.mxu0 %v786
  %v3364 = vpop.f32.mrf.mxu0
  %v3365 = vadd.f32 %v2964, %v3364
  %3366 = vmatmul.f32.gmra.mxu0 %v789
  %v3367 = vpop.f32.mrf.mxu0
  %v3368 = vadd.f32 %v2967, %v3367
  %3369 = vmatmul.f32.gmra.mxu0 %v792
  %v3370 = vpop.f32.mrf.mxu0
  %v3371 = vadd.f32 %v2970, %v3370
  %3372 = vmatmul.f32.gmra.mxu0 %v795
  %v3373 = vpop.f32.mrf.mxu0
  %v3374 = vadd.f32 %v2973, %v3373
  %3375 = vmatmul.f32.gmra.mxu0 %v798
  %v3376 = vpop.f32.mrf.mxu0
  %v3377 = vadd.f32 %v2976, %v3376
  %3378 = vmatmul.f32.gmra.mxu0 %v801
  %v3379 = vpop.f32.mrf.mxu0
  %v3380 = vadd.f32 %v2979, %v3379
  %3381 = vmatmul.f32.gmra.mxu0 %v804
  %v3382 = vpop.f32.mrf.mxu0
  %v3383 = vadd.f32 %v2982, %v3382
  %3384 = vmatmul.f32.gmra.mxu0 %v807
  %v3385 = vpop.f32.mrf.mxu0
  %v3386 = vadd.f32 %v2985, %v3385
  %3387 = vmatmul.f32.gmra.mxu0 %v810
  %v3388 = vpop.f32.mrf.mxu0
  %v3389 = vadd.f32 %v2988, %v3388
  %3390 = vmatmul.f32.gmra.mxu0 %v813
  %v3391 = vpop.f32.mrf.mxu0
  %v3392 = vadd.f32 %v2991, %v3391
  %3393 = vmatmul.f32.gmra.mxu0 %v816
  %v3394 = vpop.f32.mrf.mxu0
  %v3395 = vadd.f32 %v2994, %v3394
  %3396 = vmatmul.f32.gmra.mxu0 %v819
  %v3397 = vpop.f32.mrf.mxu0
  %v3398 = vadd.f32 %v2997, %v3397
  %3399 = vmatmul.f32.gmra.mxu0 %v822
  %v3400 = vpop.f32.mrf.mxu0
  %v3401 = vadd.f32 %v3000, %v3400
  %3402 = vmatmul.f32.gmra.mxu0 %v825
  %v3403 = vpop.f32.mrf.mxu0
  %v3404 = vadd.f32 %v3003, %v3403
  %3405 = vmatmul.f32.gmra.mxu0 %v828
  %v3406 = vpop.f32.mrf.mxu0
  %v3407 = vadd.f32 %v3006, %v3406
  %3408 = vmatmul.f32.gmra.mxu0 %v831
  %v3409 = vpop.f32.mrf.mxu0
  %v3410 = vadd.f32 %v3009, %v3409
  %3411 = vmatmul.f32.gmra.mxu0 %v834
  %v3412 = vpop.f32.mrf.mxu0
  %v3413 = vadd.f32 %v3012, %v3412
  %3414 = vmatmul.f32.gmra.mxu0 %v837
  %v3415 = vpop.f32.mrf.mxu0
  %v3416 = vadd.f32 %v3015, %v3415
  %3417 = vmatmul.f32.gmra.mxu0 %v840
  %v3418 = vpop.f32.mrf.mxu0
  %v3419 = vadd.f32 %v3018, %v3418
  %3420 = vmatmul.f32.gmra.mxu0 %v843
  %v3421 = vpop.f32.mrf.mxu0
  %v3422 = vadd.f32 %v3021, %v3421
  %3423 = vmatmul.f32.gmra.mxu0 %v846
  %v3424 = vpop.f32.mrf.mxu0
  %v3425 = vadd.f32 %v3024, %v3424
  %3426 = vmatmul.f32.gmra.mxu0 %v849
  %v3427 = vpop.f32.mrf.mxu0
  %v3428 = vadd.f32 %v3027, %v3427
  %3429 = vmatmul.f32.gmra.mxu0 %v852
  %v3430 = vpop.f32.mrf.mxu0
  %v3431 = vadd.f32 %v3030, %v3430
  %3432 = vmatmul.f32.gmra.mxu0 %v855
  %v3433 = vpop.f32.mrf.mxu0
  %v3434 = vadd.f32 %v3033, %v3433
  %3435 = vdwg.mxu0
  %v3436 = vmax.f32 %v3053, 0.0
  %v3437 = vmax.f32 %v3056, 0.0
  %v3438 = vmax.f32 %v3059, 0.0
  %v3439 = vmax.f32 %v3062, 0.0
  %v3440 = vmax.f32 %v3065, 0.0
  %v3441 = vmax.f32 %v3068, 0.0
  %v3442 = vmax.f32 %v3071, 0.0
  %v3443 = vmax.f32 %v3074, 0.0
  %v3444 = vmax.f32 %v3077, 0.0
  %v3445 = vmax.f32 %v3080, 0.0
  %v3446 = vmax.f32 %v3083, 0.0
  %v3447 = vmax.f32 %v3086, 0.0
  %v3448 = vmax.f32 %v3089, 0.0
  %v3449 = vmax.f32 %v3092, 0.0
  %v3450 = vmax.f32 %v3095, 0.0
  %v3451 = vmax.f32 %v3098, 0.0
  %v3452 = vmax.f32 %v3101, 0.0
  %v3453 = vmax.f32 %v3104, 0.0
  %v3454 = vmax.f32 %v3107, 0.0
  %v3455 = vmax.f32 %v3110, 0.0
  %v3456 = vmax.f32 %v3113, 0.0
  %v3457 = vmax.f32 %v3116, 0.0
  %v3458 = vmax.f32 %v3119, 0.0
  %v3459 = vmax.f32 %v3122, 0.0
  %v3460 = vmax.f32 %v3125, 0.0
  %v3461 = vmax.f32 %v3128, 0.0
  %v3462 = vmax.f32 %v3131, 0.0
  %v3463 = vmax.f32 %v3134, 0.0
  %v3464 = vmax.f32 %v3137, 0.0
  %v3465 = vmax.f32 %v3140, 0.0
  %v3466 = vmax.f32 %v3143, 0.0
  %v3467 = vmax.f32 %v3146, 0.0
  %v3468 = vmax.f32 %v3149, 0.0
  %v3469 = vmax.f32 %v3152, 0.0
  %v3470 = vmax.f32 %v3155, 0.0
  %v3471 = vmax.f32 %v3158, 0.0
  %v3472 = vmax.f32 %v3161, 0.0
  %v3473 = vmax.f32 %v3164, 0.0
  %v3474 = vmax.f32 %v3167, 0.0
  %v3475 = vmax.f32 %v3170, 0.0
  %v3476 = vmax.f32 %v3173, 0.0
  %v3477 = vmax.f32 %v3176, 0.0
  %v3478 = vmax.f32 %v3179, 0.0
  %v3479 = vmax.f32 %v3182, 0.0
  %v3480 = vmax.f32 %v3185, 0.0
  %v3481 = vmax.f32 %v3188, 0.0
  %v3482 = vmax.f32 %v3191, 0.0
  %v3483 = vmax.f32 %v3194, 0.0
  %v3484 = vmax.f32 %v3197, 0.0
  %v3485 = vmax.f32 %v3200, 0.0
  %v3486 = vmax.f32 %v3203, 0.0
  %v3487 = vmax.f32 %v3206, 0.0
  %v3488 = vmax.f32 %v3209, 0.0
  %v3489 = vmax.f32 %v3212, 0.0
  %v3490 = vmax.f32 %v3215, 0.0
  %v3491 = vmax.f32 %v3218, 0.0
  %v3492 = vmax.f32 %v3221, 0.0
  %v3493 = vmax.f32 %v3224, 0.0
  %v3494 = vmax.f32 %v3227, 0.0
  %v3495 = vmax.f32 %v3230, 0.0
  %v3496 = vmax.f32 %v3233, 0.0
  %v3497 = vmax.f32 %v3236, 0.0
  %v3498 = vmax.f32 %v3239, 0.0
  %v3499 = vmax.f32 %v3242, 0.0
  %v3500 = vmax.f32 %v3245, 0.0
  %v3501 = vmax.f32 %v3248, 0.0
  %v3502 = vmax.f32 %v3251, 0.0
  %v3503 = vmax.f32 %v3254, 0.0
  %v3504 = vmax.f32 %v3257, 0.0
  %v3505 = vmax.f32 %v3260, 0.0
  %v3506 = vmax.f32 %v3263, 0.0
  %v3507 = vmax.f32 %v3266, 0.0
  %v3508 = vmax.f32 %v3269, 0.0
  %v3509 = vmax.f32 %v3272, 0.0
  %v3510 = vmax.f32 %v3275, 0.0
  %v3511 = vmax.f32 %v3278, 0.0
  %v3512 = vmax.f32 %v3281, 0.0
  %v3513 = vmax.f32 %v3284, 0.0
  %v3514 = vmax.f32 %v3287, 0.0
  %v3515 = vmax.f32 %v3290, 0.0
  %v3516 = vmax.f32 %v3293, 0.0
  %v3517 = vmax.f32 %v3296, 0.0
  %v3518 = vmax.f32 %v3299, 0.0
  %v3519 = vmax.f32 %v3302, 0.0
  %v3520 = vmax.f32 %v3305, 0.0
  %v3521 = vmax.f32 %v3308, 0.0
  %v3522 = vmax.f32 %v3311, 0.0
  %v3523 = vmax.f32 %v3314, 0.0
  %v3524 = vmax.f32 %v3317, 0.0
  %v3525 = vmax.f32 %v3320, 0.0
  %v3526 = vmax.f32 %v3323, 0.0
  %v3527 = vmax.f32 %v3326, 0.0
  %v3528 = vmax.f32 %v3329, 0.0
  %v3529 = vmax.f32 %v3332, 0.0
  %v3530 = vmax.f32 %v3335, 0.0
  %v3531 = vmax.f32 %v3338, 0.0
  %v3532 = vmax.f32 %v3341, 0.0
  %v3533 = vmax.f32 %v3344, 0.0
  %v3534 = vmax.f32 %v3347, 0.0
  %v3535 = vmax.f32 %v3350, 0.0
  %v3536 = vmax.f32 %v3353, 0.0
  %v3537 = vmax.f32 %v3356, 0.0
  %v3538 = vmax.f32 %v3359, 0.0
  %v3539 = vmax.f32 %v3362, 0.0
  %v3540 = vmax.f32 %v3365, 0.0
  %v3541 = vmax.f32 %v3368, 0.0
  %v3542 = vmax.f32 %v3371, 0.0
  %v3543 = vmax.f32 %v3374, 0.0
  %v3544 = vmax.f32 %v3377, 0.0
  %v3545 = vmax.f32 %v3380, 0.0
  %v3546 = vmax.f32 %v3383, 0.0
  %v3547 = vmax.f32 %v3386, 0.0
  %v3548 = vmax.f32 %v3389, 0.0
  %v3549 = vmax.f32 %v3392, 0.0
  %v3550 = vmax.f32 %v3395, 0.0
  %v3551 = vmax.f32 %v3398, 0.0
  %v3552 = vmax.f32 %v3401, 0.0
  %v3553 = vmax.f32 %v3404, 0.0
  %v3554 = vmax.f32 %v3407, 0.0
  %v3555 = vmax.f32 %v3410, 0.0
  %v3556 = vmax.f32 %v3413, 0.0
  %v3557 = vmax.f32 %v3416, 0.0
  %v3558 = vmax.f32 %v3419, 0.0
  %v3559 = vmax.f32 %v3422, 0.0
  %v3560 = vmax.f32 %v3425, 0.0
  %v3561 = vmax.f32 %v3428, 0.0
  %v3562 = vmax.f32 %v3431, 0.0
  %v3563 = vmax.f32 %v3434, 0.0
  %v3564 = vmax.f32 %v2064, %v3436
  %v3565 = vmax.f32 %v2065, %v3437
  %v3566 = vmax.f32 %v2066, %v3438
  %v3567 = vmax.f32 %v2067, %v3439
  %v3568 = vmax.f32 %v2068, %v3440
  %v3569 = vmax.f32 %v2069, %v3441
  %v3570 = vmax.f32 %v2070, %v3442
  %v3571 = vmax.f32 %v2071, %v3443
  %v3572 = vmax.f32 %v2072, %v3444
  %v3573 = vmax.f32 %v2073, %v3445
  %v3574 = vmax.f32 %v2074, %v3446
  %v3575 = vmax.f32 %v2075, %v3447
  %v3576 = vmax.f32 %v2076, %v3448
  %v3577 = vmax.f32 %v2077, %v3449
  %v3578 = vmax.f32 %v2078, %v3450
  %v3579 = vmax.f32 %v2079, %v3451
  %v3580 = vmax.f32 %v2080, %v3452
  %v3581 = vmax.f32 %v2081, %v3453
  %v3582 = vmax.f32 %v2082, %v3454
  %v3583 = vmax.f32 %v2083, %v3455
  %v3584 = vmax.f32 %v2084, %v3456
  %v3585 = vmax.f32 %v2085, %v3457
  %v3586 = vmax.f32 %v2086, %v3458
  %v3587 = vmax.f32 %v2087, %v3459
  %v3588 = vmax.f32 %v2088, %v3460
  %v3589 = vmax.f32 %v2089, %v3461
  %v3590 = vmax.f32 %v2090, %v3462
  %v3591 = vmax.f32 %v2091, %v3463
  %v3592 = vmax.f32 %v2092, %v3464
  %v3593 = vmax.f32 %v2093, %v3465
  %v3594 = vmax.f32 %v2094, %v3466
  %v3595 = vmax.f32 %v2095, %v3467
  %v3596 = vmax.f32 %v2096, %v3468
  %v3597 = vmax.f32 %v2097, %v3469
  %v3598 = vmax.f32 %v2098, %v3470
  %v3599 = vmax.f32 %v2099, %v3471
  %v3600 = vmax.f32 %v2100, %v3472
  %v3601 = vmax.f32 %v2101, %v3473
  %v3602 = vmax.f32 %v2102, %v3474
  %v3603 = vmax.f32 %v2103, %v3475
  %v3604 = vmax.f32 %v2104, %v3476
  %v3605 = vmax.f32 %v2105, %v3477
  %v3606 = vmax.f32 %v2106, %v3478
  %v3607 = vmax.f32 %v2107, %v3479
  %v3608 = vmax.f32 %v2108, %v3480
  %v3609 = vmax.f32 %v2109, %v3481
  %v3610 = vmax.f32 %v2110, %v3482
  %v3611 = vmax.f32 %v2111, %v3483
  %v3612 = vmax.f32 %v2112, %v3484
  %v3613 = vmax.f32 %v2113, %v3485
  %v3614 = vmax.f32 %v2114, %v3486
  %v3615 = vmax.f32 %v2115, %v3487
  %v3616 = vmax.f32 %v2116, %v3488
  %v3617 = vmax.f32 %v2117, %v3489
  %v3618 = vmax.f32 %v2118, %v3490
  %v3619 = vmax.f32 %v2119, %v3491
  %v3620 = vmax.f32 %v2120, %v3492
  %v3621 = vmax.f32 %v2121, %v3493
  %v3622 = vmax.f32 %v2122, %v3494
  %v3623 = vmax.f32 %v2123, %v3495
  %v3624 = vmax.f32 %v2124, %v3496
  %v3625 = vmax.f32 %v2125, %v3497
  %v3626 = vmax.f32 %v2126, %v3498
  %v3627 = vmax.f32 %v2127, %v3499
  %v3628 = vmax.f32 %v2128, %v3500
  %v3629 = vmax.f32 %v2129, %v3501
  %v3630 = vmax.f32 %v2130, %v3502
  %v3631 = vmax.f32 %v2131, %v3503
  %v3632 = vmax.f32 %v2132, %v3504
  %v3633 = vmax.f32 %v2133, %v3505
  %v3634 = vmax.f32 %v2134, %v3506
  %v3635 = vmax.f32 %v2135, %v3507
  %v3636 = vmax.f32 %v2136, %v3508
  %v3637 = vmax.f32 %v2137, %v3509
  %v3638 = vmax.f32 %v2138, %v3510
  %v3639 = vmax.f32 %v2139, %v3511
  %v3640 = vmax.f32 %v2140, %v3512
  %v3641 = vmax.f32 %v2141, %v3513
  %v3642 = vmax.f32 %v2142, %v3514
  %v3643 = vmax.f32 %v2143, %v3515
  %v3644 = vmax.f32 %v2144, %v3516
  %v3645 = vmax.f32 %v2145, %v3517
  %v3646 = vmax.f32 %v2146, %v3518
  %v3647 = vmax.f32 %v2147, %v3519
  %v3648 = vmax.f32 %v2148, %v3520
  %v3649 = vmax.f32 %v2149, %v3521
  %v3650 = vmax.f32 %v2150, %v3522
  %v3651 = vmax.f32 %v2151, %v3523
  %v3652 = vmax.f32 %v2152, %v3524
  %v3653 = vmax.f32 %v2153, %v3525
  %v3654 = vmax.f32 %v2154, %v3526
  %v3655 = vmax.f32 %v2155, %v3527
  %v3656 = vmax.f32 %v2156, %v3528
  %v3657 = vmax.f32 %v2157, %v3529
  %v3658 = vmax.f32 %v2158, %v3530
  %v3659 = vmax.f32 %v2159, %v3531
  %v3660 = vmax.f32 %v2160, %v3532
  %v3661 = vmax.f32 %v2161, %v3533
  %v3662 = vmax.f32 %v2162, %v3534
  %v3663 = vmax.f32 %v2163, %v3535
  %v3664 = vmax.f32 %v2164, %v3536
  %v3665 = vmax.f32 %v2165, %v3537
  %v3666 = vmax.f32 %v2166, %v3538
  %v3667 = vmax.f32 %v2167, %v3539
  %v3668 = vmax.f32 %v2168, %v3540
  %v3669 = vmax.f32 %v2169, %v3541
  %v3670 = vmax.f32 %v2170, %v3542
  %v3671 = vmax.f32 %v2171, %v3543
  %v3672 = vmax.f32 %v2172, %v3544
  %v3673 = vmax.f32 %v2173, %v3545
  %v3674 = vmax.f32 %v2174, %v3546
  %v3675 = vmax.f32 %v2175, %v3547
  %v3676 = vmax.f32 %v2176, %v3548
  %v3677 = vmax.f32 %v2177, %v3549
  %v3678 = vmax.f32 %v2178, %v3550
  %v3679 = vmax.f32 %v2179, %v3551
  %v3680 = vmax.f32 %v2180, %v3552
  %v3681 = vmax.f32 %v2181, %v3553
  %v3682 = vmax.f32 %v2182, %v3554
  %v3683 = vmax.f32 %v2183, %v3555
  %v3684 = vmax.f32 %v2184, %v3556
  %v3685 = vmax.f32 %v2185, %v3557
  %v3686 = vmax.f32 %v2186, %v3558
  %v3687 = vmax.f32 %v2187, %v3559
  %v3688 = vmax.f32 %v2188, %v3560
  %v3689 = vmax.f32 %v2189, %v3561
  %v3690 = vmax.f32 %v2190, %v3562
  %v3691 = vmax.f32 %v2191, %v3563
  %v3692 = vld [vmem:[%s4] sm:$0xff]
  %v3693 = vld [vmem:[%s4 + $0x8] sm:$0xff]
  %v3694 = vld [vmem:[%s4 + $0x10] sm:$0xff]
  %v3695 = vld [vmem:[%s4 + $0x18] sm:$0xff]
  %v3696 = vld [vmem:[%s4 + $0x20] sm:$0xff]
  %v3697 = vld [vmem:[%s4 + $0x28] sm:$0xff]
  %v3698 = vld [vmem:[%s4 + $0x30] sm:$0xff]
  %v3699 = vld [vmem:[%s4 + $0x38] sm:$0xff]
  %v3700 = vld [vmem:[%s4 + $0x40] sm:$0xff]
  %v3701 = vld [vmem:[%s4 + $0x48] sm:$0xff]
  %v3702 = vld [vmem:[%s4 + $0x50] sm:$0xff]
  %v3703 = vld [vmem:[%s4 + $0x58] sm:$0xff]
  %v3704 = vld [vmem:[%s4 + $0x60] sm:$0xff]
  %v3705 = vld [vmem:[%s6] sm:$0x1]
  %v3707 = vperm.slane %v3705, 0
  %vm3709 = vcmask 850944
  %v3711 = vsel %vm3709, %v3564, 0
  %v3714 = vsel %vm3709, %v3565, 0
  %v3717 = vsel %vm3709, %v3566, 0
  %v3720 = vsel %vm3709, %v3567, 0
  %v3723 = vsel %vm3709, %v3568, 0
  %v3726 = vsel %vm3709, %v3569, 0
  %v3729 = vsel %vm3709, %v3570, 0
  %v3732 = vsel %vm3709, %v3571, 0
  %v3735 = vsel %vm3709, %v3572, 0
  %v3738 = vsel %vm3709, %v3573, 0
  %v3741 = vsel %vm3709, %v3574, 0
  %v3744 = vsel %vm3709, %v3575, 0
  %v3747 = vsel %vm3709, %v3576, 0
  %v3750 = vsel %vm3709, %v3577, 0
  %v3753 = vsel %vm3709, %v3578, 0
  %v3756 = vsel %vm3709, %v3579, 0
  %v3759 = vsel %vm3709, %v3580, 0
  %v3762 = vsel %vm3709, %v3581, 0
  %v3765 = vsel %vm3709, %v3582, 0
  %v3768 = vsel %vm3709, %v3583, 0
  %v3771 = vsel %vm3709, %v3584, 0
  %v3774 = vsel %vm3709, %v3585, 0
  %v3777 = vsel %vm3709, %v3586, 0
  %v3780 = vsel %vm3709, %v3587, 0
  %v3783 = vsel %vm3709, %v3588, 0
  %v3786 = vsel %vm3709, %v3589, 0
  %v3789 = vsel %vm3709, %v3590, 0
  %v3792 = vsel %vm3709, %v3591, 0
  %v3795 = vsel %vm3709, %v3592, 0
  %v3798 = vsel %vm3709, %v3593, 0
  %v3801 = vsel %vm3709, %v3594, 0
  %v3804 = vsel %vm3709, %v3595, 0
  %v3807 = vsel %vm3709, %v3596, 0
  %v3810 = vsel %vm3709, %v3597, 0
  %v3813 = vsel %vm3709, %v3598, 0
  %v3816 = vsel %vm3709, %v3599, 0
  %v3819 = vsel %vm3709, %v3600, 0
  %v3822 = vsel %vm3709, %v3601, 0
  %v3825 = vsel %vm3709, %v3602, 0
  %v3828 = vsel %vm3709, %v3603, 0
  %v3831 = vsel %vm3709, %v3604, 0
  %v3834 = vsel %vm3709, %v3605, 0
  %v3837 = vsel %vm3709, %v3606, 0
  %v3840 = vsel %vm3709, %v3607, 0
  %v3843 = vsel %vm3709, %v3608, 0
  %v3846 = vsel %vm3709, %v3609, 0
  %v3849 = vsel %vm3709, %v3610, 0
  %v3852 = vsel %vm3709, %v3611, 0
  %v3855 = vsel %vm3709, %v3612, 0
  %v3858 = vsel %vm3709, %v3613, 0
  %v3861 = vsel %vm3709, %v3614, 0
  %v3864 = vsel %vm3709, %v3615, 0
  %v3867 = vsel %vm3709, %v3616, 0
  %v3870 = vsel %vm3709, %v3617, 0
  %v3873 = vsel %vm3709, %v3618, 0
  %v3876 = vsel %vm3709, %v3619, 0
  %v3879 = vsel %vm3709, %v3620, 0
  %v3882 = vsel %vm3709, %v3621, 0
  %v3885 = vsel %vm3709, %v3622, 0
  %v3888 = vsel %vm3709, %v3623, 0
  %v3891 = vsel %vm3709, %v3624, 0
  %v3894 = vsel %vm3709, %v3625, 0
  %v3897 = vsel %vm3709, %v3626, 0
  %v3900 = vsel %vm3709, %v3627, 0
  %v3903 = vsel %vm3709, %v3628, 0
  %v3906 = vsel %vm3709, %v3629, 0
  %v3909 = vsel %vm3709, %v3630, 0
  %v3912 = vsel %vm3709, %v3631, 0
  %v3915 = vsel %vm3709, %v3632, 0
  %v3918 = vsel %vm3709, %v3633, 0
  %v3921 = vsel %vm3709, %v3634, 0
  %v3924 = vsel %vm3709, %v3635, 0
  %v3927 = vsel %vm3709, %v3636, 0
  %v3930 = vsel %vm3709, %v3637, 0
  %v3933 = vsel %vm3709, %v3638, 0
  %v3936 = vsel %vm3709, %v3639, 0
  %v3939 = vsel %vm3709, %v3640, 0
  %v3942 = vsel %vm3709, %v3641, 0
  %v3945 = vsel %vm3709, %v3642, 0
  %v3948 = vsel %vm3709, %v3643, 0
  %v3951 = vsel %vm3709, %v3644, 0
  %v3954 = vsel %vm3709, %v3645, 0
  %v3957 = vsel %vm3709, %v3646, 0
  %v3960 = vsel %vm3709, %v3647, 0
  %v3963 = vsel %vm3709, %v3648, 0
  %v3966 = vsel %vm3709, %v3649, 0
  %v3969 = vsel %vm3709, %v3650, 0
  %v3972 = vsel %vm3709, %v3651, 0
  %v3975 = vsel %vm3709, %v3652, 0
  %v3978 = vsel %vm3709, %v3653, 0
  %v3981 = vsel %vm3709, %v3654, 0
  %v3984 = vsel %vm3709, %v3655, 0
  %v3987 = vsel %vm3709, %v3656, 0
  %v3990 = vsel %vm3709, %v3657, 0
  %v3993 = vsel %vm3709, %v3658, 0
  %v3996 = vsel %vm3709, %v3659, 0
  %v3999 = vsel %vm3709, %v3660, 0
  %v4002 = vsel %vm3709, %v3661, 0
  %v4005 = vsel %vm3709, %v3662, 0
  %v4008 = vsel %vm3709, %v3663, 0
  %v4011 = vsel %vm3709, %v3664, 0
  %v4014 = vsel %vm3709, %v3665, 0
  %v4017 = vsel %vm3709, %v3666, 0
  %v4020 = vsel %vm3709, %v3667, 0
  %v4023 = vsel %vm3709, %v3668, 0
  %v4026 = vsel %vm3709, %v3669, 0
  %v4029 = vsel %vm3709, %v3670, 0
  %v4032 = vsel %vm3709, %v3671, 0
  %v4035 = vsel %vm3709, %v3672, 0
  %v4038 = vsel %vm3709, %v3673, 0
  %v4041 = vsel %vm3709, %v3674, 0
  %v4044 = vsel %vm3709, %v3675, 0
  %v4047 = vsel %vm3709, %v3676, 0
  %v4050 = vsel %vm3709, %v3677, 0
  %v4053 = vsel %vm3709, %v3678, 0
  %v4056 = vsel %vm3709, %v3679, 0
  %v4059 = vsel %vm3709, %v3680, 0
  %v4062 = vsel %vm3709, %v3681, 0
  %v4065 = vsel %vm3709, %v3682, 0
  %v4068 = vsel %vm3709, %v3683, 0
  %v4071 = vsel %vm3709, %v3684, 0
  %v4074 = vsel %vm3709, %v3685, 0
  %v4077 = vsel %vm3709, %v3686, 0
  %v4080 = vsel %vm3709, %v3687, 0
  %v4083 = vsel %vm3709, %v3688, 0
  %v4086 = vsel %vm3709, %v3689, 0
  %v4089 = vsel %vm3709, %v3690, 0
  %v4092 = vsel %vm3709, %v3691, 0
  %4094 = vmatpush.msra.mxu0 0.0
  %4095 = vmatpush.msra.mxu0 0.0
  %4096 = vmatpush.msra.mxu0 0.0
  %4097 = vmatpush.msra.mxu0 %v3704
  %4098 = vmatpush.msra.mxu0 %v3703
  %4099 = vmatpush.msra.mxu0 %v3702
  %4100 = vmatpush.msra.mxu0 %v3701
  %4101 = vmatpush.msra.mxu0 %v3700
  %4102 = vmatpush.msra.mxu0 %v3699
  %4103 = vmatpush.msra.mxu0 %v3698
  %4104 = vmatpush.msra.mxu0 %v3697
  %4105 = vmatpush.msra.mxu0 %v3696
  %4106 = vmatpush.msra.mxu0 %v3695
  %4107 = vmatpush.msra.mxu0 %v3694
  %4108 = vmatpush.msra.mxu0 %v3693
  %4109 = vmatpush.msra.mxu0 %v3692
  %4110 = vmatmul.f32.gmra.mxu0 %v3711
  %v4111 = vpop.f32.mrf.mxu0
  %v4112 = vadd.f32 %v3707, %v4111
  %4113 = vmatmul.f32.gmra.mxu0 %v3714
  %v4114 = vpop.f32.mrf.mxu0
  %v4115 = vadd.f32 %v3707, %v4114
  %4116 = vmatmul.f32.gmra.mxu0 %v3717
  %v4117 = vpop.f32.mrf.mxu0
  %v4118 = vadd.f32 %v3707, %v4117
  %4119 = vmatmul.f32.gmra.mxu0 %v3720
  %v4120 = vpop.f32.mrf.mxu0
  %v4121 = vadd.f32 %v3707, %v4120
  %4122 = vmatmul.f32.gmra.mxu0 %v3723
  %v4123 = vpop.f32.mrf.mxu0
  %v4124 = vadd.f32 %v3707, %v4123
  %4125 = vmatmul.f32.gmra.mxu0 %v3726
  %v4126 = vpop.f32.mrf.mxu0
  %v4127 = vadd.f32 %v3707, %v4126
  %4128 = vmatmul.f32.gmra.mxu0 %v3729
  %v4129 = vpop.f32.mrf.mxu0
  %v4130 = vadd.f32 %v3707, %v4129
  %4131 = vmatmul.f32.gmra.mxu0 %v3732
  %v4132 = vpop.f32.mrf.mxu0
  %v4133 = vadd.f32 %v3707, %v4132
  %4134 = vmatmul.f32.gmra.mxu0 %v3735
  %v4135 = vpop.f32.mrf.mxu0
  %v4136 = vadd.f32 %v3707, %v4135
  %4137 = vmatmul.f32.gmra.mxu0 %v3738
  %v4138 = vpop.f32.mrf.mxu0
  %v4139 = vadd.f32 %v3707, %v4138
  %4140 = vmatmul.f32.gmra.mxu0 %v3741
  %v4141 = vpop.f32.mrf.mxu0
  %v4142 = vadd.f32 %v3707, %v4141
  %4143 = vmatmul.f32.gmra.mxu0 %v3744
  %v4144 = vpop.f32.mrf.mxu0
  %v4145 = vadd.f32 %v3707, %v4144
  %4146 = vmatmul.f32.gmra.mxu0 %v3747
  %v4147 = vpop.f32.mrf.mxu0
  %v4148 = vadd.f32 %v3707, %v4147
  %4149 = vmatmul.f32.gmra.mxu0 %v3750
  %v4150 = vpop.f32.mrf.mxu0
  %v4151 = vadd.f32 %v3707, %v4150
  %4152 = vmatmul.f32.gmra.mxu0 %v3753
  %v4153 = vpop.f32.mrf.mxu0
  %v4154 = vadd.f32 %v3707, %v4153
  %4155 = vmatmul.f32.gmra.mxu0 %v3756
  %v4156 = vpop.f32.mrf.mxu0
  %v4157 = vadd.f32 %v3707, %v4156
  %4158 = vmatmul.f32.gmra.mxu0 %v3759
  %v4159 = vpop.f32.mrf.mxu0
  %v4160 = vadd.f32 %v3707, %v4159
  %4161 = vmatmul.f32.gmra.mxu0 %v3762
  %v4162 = vpop.f32.mrf.mxu0
  %v4163 = vadd.f32 %v3707, %v4162
  %4164 = vmatmul.f32.gmra.mxu0 %v3765
  %v4165 = vpop.f32.mrf.mxu0
  %v4166 = vadd.f32 %v3707, %v4165
  %4167 = vmatmul.f32.gmra.mxu0 %v3768
  %v4168 = vpop.f32.mrf.mxu0
  %v4169 = vadd.f32 %v3707, %v4168
  %4170 = vmatmul.f32.gmra.mxu0 %v3771
  %v4171 = vpop.f32.mrf.mxu0
  %v4172 = vadd.f32 %v3707, %v4171
  %4173 = vmatmul.f32.gmra.mxu0 %v3774
  %v4174 = vpop.f32.mrf.mxu0
  %v4175 = vadd.f32 %v3707, %v4174
  %4176 = vmatmul.f32.gmra.mxu0 %v3777
  %v4177 = vpop.f32.mrf.mxu0
  %v4178 = vadd.f32 %v3707, %v4177
  %4179 = vmatmul.f32.gmra.mxu0 %v3780
  %v4180 = vpop.f32.mrf.mxu0
  %v4181 = vadd.f32 %v3707, %v4180
  %4182 = vmatmul.f32.gmra.mxu0 %v3783
  %v4183 = vpop.f32.mrf.mxu0
  %v4184 = vadd.f32 %v3707, %v4183
  %4185 = vmatmul.f32.gmra.mxu0 %v3786
  %v4186 = vpop.f32.mrf.mxu0
  %v4187 = vadd.f32 %v3707, %v4186
  %4188 = vmatmul.f32.gmra.mxu0 %v3789
  %v4189 = vpop.f32.mrf.mxu0
  %v4190 = vadd.f32 %v3707, %v4189
  %4191 = vmatmul.f32.gmra.mxu0 %v3792
  %v4192 = vpop.f32.mrf.mxu0
  %v4193 = vadd.f32 %v3707, %v4192
  %4194 = vmatmul.f32.gmra.mxu0 %v3795
  %v4195 = vpop.f32.mrf.mxu0
  %v4196 = vadd.f32 %v3707, %v4195
  %4197 = vmatmul.f32.gmra.mxu0 %v3798
  %v4198 = vpop.f32.mrf.mxu0
  %v4199 = vadd.f32 %v3707, %v4198
  %4200 = vmatmul.f32.gmra.mxu0 %v3801
  %v4201 = vpop.f32.mrf.mxu0
  %v4202 = vadd.f32 %v3707, %v4201
  %4203 = vmatmul.f32.gmra.mxu0 %v3804
  %v4204 = vpop.f32.mrf.mxu0
  %v4205 = vadd.f32 %v3707, %v4204
  %4206 = vmatmul.f32.gmra.mxu0 %v3807
  %v4207 = vpop.f32.mrf.mxu0
  %v4208 = vadd.f32 %v3707, %v4207
  %4209 = vmatmul.f32.gmra.mxu0 %v3810
  %v4210 = vpop.f32.mrf.mxu0
  %v4211 = vadd.f32 %v3707, %v4210
  %4212 = vmatmul.f32.gmra.mxu0 %v3813
  %v4213 = vpop.f32.mrf.mxu0
  %v4214 = vadd.f32 %v3707, %v4213
  %4215 = vmatmul.f32.gmra.mxu0 %v3816
  %v4216 = vpop.f32.mrf.mxu0
  %v4217 = vadd.f32 %v3707, %v4216
  %4218 = vmatmul.f32.gmra.mxu0 %v3819
  %v4219 = vpop.f32.mrf.mxu0
  %v4220 = vadd.f32 %v3707, %v4219
  %4221 = vmatmul.f32.gmra.mxu0 %v3822
  %v4222 = vpop.f32.mrf.mxu0
  %v4223 = vadd.f32 %v3707, %v4222
  %4224 = vmatmul.f32.gmra.mxu0 %v3825
  %v4225 = vpop.f32.mrf.mxu0
  %v4226 = vadd.f32 %v3707, %v4225
  %4227 = vmatmul.f32.gmra.mxu0 %v3828
  %v4228 = vpop.f32.mrf.mxu0
  %v4229 = vadd.f32 %v3707, %v4228
  %4230 = vmatmul.f32.gmra.mxu0 %v3831
  %v4231 = vpop.f32.mrf.mxu0
  %v4232 = vadd.f32 %v3707, %v4231
  %4233 = vmatmul.f32.gmra.mxu0 %v3834
  %v4234 = vpop.f32.mrf.mxu0
  %v4235 = vadd.f32 %v3707, %v4234
  %4236 = vmatmul.f32.gmra.mxu0 %v3837
  %v4237 = vpop.f32.mrf.mxu0
  %v4238 = vadd.f32 %v3707, %v4237
  %4239 = vmatmul.f32.gmra.mxu0 %v3840
  %v4240 = vpop.f32.mrf.mxu0
  %v4241 = vadd.f32 %v3707, %v4240
  %4242 = vmatmul.f32.gmra.mxu0 %v3843
  %v4243 = vpop.f32.mrf.mxu0
  %v4244 = vadd.f32 %v3707, %v4243
  %4245 = vmatmul.f32.gmra.mxu0 %v3846
  %v4246 = vpop.f32.mrf.mxu0
  %v4247 = vadd.f32 %v3707, %v4246
  %4248 = vmatmul.f32.gmra.mxu0 %v3849
  %v4249 = vpop.f32.mrf.mxu0
  %v4250 = vadd.f32 %v3707, %v4249
  %4251 = vmatmul.f32.gmra.mxu0 %v3852
  %v4252 = vpop.f32.mrf.mxu0
  %v4253 = vadd.f32 %v3707, %v4252
  %4254 = vmatmul.f32.gmra.mxu0 %v3855
  %v4255 = vpop.f32.mrf.mxu0
  %v4256 = vadd.f32 %v3707, %v4255
  %4257 = vmatmul.f32.gmra.mxu0 %v3858
  %v4258 = vpop.f32.mrf.mxu0
  %v4259 = vadd.f32 %v3707, %v4258
  %4260 = vmatmul.f32.gmra.mxu0 %v3861
  %v4261 = vpop.f32.mrf.mxu0
  %v4262 = vadd.f32 %v3707, %v4261
  %4263 = vmatmul.f32.gmra.mxu0 %v3864
  %v4264 = vpop.f32.mrf.mxu0
  %v4265 = vadd.f32 %v3707, %v4264
  %4266 = vmatmul.f32.gmra.mxu0 %v3867
  %v4267 = vpop.f32.mrf.mxu0
  %v4268 = vadd.f32 %v3707, %v4267
  %4269 = vmatmul.f32.gmra.mxu0 %v3870
  %v4270 = vpop.f32.mrf.mxu0
  %v4271 = vadd.f32 %v3707, %v4270
  %4272 = vmatmul.f32.gmra.mxu0 %v3873
  %v4273 = vpop.f32.mrf.mxu0
  %v4274 = vadd.f32 %v3707, %v4273
  %4275 = vmatmul.f32.gmra.mxu0 %v3876
  %v4276 = vpop.f32.mrf.mxu0
  %v4277 = vadd.f32 %v3707, %v4276
  %4278 = vmatmul.f32.gmra.mxu0 %v3879
  %v4279 = vpop.f32.mrf.mxu0
  %v4280 = vadd.f32 %v3707, %v4279
  %4281 = vmatmul.f32.gmra.mxu0 %v3882
  %v4282 = vpop.f32.mrf.mxu0
  %v4283 = vadd.f32 %v3707, %v4282
  %4284 = vmatmul.f32.gmra.mxu0 %v3885
  %v4285 = vpop.f32.mrf.mxu0
  %v4286 = vadd.f32 %v3707, %v4285
  %4287 = vmatmul.f32.gmra.mxu0 %v3888
  %v4288 = vpop.f32.mrf.mxu0
  %v4289 = vadd.f32 %v3707, %v4288
  %4290 = vmatmul.f32.gmra.mxu0 %v3891
  %v4291 = vpop.f32.mrf.mxu0
  %v4292 = vadd.f32 %v3707, %v4291
  %4293 = vmatmul.f32.gmra.mxu0 %v3894
  %v4294 = vpop.f32.mrf.mxu0
  %v4295 = vadd.f32 %v3707, %v4294
  %4296 = vmatmul.f32.gmra.mxu0 %v3897
  %v4297 = vpop.f32.mrf.mxu0
  %v4298 = vadd.f32 %v3707, %v4297
  %4299 = vmatmul.f32.gmra.mxu0 %v3900
  %v4300 = vpop.f32.mrf.mxu0
  %v4301 = vadd.f32 %v3707, %v4300
  %4302 = vmatmul.f32.gmra.mxu0 %v3903
  %v4303 = vpop.f32.mrf.mxu0
  %v4304 = vadd.f32 %v3707, %v4303
  %4305 = vmatmul.f32.gmra.mxu0 %v3906
  %v4306 = vpop.f32.mrf.mxu0
  %v4307 = vadd.f32 %v3707, %v4306
  %4308 = vmatmul.f32.gmra.mxu0 %v3909
  %v4309 = vpop.f32.mrf.mxu0
  %v4310 = vadd.f32 %v3707, %v4309
  %4311 = vmatmul.f32.gmra.mxu0 %v3912
  %v4312 = vpop.f32.mrf.mxu0
  %v4313 = vadd.f32 %v3707, %v4312
  %4314 = vmatmul.f32.gmra.mxu0 %v3915
  %v4315 = vpop.f32.mrf.mxu0
  %v4316 = vadd.f32 %v3707, %v4315
  %4317 = vmatmul.f32.gmra.mxu0 %v3918
  %v4318 = vpop.f32.mrf.mxu0
  %v4319 = vadd.f32 %v3707, %v4318
  %4320 = vmatmul.f32.gmra.mxu0 %v3921
  %v4321 = vpop.f32.mrf.mxu0
  %v4322 = vadd.f32 %v3707, %v4321
  %4323 = vmatmul.f32.gmra.mxu0 %v3924
  %v4324 = vpop.f32.mrf.mxu0
  %v4325 = vadd.f32 %v3707, %v4324
  %4326 = vmatmul.f32.gmra.mxu0 %v3927
  %v4327 = vpop.f32.mrf.mxu0
  %v4328 = vadd.f32 %v3707, %v4327
  %4329 = vmatmul.f32.gmra.mxu0 %v3930
  %v4330 = vpop.f32.mrf.mxu0
  %v4331 = vadd.f32 %v3707, %v4330
  %4332 = vmatmul.f32.gmra.mxu0 %v3933
  %v4333 = vpop.f32.mrf.mxu0
  %v4334 = vadd.f32 %v3707, %v4333
  %4335 = vmatmul.f32.gmra.mxu0 %v3936
  %v4336 = vpop.f32.mrf.mxu0
  %v4337 = vadd.f32 %v3707, %v4336
  %4338 = vmatmul.f32.gmra.mxu0 %v3939
  %v4339 = vpop.f32.mrf.mxu0
  %v4340 = vadd.f32 %v3707, %v4339
  %4341 = vmatmul.f32.gmra.mxu0 %v3942
  %v4342 = vpop.f32.mrf.mxu0
  %v4343 = vadd.f32 %v3707, %v4342
  %4344 = vmatmul.f32.gmra.mxu0 %v3945
  %v4345 = vpop.f32.mrf.mxu0
  %v4346 = vadd.f32 %v3707, %v4345
  %4347 = vmatmul.f32.gmra.mxu0 %v3948
  %v4348 = vpop.f32.mrf.mxu0
  %v4349 = vadd.f32 %v3707, %v4348
  %4350 = vmatmul.f32.gmra.mxu0 %v3951
  %v4351 = vpop.f32.mrf.mxu0
  %v4352 = vadd.f32 %v3707, %v4351
  %4353 = vmatmul.f32.gmra.mxu0 %v3954
  %v4354 = vpop.f32.mrf.mxu0
  %v4355 = vadd.f32 %v3707, %v4354
  %4356 = vmatmul.f32.gmra.mxu0 %v3957
  %v4357 = vpop.f32.mrf.mxu0
  %v4358 = vadd.f32 %v3707, %v4357
  %4359 = vmatmul.f32.gmra.mxu0 %v3960
  %v4360 = vpop.f32.mrf.mxu0
  %v4361 = vadd.f32 %v3707, %v4360
  %4362 = vmatmul.f32.gmra.mxu0 %v3963
  %v4363 = vpop.f32.mrf.mxu0
  %v4364 = vadd.f32 %v3707, %v4363
  %4365 = vmatmul.f32.gmra.mxu0 %v3966
  %v4366 = vpop.f32.mrf.mxu0
  %v4367 = vadd.f32 %v3707, %v4366
  %4368 = vmatmul.f32.gmra.mxu0 %v3969
  %v4369 = vpop.f32.mrf.mxu0
  %v4370 = vadd.f32 %v3707, %v4369
  %4371 = vmatmul.f32.gmra.mxu0 %v3972
  %v4372 = vpop.f32.mrf.mxu0
  %v4373 = vadd.f32 %v3707, %v4372
  %4374 = vmatmul.f32.gmra.mxu0 %v3975
  %v4375 = vpop.f32.mrf.mxu0
  %v4376 = vadd.f32 %v3707, %v4375
  %4377 = vmatmul.f32.gmra.mxu0 %v3978
  %v4378 = vpop.f32.mrf.mxu0
  %v4379 = vadd.f32 %v3707, %v4378
  %4380 = vmatmul.f32.gmra.mxu0 %v3981
  %v4381 = vpop.f32.mrf.mxu0
  %v4382 = vadd.f32 %v3707, %v4381
  %4383 = vmatmul.f32.gmra.mxu0 %v3984
  %v4384 = vpop.f32.mrf.mxu0
  %v4385 = vadd.f32 %v3707, %v4384
  %4386 = vmatmul.f32.gmra.mxu0 %v3987
  %v4387 = vpop.f32.mrf.mxu0
  %v4388 = vadd.f32 %v3707, %v4387
  %4389 = vmatmul.f32.gmra.mxu0 %v3990
  %v4390 = vpop.f32.mrf.mxu0
  %v4391 = vadd.f32 %v3707, %v4390
  %4392 = vmatmul.f32.gmra.mxu0 %v3993
  %v4393 = vpop.f32.mrf.mxu0
  %v4394 = vadd.f32 %v3707, %v4393
  %4395 = vmatmul.f32.gmra.mxu0 %v3996
  %v4396 = vpop.f32.mrf.mxu0
  %v4397 = vadd.f32 %v3707, %v4396
  %4398 = vmatmul.f32.gmra.mxu0 %v3999
  %v4399 = vpop.f32.mrf.mxu0
  %v4400 = vadd.f32 %v3707, %v4399
  %4401 = vmatmul.f32.gmra.mxu0 %v4002
  %v4402 = vpop.f32.mrf.mxu0
  %v4403 = vadd.f32 %v3707, %v4402
  %4404 = vmatmul.f32.gmra.mxu0 %v4005
  %v4405 = vpop.f32.mrf.mxu0
  %v4406 = vadd.f32 %v3707, %v4405
  %4407 = vmatmul.f32.gmra.mxu0 %v4008
  %v4408 = vpop.f32.mrf.mxu0
  %v4409 = vadd.f32 %v3707, %v4408
  %4410 = vmatmul.f32.gmra.mxu0 %v4011
  %v4411 = vpop.f32.mrf.mxu0
  %v4412 = vadd.f32 %v3707, %v4411
  %4413 = vmatmul.f32.gmra.mxu0 %v4014
  %v4414 = vpop.f32.mrf.mxu0
  %v4415 = vadd.f32 %v3707, %v4414
  %4416 = vmatmul.f32.gmra.mxu0 %v4017
  %v4417 = vpop.f32.mrf.mxu0
  %v4418 = vadd.f32 %v3707, %v4417
  %4419 = vmatmul.f32.gmra.mxu0 %v4020
  %v4420 = vpop.f32.mrf.mxu0
  %v4421 = vadd.f32 %v3707, %v4420
  %4422 = vmatmul.f32.gmra.mxu0 %v4023
  %v4423 = vpop.f32.mrf.mxu0
  %v4424 = vadd.f32 %v3707, %v4423
  %4425 = vmatmul.f32.gmra.mxu0 %v4026
  %v4426 = vpop.f32.mrf.mxu0
  %v4427 = vadd.f32 %v3707, %v4426
  %4428 = vmatmul.f32.gmra.mxu0 %v4029
  %v4429 = vpop.f32.mrf.mxu0
  %v4430 = vadd.f32 %v3707, %v4429
  %4431 = vmatmul.f32.gmra.mxu0 %v4032
  %v4432 = vpop.f32.mrf.mxu0
  %v4433 = vadd.f32 %v3707, %v4432
  %4434 = vmatmul.f32.gmra.mxu0 %v4035
  %v4435 = vpop.f32.mrf.mxu0
  %v4436 = vadd.f32 %v3707, %v4435
  %4437 = vmatmul.f32.gmra.mxu0 %v4038
  %v4438 = vpop.f32.mrf.mxu0
  %v4439 = vadd.f32 %v3707, %v4438
  %4440 = vmatmul.f32.gmra.mxu0 %v4041
  %v4441 = vpop.f32.mrf.mxu0
  %v4442 = vadd.f32 %v3707, %v4441
  %4443 = vmatmul.f32.gmra.mxu0 %v4044
  %v4444 = vpop.f32.mrf.mxu0
  %v4445 = vadd.f32 %v3707, %v4444
  %4446 = vmatmul.f32.gmra.mxu0 %v4047
  %v4447 = vpop.f32.mrf.mxu0
  %v4448 = vadd.f32 %v3707, %v4447
  %4449 = vmatmul.f32.gmra.mxu0 %v4050
  %v4450 = vpop.f32.mrf.mxu0
  %v4451 = vadd.f32 %v3707, %v4450
  %4452 = vmatmul.f32.gmra.mxu0 %v4053
  %v4453 = vpop.f32.mrf.mxu0
  %v4454 = vadd.f32 %v3707, %v4453
  %4455 = vmatmul.f32.gmra.mxu0 %v4056
  %v4456 = vpop.f32.mrf.mxu0
  %v4457 = vadd.f32 %v3707, %v4456
  %4458 = vmatmul.f32.gmra.mxu0 %v4059
  %v4459 = vpop.f32.mrf.mxu0
  %v4460 = vadd.f32 %v3707, %v4459
  %4461 = vmatmul.f32.gmra.mxu0 %v4062
  %v4462 = vpop.f32.mrf.mxu0
  %v4463 = vadd.f32 %v3707, %v4462
  %4464 = vmatmul.f32.gmra.mxu0 %v4065
  %v4465 = vpop.f32.mrf.mxu0
  %v4466 = vadd.f32 %v3707, %v4465
  %4467 = vmatmul.f32.gmra.mxu0 %v4068
  %v4468 = vpop.f32.mrf.mxu0
  %v4469 = vadd.f32 %v3707, %v4468
  %4470 = vmatmul.f32.gmra.mxu0 %v4071
  %v4471 = vpop.f32.mrf.mxu0
  %v4472 = vadd.f32 %v3707, %v4471
  %4473 = vmatmul.f32.gmra.mxu0 %v4074
  %v4474 = vpop.f32.mrf.mxu0
  %v4475 = vadd.f32 %v3707, %v4474
  %4476 = vmatmul.f32.gmra.mxu0 %v4077
  %v4477 = vpop.f32.mrf.mxu0
  %v4478 = vadd.f32 %v3707, %v4477
  %4479 = vmatmul.f32.gmra.mxu0 %v4080
  %v4480 = vpop.f32.mrf.mxu0
  %v4481 = vadd.f32 %v3707, %v4480
  %4482 = vmatmul.f32.gmra.mxu0 %v4083
  %v4483 = vpop.f32.mrf.mxu0
  %v4484 = vadd.f32 %v3707, %v4483
  %4485 = vmatmul.f32.gmra.mxu0 %v4086
  %v4486 = vpop.f32.mrf.mxu0
  %v4487 = vadd.f32 %v3707, %v4486
  %4488 = vmatmul.f32.gmra.mxu0 %v4089
  %v4489 = vpop.f32.mrf.mxu0
  %v4490 = vadd.f32 %v3707, %v4489
  %4491 = vmatmul.f32.gmra.mxu0 %v4092
  %v4492 = vpop.f32.mrf.mxu0
  %v4493 = vadd.f32 %v3707, %v4492
  %4494 = vdwg.mxu0
  %v4495 = vmax.f32 %v4112, 0.0
  %v4496 = vmax.f32 %v4115, 0.0
  %v4497 = vmax.f32 %v4118, 0.0
  %v4498 = vmax.f32 %v4121, 0.0
  %v4499 = vmax.f32 %v4124, 0.0
  %v4500 = vmax.f32 %v4127, 0.0
  %v4501 = vmax.f32 %v4130, 0.0
  %v4502 = vmax.f32 %v4133, 0.0
  %v4503 = vmax.f32 %v4136, 0.0
  %v4504 = vmax.f32 %v4139, 0.0
  %v4505 = vmax.f32 %v4142, 0.0
  %v4506 = vmax.f32 %v4145, 0.0
  %v4507 = vmax.f32 %v4148, 0.0
  %v4508 = vmax.f32 %v4151, 0.0
  %v4509 = vmax.f32 %v4154, 0.0
  %v4510 = vmax.f32 %v4157, 0.0
  %v4511 = vmax.f32 %v4160, 0.0
  %v4512 = vmax.f32 %v4163, 0.0
  %v4513 = vmax.f32 %v4166, 0.0
  %v4514 = vmax.f32 %v4169, 0.0
  %v4515 = vmax.f32 %v4172, 0.0
  %v4516 = vmax.f32 %v4175, 0.0
  %v4517 = vmax.f32 %v4178, 0.0
  %v4518 = vmax.f32 %v4181, 0.0
  %v4519 = vmax.f32 %v4184, 0.0
  %v4520 = vmax.f32 %v4187, 0.0
  %v4521 = vmax.f32 %v4190, 0.0
  %v4522 = vmax.f32 %v4193, 0.0
  %v4523 = vmax.f32 %v4196, 0.0
  %v4524 = vmax.f32 %v4199, 0.0
  %v4525 = vmax.f32 %v4202, 0.0
  %v4526 = vmax.f32 %v4205, 0.0
  %v4527 = vmax.f32 %v4208, 0.0
  %v4528 = vmax.f32 %v4211, 0.0
  %v4529 = vmax.f32 %v4214, 0.0
  %v4530 = vmax.f32 %v4217, 0.0
  %v4531 = vmax.f32 %v4220, 0.0
  %v4532 = vmax.f32 %v4223, 0.0
  %v4533 = vmax.f32 %v4226, 0.0
  %v4534 = vmax.f32 %v4229, 0.0
  %v4535 = vmax.f32 %v4232, 0.0
  %v4536 = vmax.f32 %v4235, 0.0
  %v4537 = vmax.f32 %v4238, 0.0
  %v4538 = vmax.f32 %v4241, 0.0
  %v4539 = vmax.f32 %v4244, 0.0
  %v4540 = vmax.f32 %v4247, 0.0
  %v4541 = vmax.f32 %v4250, 0.0
  %v4542 = vmax.f32 %v4253, 0.0
  %v4543 = vmax.f32 %v4256, 0.0
  %v4544 = vmax.f32 %v4259, 0.0
  %v4545 = vmax.f32 %v4262, 0.0
  %v4546 = vmax.f32 %v4265, 0.0
  %v4547 = vmax.f32 %v4268, 0.0
  %v4548 = vmax.f32 %v4271, 0.0
  %v4549 = vmax.f32 %v4274, 0.0
  %v4550 = vmax.f32 %v4277, 0.0
  %v4551 = vmax.f32 %v4280, 0.0
  %v4552 = vmax.f32 %v4283, 0.0
  %v4553 = vmax.f32 %v4286, 0.0
  %v4554 = vmax.f32 %v4289, 0.0
  %v4555 = vmax.f32 %v4292, 0.0
  %v4556 = vmax.f32 %v4295, 0.0
  %v4557 = vmax.f32 %v4298, 0.0
  %v4558 = vmax.f32 %v4301, 0.0
  %v4559 = vmax.f32 %v4304, 0.0
  %v4560 = vmax.f32 %v4307, 0.0
  %v4561 = vmax.f32 %v4310, 0.0
  %v4562 = vmax.f32 %v4313, 0.0
  %v4563 = vmax.f32 %v4316, 0.0
  %v4564 = vmax.f32 %v4319, 0.0
  %v4565 = vmax.f32 %v4322, 0.0
  %v4566 = vmax.f32 %v4325, 0.0
  %v4567 = vmax.f32 %v4328, 0.0
  %v4568 = vmax.f32 %v4331, 0.0
  %v4569 = vmax.f32 %v4334, 0.0
  %v4570 = vmax.f32 %v4337, 0.0
  %v4571 = vmax.f32 %v4340, 0.0
  %v4572 = vmax.f32 %v4343, 0.0
  %v4573 = vmax.f32 %v4346, 0.0
  %v4574 = vmax.f32 %v4349, 0.0
  %v4575 = vmax.f32 %v4352, 0.0
  %v4576 = vmax.f32 %v4355, 0.0
  %v4577 = vmax.f32 %v4358, 0.0
  %v4578 = vmax.f32 %v4361, 0.0
  %v4579 = vmax.f32 %v4364, 0.0
  %v4580 = vmax.f32 %v4367, 0.0
  %v4581 = vmax.f32 %v4370, 0.0
  %v4582 = vmax.f32 %v4373, 0.0
  %v4583 = vmax.f32 %v4376, 0.0
  %v4584 = vmax.f32 %v4379, 0.0
  %v4585 = vmax.f32 %v4382, 0.0
  %v4586 = vmax.f32 %v4385, 0.0
  %v4587 = vmax.f32 %v4388, 0.0
  %v4588 = vmax.f32 %v4391, 0.0
  %v4589 = vmax.f32 %v4394, 0.0
  %v4590 = vmax.f32 %v4397, 0.0
  %v4591 = vmax.f32 %v4400, 0.0
  %v4592 = vmax.f32 %v4403, 0.0
  %v4593 = vmax.f32 %v4406, 0.0
  %v4594 = vmax.f32 %v4409, 0.0
  %v4595 = vmax.f32 %v4412, 0.0
  %v4596 = vmax.f32 %v4415, 0.0
  %v4597 = vmax.f32 %v4418, 0.0
  %v4598 = vmax.f32 %v4421, 0.0
  %v4599 = vmax.f32 %v4424, 0.0
  %v4600 = vmax.f32 %v4427, 0.0
  %v4601 = vmax.f32 %v4430, 0.0
  %v4602 = vmax.f32 %v4433, 0.0
  %v4603 = vmax.f32 %v4436, 0.0
  %v4604 = vmax.f32 %v4439, 0.0
  %v4605 = vmax.f32 %v4442, 0.0
  %v4606 = vmax.f32 %v4445, 0.0
  %v4607 = vmax.f32 %v4448, 0.0
  %v4608 = vmax.f32 %v4451, 0.0
  %v4609 = vmax.f32 %v4454, 0.0
  %v4610 = vmax.f32 %v4457, 0.0
  %v4611 = vmax.f32 %v4460, 0.0
  %v4612 = vmax.f32 %v4463, 0.0
  %v4613 = vmax.f32 %v4466, 0.0
  %v4614 = vmax.f32 %v4469, 0.0
  %v4615 = vmax.f32 %v4472, 0.0
  %v4616 = vmax.f32 %v4475, 0.0
  %v4617 = vmax.f32 %v4478, 0.0
  %v4618 = vmax.f32 %v4481, 0.0
  %v4619 = vmax.f32 %v4484, 0.0
  %v4620 = vmax.f32 %v4487, 0.0
  %v4621 = vmax.f32 %v4490, 0.0
  %v4622 = vmax.f32 %v4493, 0.0
  %v4623 = vld [vmem:[%s5] sm:$0xff]
  %v4624 = vld [vmem:[%s5 + $0x8] sm:$0xff]
  %v4625 = vld [vmem:[%s5 + $0x10] sm:$0xff]
  %v4626 = vld [vmem:[%s5 + $0x18] sm:$0xff]
  %v4627 = vld [vmem:[%s5 + $0x20] sm:$0xff]
  %v4628 = vld [vmem:[%s5 + $0x28] sm:$0xff]
  %v4629 = vld [vmem:[%s5 + $0x30] sm:$0xff]
  %v4630 = vld [vmem:[%s5 + $0x38] sm:$0xff]
  %v4631 = vld [vmem:[%s5 + $0x40] sm:$0xff]
  %v4632 = vld [vmem:[%s5 + $0x48] sm:$0xff]
  %v4633 = vld [vmem:[%s5 + $0x50] sm:$0xff]
  %v4634 = vld [vmem:[%s5 + $0x58] sm:$0xff]
  %v4635 = vld [vmem:[%s5 + $0x60] sm:$0xff]
  %4636 = vmatpush.msra.mxu0 0.0
  %4637 = vmatpush.msra.mxu0 0.0
  %4638 = vmatpush.msra.mxu0 0.0
  %4639 = vmatpush.msra.mxu0 %v4635
  %4640 = vmatpush.msra.mxu0 %v4634
  %4641 = vmatpush.msra.mxu0 %v4633
  %4642 = vmatpush.msra.mxu0 %v4632
  %4643 = vmatpush.msra.mxu0 %v4631
  %4644 = vmatpush.msra.mxu0 %v4630
  %4645 = vmatpush.msra.mxu0 %v4629
  %4646 = vmatpush.msra.mxu0 %v4628
  %4647 = vmatpush.msra.mxu0 %v4627
  %4648 = vmatpush.msra.mxu0 %v4626
  %4649 = vmatpush.msra.mxu0 %v4625
  %4650 = vmatpush.msra.mxu0 %v4624
  %4651 = vmatpush.msra.mxu0 %v4623
  %4652 = vmatmul.f32.gmra.mxu0 %v3711
  %v4653 = vpop.f32.mrf.mxu0
  %v4654 = vadd.f32 %v3707, %v4653
  %4655 = vmatmul.f32.gmra.mxu0 %v3714
  %v4656 = vpop.f32.mrf.mxu0
  %v4657 = vadd.f32 %v3707, %v4656
  %4658 = vmatmul.f32.gmra.mxu0 %v3717
  %v4659 = vpop.f32.mrf.mxu0
  %v4660 = vadd.f32 %v3707, %v4659
  %4661 = vmatmul.f32.gmra.mxu0 %v3720
  %v4662 = vpop.f32.mrf.mxu0
  %v4663 = vadd.f32 %v3707, %v4662
  %4664 = vmatmul.f32.gmra.mxu0 %v3723
  %v4665 = vpop.f32.mrf.mxu0
  %v4666 = vadd.f32 %v3707, %v4665
  %4667 = vmatmul.f32.gmra.mxu0 %v3726
  %v4668 = vpop.f32.mrf.mxu0
  %v4669 = vadd.f32 %v3707, %v4668
  %4670 = vmatmul.f32.gmra.mxu0 %v3729
  %v4671 = vpop.f32.mrf.mxu0
  %v4672 = vadd.f32 %v3707, %v4671
  %4673 = vmatmul.f32.gmra.mxu0 %v3732
  %v4674 = vpop.f32.mrf.mxu0
  %v4675 = vadd.f32 %v3707, %v4674
  %4676 = vmatmul.f32.gmra.mxu0 %v3735
  %v4677 = vpop.f32.mrf.mxu0
  %v4678 = vadd.f32 %v3707, %v4677
  %4679 = vmatmul.f32.gmra.mxu0 %v3738
  %v4680 = vpop.f32.mrf.mxu0
  %v4681 = vadd.f32 %v3707, %v4680
  %4682 = vmatmul.f32.gmra.mxu0 %v3741
  %v4683 = vpop.f32.mrf.mxu0
  %v4684 = vadd.f32 %v3707, %v4683
  %4685 = vmatmul.f32.gmra.mxu0 %v3744
  %v4686 = vpop.f32.mrf.mxu0
  %v4687 = vadd.f32 %v3707, %v4686
  %4688 = vmatmul.f32.gmra.mxu0 %v3747
  %v4689 = vpop.f32.mrf.mxu0
  %v4690 = vadd.f32 %v3707, %v4689
  %4691 = vmatmul.f32.gmra.mxu0 %v3750
  %v4692 = vpop.f32.mrf.mxu0
  %v4693 = vadd.f32 %v3707, %v4692
  %4694 = vmatmul.f32.gmra.mxu0 %v3753
  %v4695 = vpop.f32.mrf.mxu0
  %v4696 = vadd.f32 %v3707, %v4695
  %4697 = vmatmul.f32.gmra.mxu0 %v3756
  %v4698 = vpop.f32.mrf.mxu0
  %v4699 = vadd.f32 %v3707, %v4698
  %4700 = vmatmul.f32.gmra.mxu0 %v3759
  %v4701 = vpop.f32.mrf.mxu0
  %v4702 = vadd.f32 %v3707, %v4701
  %4703 = vmatmul.f32.gmra.mxu0 %v3762
  %v4704 = vpop.f32.mrf.mxu0
  %v4705 = vadd.f32 %v3707, %v4704
  %4706 = vmatmul.f32.gmra.mxu0 %v3765
  %v4707 = vpop.f32.mrf.mxu0
  %v4708 = vadd.f32 %v3707, %v4707
  %4709 = vmatmul.f32.gmra.mxu0 %v3768
  %v4710 = vpop.f32.mrf.mxu0
  %v4711 = vadd.f32 %v3707, %v4710
  %4712 = vmatmul.f32.gmra.mxu0 %v3771
  %v4713 = vpop.f32.mrf.mxu0
  %v4714 = vadd.f32 %v3707, %v4713
  %4715 = vmatmul.f32.gmra.mxu0 %v3774
  %v4716 = vpop.f32.mrf.mxu0
  %v4717 = vadd.f32 %v3707, %v4716
  %4718 = vmatmul.f32.gmra.mxu0 %v3777
  %v4719 = vpop.f32.mrf.mxu0
  %v4720 = vadd.f32 %v3707, %v4719
  %4721 = vmatmul.f32.gmra.mxu0 %v3780
  %v4722 = vpop.f32.mrf.mxu0
  %v4723 = vadd.f32 %v3707, %v4722
  %4724 = vmatmul.f32.gmra.mxu0 %v3783
  %v4725 = vpop.f32.mrf.mxu0
  %v4726 = vadd.f32 %v3707, %v4725
  %4727 = vmatmul.f32.gmra.mxu0 %v3786
  %v4728 = vpop.f32.mrf.mxu0
  %v4729 = vadd.f32 %v3707, %v4728
  %4730 = vmatmul.f32.gmra.mxu0 %v3789
  %v4731 = vpop.f32.mrf.mxu0
  %v4732 = vadd.f32 %v3707, %v4731
  %4733 = vmatmul.f32.gmra.mxu0 %v3792
  %v4734 = vpop.f32.mrf.mxu0
  %v4735 = vadd.f32 %v3707, %v4734
  %4736 = vmatmul.f32.gmra.mxu0 %v3795
  %v4737 = vpop.f32.mrf.mxu0
  %v4738 = vadd.f32 %v3707, %v4737
  %4739 = vmatmul.f32.gmra.mxu0 %v3798
  %v4740 = vpop.f32.mrf.mxu0
  %v4741 = vadd.f32 %v3707, %v4740
  %4742 = vmatmul.f32.gmra.mxu0 %v3801
  %v4743 = vpop.f32.mrf.mxu0
  %v4744 = vadd.f32 %v3707, %v4743
  %4745 = vmatmul.f32.gmra.mxu0 %v3804
  %v4746 = vpop.f32.mrf.mxu0
  %v4747 = vadd.f32 %v3707, %v4746
  %4748 = vmatmul.f32.gmra.mxu0 %v3807
  %v4749 = vpop.f32.mrf.mxu0
  %v4750 = vadd.f32 %v3707, %v4749
  %4751 = vmatmul.f32.gmra.mxu0 %v3810
  %v4752 = vpop.f32.mrf.mxu0
  %v4753 = vadd.f32 %v3707, %v4752
  %4754 = vmatmul.f32.gmra.mxu0 %v3813
  %v4755 = vpop.f32.mrf.mxu0
  %v4756 = vadd.f32 %v3707, %v4755
  %4757 = vmatmul.f32.gmra.mxu0 %v3816
  %v4758 = vpop.f32.mrf.mxu0
  %v4759 = vadd.f32 %v3707, %v4758
  %4760 = vmatmul.f32.gmra.mxu0 %v3819
  %v4761 = vpop.f32.mrf.mxu0
  %v4762 = vadd.f32 %v3707, %v4761
  %4763 = vmatmul.f32.gmra.mxu0 %v3822
  %v4764 = vpop.f32.mrf.mxu0
  %v4765 = vadd.f32 %v3707, %v4764
  %4766 = vmatmul.f32.gmra.mxu0 %v3825
  %v4767 = vpop.f32.mrf.mxu0
  %v4768 = vadd.f32 %v3707, %v4767
  %4769 = vmatmul.f32.gmra.mxu0 %v3828
  %v4770 = vpop.f32.mrf.mxu0
  %v4771 = vadd.f32 %v3707, %v4770
  %4772 = vmatmul.f32.gmra.mxu0 %v3831
  %v4773 = vpop.f32.mrf.mxu0
  %v4774 = vadd.f32 %v3707, %v4773
  %4775 = vmatmul.f32.gmra.mxu0 %v3834
  %v4776 = vpop.f32.mrf.mxu0
  %v4777 = vadd.f32 %v3707, %v4776
  %4778 = vmatmul.f32.gmra.mxu0 %v3837
  %v4779 = vpop.f32.mrf.mxu0
  %v4780 = vadd.f32 %v3707, %v4779
  %4781 = vmatmul.f32.gmra.mxu0 %v3840
  %v4782 = vpop.f32.mrf.mxu0
  %v4783 = vadd.f32 %v3707, %v4782
  %4784 = vmatmul.f32.gmra.mxu0 %v3843
  %v4785 = vpop.f32.mrf.mxu0
  %v4786 = vadd.f32 %v3707, %v4785
  %4787 = vmatmul.f32.gmra.mxu0 %v3846
  %v4788 = vpop.f32.mrf.mxu0
  %v4789 = vadd.f32 %v3707, %v4788
  %4790 = vmatmul.f32.gmra.mxu0 %v3849
  %v4791 = vpop.f32.mrf.mxu0
  %v4792 = vadd.f32 %v3707, %v4791
  %4793 = vmatmul.f32.gmra.mxu0 %v3852
  %v4794 = vpop.f32.mrf.mxu0
  %v4795 = vadd.f32 %v3707, %v4794
  %4796 = vmatmul.f32.gmra.mxu0 %v3855
  %v4797 = vpop.f32.mrf.mxu0
  %v4798 = vadd.f32 %v3707, %v4797
  %4799 = vmatmul.f32.gmra.mxu0 %v3858
  %v4800 = vpop.f32.mrf.mxu0
  %v4801 = vadd.f32 %v3707, %v4800
  %4802 = vmatmul.f32.gmra.mxu0 %v3861
  %v4803 = vpop.f32.mrf.mxu0
  %v4804 = vadd.f32 %v3707, %v4803
  %4805 = vmatmul.f32.gmra.mxu0 %v3864
  %v4806 = vpop.f32.mrf.mxu0
  %v4807 = vadd.f32 %v3707, %v4806
  %4808 = vmatmul.f32.gmra.mxu0 %v3867
  %v4809 = vpop.f32.mrf.mxu0
  %v4810 = vadd.f32 %v3707, %v4809
  %4811 = vmatmul.f32.gmra.mxu0 %v3870
  %v4812 = vpop.f32.mrf.mxu0
  %v4813 = vadd.f32 %v3707, %v4812
  %4814 = vmatmul.f32.gmra.mxu0 %v3873
  %v4815 = vpop.f32.mrf.mxu0
  %v4816 = vadd.f32 %v3707, %v4815
  %4817 = vmatmul.f32.gmra.mxu0 %v3876
  %v4818 = vpop.f32.mrf.mxu0
  %v4819 = vadd.f32 %v3707, %v4818
  %4820 = vmatmul.f32.gmra.mxu0 %v3879
  %v4821 = vpop.f32.mrf.mxu0
  %v4822 = vadd.f32 %v3707, %v4821
  %4823 = vmatmul.f32.gmra.mxu0 %v3882
  %v4824 = vpop.f32.mrf.mxu0
  %v4825 = vadd.f32 %v3707, %v4824
  %4826 = vmatmul.f32.gmra.mxu0 %v3885
  %v4827 = vpop.f32.mrf.mxu0
  %v4828 = vadd.f32 %v3707, %v4827
  %4829 = vmatmul.f32.gmra.mxu0 %v3888
  %v4830 = vpop.f32.mrf.mxu0
  %v4831 = vadd.f32 %v3707, %v4830
  %4832 = vmatmul.f32.gmra.mxu0 %v3891
  %v4833 = vpop.f32.mrf.mxu0
  %v4834 = vadd.f32 %v3707, %v4833
  %4835 = vmatmul.f32.gmra.mxu0 %v3894
  %v4836 = vpop.f32.mrf.mxu0
  %v4837 = vadd.f32 %v3707, %v4836
  %4838 = vmatmul.f32.gmra.mxu0 %v3897
  %v4839 = vpop.f32.mrf.mxu0
  %v4840 = vadd.f32 %v3707, %v4839
  %4841 = vmatmul.f32.gmra.mxu0 %v3900
  %v4842 = vpop.f32.mrf.mxu0
  %v4843 = vadd.f32 %v3707, %v4842
  %4844 = vmatmul.f32.gmra.mxu0 %v3903
  %v4845 = vpop.f32.mrf.mxu0
  %v4846 = vadd.f32 %v3707, %v4845
  %4847 = vmatmul.f32.gmra.mxu0 %v3906
  %v4848 = vpop.f32.mrf.mxu0
  %v4849 = vadd.f32 %v3707, %v4848
  %4850 = vmatmul.f32.gmra.mxu0 %v3909
  %v4851 = vpop.f32.mrf.mxu0
  %v4852 = vadd.f32 %v3707, %v4851
  %4853 = vmatmul.f32.gmra.mxu0 %v3912
  %v4854 = vpop.f32.mrf.mxu0
  %v4855 = vadd.f32 %v3707, %v4854
  %4856 = vmatmul.f32.gmra.mxu0 %v3915
  %v4857 = vpop.f32.mrf.mxu0
  %v4858 = vadd.f32 %v3707, %v4857
  %4859 = vmatmul.f32.gmra.mxu0 %v3918
  %v4860 = vpop.f32.mrf.mxu0
  %v4861 = vadd.f32 %v3707, %v4860
  %4862 = vmatmul.f32.gmra.mxu0 %v3921
  %v4863 = vpop.f32.mrf.mxu0
  %v4864 = vadd.f32 %v3707, %v4863
  %4865 = vmatmul.f32.gmra.mxu0 %v3924
  %v4866 = vpop.f32.mrf.mxu0
  %v4867 = vadd.f32 %v3707, %v4866
  %4868 = vmatmul.f32.gmra.mxu0 %v3927
  %v4869 = vpop.f32.mrf.mxu0
  %v4870 = vadd.f32 %v3707, %v4869
  %4871 = vmatmul.f32.gmra.mxu0 %v3930
  %v4872 = vpop.f32.mrf.mxu0
  %v4873 = vadd.f32 %v3707, %v4872
  %4874 = vmatmul.f32.gmra.mxu0 %v3933
  %v4875 = vpop.f32.mrf.mxu0
  %v4876 = vadd.f32 %v3707, %v4875
  %4877 = vmatmul.f32.gmra.mxu0 %v3936
  %v4878 = vpop.f32.mrf.mxu0
  %v4879 = vadd.f32 %v3707, %v4878
  %4880 = vmatmul.f32.gmra.mxu0 %v3939
  %v4881 = vpop.f32.mrf.mxu0
  %v4882 = vadd.f32 %v3707, %v4881
  %4883 = vmatmul.f32.gmra.mxu0 %v3942
  %v4884 = vpop.f32.mrf.mxu0
  %v4885 = vadd.f32 %v3707, %v4884
  %4886 = vmatmul.f32.gmra.mxu0 %v3945
  %v4887 = vpop.f32.mrf.mxu0
  %v4888 = vadd.f32 %v3707, %v4887
  %4889 = vmatmul.f32.gmra.mxu0 %v3948
  %v4890 = vpop.f32.mrf.mxu0
  %v4891 = vadd.f32 %v3707, %v4890
  %4892 = vmatmul.f32.gmra.mxu0 %v3951
  %v4893 = vpop.f32.mrf.mxu0
  %v4894 = vadd.f32 %v3707, %v4893
  %4895 = vmatmul.f32.gmra.mxu0 %v3954
  %v4896 = vpop.f32.mrf.mxu0
  %v4897 = vadd.f32 %v3707, %v4896
  %4898 = vmatmul.f32.gmra.mxu0 %v3957
  %v4899 = vpop.f32.mrf.mxu0
  %v4900 = vadd.f32 %v3707, %v4899
  %4901 = vmatmul.f32.gmra.mxu0 %v3960
  %v4902 = vpop.f32.mrf.mxu0
  %v4903 = vadd.f32 %v3707, %v4902
  %4904 = vmatmul.f32.gmra.mxu0 %v3963
  %v4905 = vpop.f32.mrf.mxu0
  %v4906 = vadd.f32 %v3707, %v4905
  %4907 = vmatmul.f32.gmra.mxu0 %v3966
  %v4908 = vpop.f32.mrf.mxu0
  %v4909 = vadd.f32 %v3707, %v4908
  %4910 = vmatmul.f32.gmra.mxu0 %v3969
  %v4911 = vpop.f32.mrf.mxu0
  %v4912 = vadd.f32 %v3707, %v4911
  %4913 = vmatmul.f32.gmra.mxu0 %v3972
  %v4914 = vpop.f32.mrf.mxu0
  %v4915 = vadd.f32 %v3707, %v4914
  %4916 = vmatmul.f32.gmra.mxu0 %v3975
  %v4917 = vpop.f32.mrf.mxu0
  %v4918 = vadd.f32 %v3707, %v4917
  %4919 = vmatmul.f32.gmra.mxu0 %v3978
  %v4920 = vpop.f32.mrf.mxu0
  %v4921 = vadd.f32 %v3707, %v4920
  %4922 = vmatmul.f32.gmra.mxu0 %v3981
  %v4923 = vpop.f32.mrf.mxu0
  %v4924 = vadd.f32 %v3707, %v4923
  %4925 = vmatmul.f32.gmra.mxu0 %v3984
  %v4926 = vpop.f32.mrf.mxu0
  %v4927 = vadd.f32 %v3707, %v4926
  %4928 = vmatmul.f32.gmra.mxu0 %v3987
  %v4929 = vpop.f32.mrf.mxu0
  %v4930 = vadd.f32 %v3707, %v4929
  %4931 = vmatmul.f32.gmra.mxu0 %v3990
  %v4932 = vpop.f32.mrf.mxu0
  %v4933 = vadd.f32 %v3707, %v4932
  %4934 = vmatmul.f32.gmra.mxu0 %v3993
  %v4935 = vpop.f32.mrf.mxu0
  %v4936 = vadd.f32 %v3707, %v4935
  %4937 = vmatmul.f32.gmra.mxu0 %v3996
  %v4938 = vpop.f32.mrf.mxu0
  %v4939 = vadd.f32 %v3707, %v4938
  %4940 = vmatmul.f32.gmra.mxu0 %v3999
  %v4941 = vpop.f32.mrf.mxu0
  %v4942 = vadd.f32 %v3707, %v4941
  %4943 = vmatmul.f32.gmra.mxu0 %v4002
  %v4944 = vpop.f32.mrf.mxu0
  %v4945 = vadd.f32 %v3707, %v4944
  %4946 = vmatmul.f32.gmra.mxu0 %v4005
  %v4947 = vpop.f32.mrf.mxu0
  %v4948 = vadd.f32 %v3707, %v4947
  %4949 = vmatmul.f32.gmra.mxu0 %v4008
  %v4950 = vpop.f32.mrf.mxu0
  %v4951 = vadd.f32 %v3707, %v4950
  %4952 = vmatmul.f32.gmra.mxu0 %v4011
  %v4953 = vpop.f32.mrf.mxu0
  %v4954 = vadd.f32 %v3707, %v4953
  %4955 = vmatmul.f32.gmra.mxu0 %v4014
  %v4956 = vpop.f32.mrf.mxu0
  %v4957 = vadd.f32 %v3707, %v4956
  %4958 = vmatmul.f32.gmra.mxu0 %v4017
  %v4959 = vpop.f32.mrf.mxu0
  %v4960 = vadd.f32 %v3707, %v4959
  %4961 = vmatmul.f32.gmra.mxu0 %v4020
  %v4962 = vpop.f32.mrf.mxu0
  %v4963 = vadd.f32 %v3707, %v4962
  %4964 = vmatmul.f32.gmra.mxu0 %v4023
  %v4965 = vpop.f32.mrf.mxu0
  %v4966 = vadd.f32 %v3707, %v4965
  %4967 = vmatmul.f32.gmra.mxu0 %v4026
  %v4968 = vpop.f32.mrf.mxu0
  %v4969 = vadd.f32 %v3707, %v4968
  %4970 = vmatmul.f32.gmra.mxu0 %v4029
  %v4971 = vpop.f32.mrf.mxu0
  %v4972 = vadd.f32 %v3707, %v4971
  %4973 = vmatmul.f32.gmra.mxu0 %v4032
  %v4974 = vpop.f32.mrf.mxu0
  %v4975 = vadd.f32 %v3707, %v4974
  %4976 = vmatmul.f32.gmra.mxu0 %v4035
  %v4977 = vpop.f32.mrf.mxu0
  %v4978 = vadd.f32 %v3707, %v4977
  %4979 = vmatmul.f32.gmra.mxu0 %v4038
  %v4980 = vpop.f32.mrf.mxu0
  %v4981 = vadd.f32 %v3707, %v4980
  %4982 = vmatmul.f32.gmra.mxu0 %v4041
  %v4983 = vpop.f32.mrf.mxu0
  %v4984 = vadd.f32 %v3707, %v4983
  %4985 = vmatmul.f32.gmra.mxu0 %v4044
  %v4986 = vpop.f32.mrf.mxu0
  %v4987 = vadd.f32 %v3707, %v4986
  %4988 = vmatmul.f32.gmra.mxu0 %v4047
  %v4989 = vpop.f32.mrf.mxu0
  %v4990 = vadd.f32 %v3707, %v4989
  %4991 = vmatmul.f32.gmra.mxu0 %v4050
  %v4992 = vpop.f32.mrf.mxu0
  %v4993 = vadd.f32 %v3707, %v4992
  %4994 = vmatmul.f32.gmra.mxu0 %v4053
  %v4995 = vpop.f32.mrf.mxu0
  %v4996 = vadd.f32 %v3707, %v4995
  %4997 = vmatmul.f32.gmra.mxu0 %v4056
  %v4998 = vpop.f32.mrf.mxu0
  %v4999 = vadd.f32 %v3707, %v4998
  %5000 = vmatmul.f32.gmra.mxu0 %v4059
  %v5001 = vpop.f32.mrf.mxu0
  %v5002 = vadd.f32 %v3707, %v5001
  %5003 = vmatmul.f32.gmra.mxu0 %v4062
  %v5004 = vpop.f32.mrf.mxu0
  %v5005 = vadd.f32 %v3707, %v5004
  %5006 = vmatmul.f32.gmra.mxu0 %v4065
  %v5007 = vpop.f32.mrf.mxu0
  %v5008 = vadd.f32 %v3707, %v5007
  %5009 = vmatmul.f32.gmra.mxu0 %v4068
  %v5010 = vpop.f32.mrf.mxu0
  %v5011 = vadd.f32 %v3707, %v5010
  %5012 = vmatmul.f32.gmra.mxu0 %v4071
  %v5013 = vpop.f32.mrf.mxu0
  %v5014 = vadd.f32 %v3707, %v5013
  %5015 = vmatmul.f32.gmra.mxu0 %v4074
  %v5016 = vpop.f32.mrf.mxu0
  %v5017 = vadd.f32 %v3707, %v5016
  %5018 = vmatmul.f32.gmra.mxu0 %v4077
  %v5019 = vpop.f32.mrf.mxu0
  %v5020 = vadd.f32 %v3707, %v5019
  %5021 = vmatmul.f32.gmra.mxu0 %v4080
  %v5022 = vpop.f32.mrf.mxu0
  %v5023 = vadd.f32 %v3707, %v5022
  %5024 = vmatmul.f32.gmra.mxu0 %v4083
  %v5025 = vpop.f32.mrf.mxu0
  %v5026 = vadd.f32 %v3707, %v5025
  %5027 = vmatmul.f32.gmra.mxu0 %v4086
  %v5028 = vpop.f32.mrf.mxu0
  %v5029 = vadd.f32 %v3707, %v5028
  %5030 = vmatmul.f32.gmra.mxu0 %v4089
  %v5031 = vpop.f32.mrf.mxu0
  %v5032 = vadd.f32 %v3707, %v5031
  %5033 = vmatmul.f32.gmra.mxu0 %v4092
  %v5034 = vpop.f32.mrf.mxu0
  %v5035 = vadd.f32 %v3707, %v5034
  %5036 = vdwg.mxu0
  %v5037 = vmax.f32 %v4654, 0.0
  %v5038 = vmax.f32 %v4657, 0.0
  %v5039 = vmax.f32 %v4660, 0.0
  %v5040 = vmax.f32 %v4663, 0.0
  %v5041 = vmax.f32 %v4666, 0.0
  %v5042 = vmax.f32 %v4669, 0.0
  %v5043 = vmax.f32 %v4672, 0.0
  %v5044 = vmax.f32 %v4675, 0.0
  %v5045 = vmax.f32 %v4678, 0.0
  %v5046 = vmax.f32 %v4681, 0.0
  %v5047 = vmax.f32 %v4684, 0.0
  %v5048 = vmax.f32 %v4687, 0.0
  %v5049 = vmax.f32 %v4690, 0.0
  %v5050 = vmax.f32 %v4693, 0.0
  %v5051 = vmax.f32 %v4696, 0.0
  %v5052 = vmax.f32 %v4699, 0.0
  %v5053 = vmax.f32 %v4702, 0.0
  %v5054 = vmax.f32 %v4705, 0.0
  %v5055 = vmax.f32 %v4708, 0.0
  %v5056 = vmax.f32 %v4711, 0.0
  %v5057 = vmax.f32 %v4714, 0.0
  %v5058 = vmax.f32 %v4717, 0.0
  %v5059 = vmax.f32 %v4720, 0.0
  %v5060 = vmax.f32 %v4723, 0.0
  %v5061 = vmax.f32 %v4726, 0.0
  %v5062 = vmax.f32 %v4729, 0.0
  %v5063 = vmax.f32 %v4732, 0.0
  %v5064 = vmax.f32 %v4735, 0.0
  %v5065 = vmax.f32 %v4738, 0.0
  %v5066 = vmax.f32 %v4741, 0.0
  %v5067 = vmax.f32 %v4744, 0.0
  %v5068 = vmax.f32 %v4747, 0.0
  %v5069 = vmax.f32 %v4750, 0.0
  %v5070 = vmax.f32 %v4753, 0.0
  %v5071 = vmax.f32 %v4756, 0.0
  %v5072 = vmax.f32 %v4759, 0.0
  %v5073 = vmax.f32 %v4762, 0.0
  %v5074 = vmax.f32 %v4765, 0.0
  %v5075 = vmax.f32 %v4768, 0.0
  %v5076 = vmax.f32 %v4771, 0.0
  %v5077 = vmax.f32 %v4774, 0.0
  %v5078 = vmax.f32 %v4777, 0.0
  %v5079 = vmax.f32 %v4780, 0.0
  %v5080 = vmax.f32 %v4783, 0.0
  %v5081 = vmax.f32 %v4786, 0.0
  %v5082 = vmax.f32 %v4789, 0.0
  %v5083 = vmax.f32 %v4792, 0.0
  %v5084 = vmax.f32 %v4795, 0.0
  %v5085 = vmax.f32 %v4798, 0.0
  %v5086 = vmax.f32 %v4801, 0.0
  %v5087 = vmax.f32 %v4804, 0.0
  %v5088 = vmax.f32 %v4807, 0.0
  %v5089 = vmax.f32 %v4810, 0.0
  %v5090 = vmax.f32 %v4813, 0.0
  %v5091 = vmax.f32 %v4816, 0.0
  %v5092 = vmax.f32 %v4819, 0.0
  %v5093 = vmax.f32 %v4822, 0.0
  %v5094 = vmax.f32 %v4825, 0.0
  %v5095 = vmax.f32 %v4828, 0.0
  %v5096 = vmax.f32 %v4831, 0.0
  %v5097 = vmax.f32 %v4834, 0.0
  %v5098 = vmax.f32 %v4837, 0.0
  %v5099 = vmax.f32 %v4840, 0.0
  %v5100 = vmax.f32 %v4843, 0.0
  %v5101 = vmax.f32 %v4846, 0.0
  %v5102 = vmax.f32 %v4849, 0.0
  %v5103 = vmax.f32 %v4852, 0.0
  %v5104 = vmax.f32 %v4855, 0.0
  %v5105 = vmax.f32 %v4858, 0.0
  %v5106 = vmax.f32 %v4861, 0.0
  %v5107 = vmax.f32 %v4864, 0.0
  %v5108 = vmax.f32 %v4867, 0.0
  %v5109 = vmax.f32 %v4870, 0.0
  %v5110 = vmax.f32 %v4873, 0.0
  %v5111 = vmax.f32 %v4876, 0.0
  %v5112 = vmax.f32 %v4879, 0.0
  %v5113 = vmax.f32 %v4882, 0.0
  %v5114 = vmax.f32 %v4885, 0.0
  %v5115 = vmax.f32 %v4888, 0.0
  %v5116 = vmax.f32 %v4891, 0.0
  %v5117 = vmax.f32 %v4894, 0.0
  %v5118 = vmax.f32 %v4897, 0.0
  %v5119 = vmax.f32 %v4900, 0.0
  %v5120 = vmax.f32 %v4903, 0.0
  %v5121 = vmax.f32 %v4906, 0.0
  %v5122 = vmax.f32 %v4909, 0.0
  %v5123 = vmax.f32 %v4912, 0.0
  %v5124 = vmax.f32 %v4915, 0.0
  %v5125 = vmax.f32 %v4918, 0.0
  %v5126 = vmax.f32 %v4921, 0.0
  %v5127 = vmax.f32 %v4924, 0.0
  %v5128 = vmax.f32 %v4927, 0.0
  %v5129 = vmax.f32 %v4930, 0.0
  %v5130 = vmax.f32 %v4933, 0.0
  %v5131 = vmax.f32 %v4936, 0.0
  %v5132 = vmax.f32 %v4939, 0.0
  %v5133 = vmax.f32 %v4942, 0.0
  %v5134 = vmax.f32 %v4945, 0.0
  %v5135 = vmax.f32 %v4948, 0.0
  %v5136 = vmax.f32 %v4951, 0.0
  %v5137 = vmax.f32 %v4954, 0.0
  %v5138 = vmax.f32 %v4957, 0.0
  %v5139 = vmax.f32 %v4960, 0.0
  %v5140 = vmax.f32 %v4963, 0.0
  %v5141 = vmax.f32 %v4966, 0.0
  %v5142 = vmax.f32 %v4969, 0.0
  %v5143 = vmax.f32 %v4972, 0.0
  %v5144 = vmax.f32 %v4975, 0.0
  %v5145 = vmax.f32 %v4978, 0.0
  %v5146 = vmax.f32 %v4981, 0.0
  %v5147 = vmax.f32 %v4984, 0.0
  %v5148 = vmax.f32 %v4987, 0.0
  %v5149 = vmax.f32 %v4990, 0.0
  %v5150 = vmax.f32 %v4993, 0.0
  %v5151 = vmax.f32 %v4996, 0.0
  %v5152 = vmax.f32 %v4999, 0.0
  %v5153 = vmax.f32 %v5002, 0.0
  %v5154 = vmax.f32 %v5005, 0.0
  %v5155 = vmax.f32 %v5008, 0.0
  %v5156 = vmax.f32 %v5011, 0.0
  %v5157 = vmax.f32 %v5014, 0.0
  %v5158 = vmax.f32 %v5017, 0.0
  %v5159 = vmax.f32 %v5020, 0.0
  %v5160 = vmax.f32 %v5023, 0.0
  %v5161 = vmax.f32 %v5026, 0.0
  %v5162 = vmax.f32 %v5029, 0.0
  %v5163 = vmax.f32 %v5032, 0.0
  %v5164 = vmax.f32 %v5035, 0.0
  %v5165 = vmax.f32 %v4495, %v5037
  %v5166 = vmax.f32 %v4496, %v5038
  %v5167 = vmax.f32 %v4497, %v5039
  %v5168 = vmax.f32 %v4498, %v5040
  %v5169 = vmax.f32 %v4499, %v5041
  %v5170 = vmax.f32 %v4500, %v5042
  %v5171 = vmax.f32 %v4501, %v5043
  %v5172 = vmax.f32 %v4502, %v5044
  %v5173 = vmax.f32 %v4503, %v5045
  %v5174 = vmax.f32 %v4504, %v5046
  %v5175 = vmax.f32 %v4505, %v5047
  %v5176 = vmax.f32 %v4506, %v5048
  %v5177 = vmax.f32 %v4507, %v5049
  %v5178 = vmax.f32 %v4508, %v5050
  %v5179 = vmax.f32 %v4509, %v5051
  %v5180 = vmax.f32 %v4510, %v5052
  %v5181 = vmax.f32 %v4511, %v5053
  %v5182 = vmax.f32 %v4512, %v5054
  %v5183 = vmax.f32 %v4513, %v5055
  %v5184 = vmax.f32 %v4514, %v5056
  %v5185 = vmax.f32 %v4515, %v5057
  %v5186 = vmax.f32 %v4516, %v5058
  %v5187 = vmax.f32 %v4517, %v5059
  %v5188 = vmax.f32 %v4518, %v5060
  %v5189 = vmax.f32 %v4519, %v5061
  %v5190 = vmax.f32 %v4520, %v5062
  %v5191 = vmax.f32 %v4521, %v5063
  %v5192 = vmax.f32 %v4522, %v5064
  %v5193 = vmax.f32 %v4523, %v5065
  %v5194 = vmax.f32 %v4524, %v5066
  %v5195 = vmax.f32 %v4525, %v5067
  %v5196 = vmax.f32 %v4526, %v5068
  %v5197 = vmax.f32 %v4527, %v5069
  %v5198 = vmax.f32 %v4528, %v5070
  %v5199 = vmax.f32 %v4529, %v5071
  %v5200 = vmax.f32 %v4530, %v5072
  %v5201 = vmax.f32 %v4531, %v5073
  %v5202 = vmax.f32 %v4532, %v5074
  %v5203 = vmax.f32 %v4533, %v5075
  %v5204 = vmax.f32 %v4534, %v5076
  %v5205 = vmax.f32 %v4535, %v5077
  %v5206 = vmax.f32 %v4536, %v5078
  %v5207 = vmax.f32 %v4537, %v5079
  %v5208 = vmax.f32 %v4538, %v5080
  %v5209 = vmax.f32 %v4539, %v5081
  %v5210 = vmax.f32 %v4540, %v5082
  %v5211 = vmax.f32 %v4541, %v5083
  %v5212 = vmax.f32 %v4542, %v5084
  %v5213 = vmax.f32 %v4543, %v5085
  %v5214 = vmax.f32 %v4544, %v5086
  %v5215 = vmax.f32 %v4545, %v5087
  %v5216 = vmax.f32 %v4546, %v5088
  %v5217 = vmax.f32 %v4547, %v5089
  %v5218 = vmax.f32 %v4548, %v5090
  %v5219 = vmax.f32 %v4549, %v5091
  %v5220 = vmax.f32 %v4550, %v5092
  %v5221 = vmax.f32 %v4551, %v5093
  %v5222 = vmax.f32 %v4552, %v5094
  %v5223 = vmax.f32 %v4553, %v5095
  %v5224 = vmax.f32 %v4554, %v5096
  %v5225 = vmax.f32 %v4555, %v5097
  %v5226 = vmax.f32 %v4556, %v5098
  %v5227 = vmax.f32 %v4557, %v5099
  %v5228 = vmax.f32 %v4558, %v5100
  %v5229 = vmax.f32 %v4559, %v5101
  %v5230 = vmax.f32 %v4560, %v5102
  %v5231 = vmax.f32 %v4561, %v5103
  %v5232 = vmax.f32 %v4562, %v5104
  %v5233 = vmax.f32 %v4563, %v5105
  %v5234 = vmax.f32 %v4564, %v5106
  %v5235 = vmax.f32 %v4565, %v5107
  %v5236 = vmax.f32 %v4566, %v5108
  %v5237 = vmax.f32 %v4567, %v5109
  %v5238 = vmax.f32 %v4568, %v5110
  %v5239 = vmax.f32 %v4569, %v5111
  %v5240 = vmax.f32 %v4570, %v5112
  %v5241 = vmax.f32 %v4571, %v5113
  %v5242 = vmax.f32 %v4572, %v5114
  %v5243 = vmax.f32 %v4573, %v5115
  %v5244 = vmax.f32 %v4574, %v5116
  %v5245 = vmax.f32 %v4575, %v5117
  %v5246 = vmax.f32 %v4576, %v5118
  %v5247 = vmax.f32 %v4577, %v5119
  %v5248 = vmax.f32 %v4578, %v5120
  %v5249 = vmax.f32 %v4579, %v5121
  %v5250 = vmax.f32 %v4580, %v5122
  %v5251 = vmax.f32 %v4581, %v5123
  %v5252 = vmax.f32 %v4582, %v5124
  %v5253 = vmax.f32 %v4583, %v5125
  %v5254 = vmax.f32 %v4584, %v5126
  %v5255 = vmax.f32 %v4585, %v5127
  %v5256 = vmax.f32 %v4586, %v5128
  %v5257 = vmax.f32 %v4587, %v5129
  %v5258 = vmax.f32 %v4588, %v5130
  %v5259 = vmax.f32 %v4589, %v5131
  %v5260 = vmax.f32 %v4590, %v5132
  %v5261 = vmax.f32 %v4591, %v5133
  %v5262 = vmax.f32 %v4592, %v5134
  %v5263 = vmax.f32 %v4593, %v5135
  %v5264 = vmax.f32 %v4594, %v5136
  %v5265 = vmax.f32 %v4595, %v5137
  %v5266 = vmax.f32 %v4596, %v5138
  %v5267 = vmax.f32 %v4597, %v5139
  %v5268 = vmax.f32 %v4598, %v5140
  %v5269 = vmax.f32 %v4599, %v5141
  %v5270 = vmax.f32 %v4600, %v5142
  %v5271 = vmax.f32 %v4601, %v5143
  %v5272 = vmax.f32 %v4602, %v5144
  %v5273 = vmax.f32 %v4603, %v5145
  %v5274 = vmax.f32 %v4604, %v5146
  %v5275 = vmax.f32 %v4605, %v5147
  %v5276 = vmax.f32 %v4606, %v5148
  %v5277 = vmax.f32 %v4607, %v5149
  %v5278 = vmax.f32 %v4608, %v5150
  %v5279 = vmax.f32 %v4609, %v5151
  %v5280 = vmax.f32 %v4610, %v5152
  %v5281 = vmax.f32 %v4611, %v5153
  %v5282 = vmax.f32 %v4612, %v5154
  %v5283 = vmax.f32 %v4613, %v5155
  %v5284 = vmax.f32 %v4614, %v5156
  %v5285 = vmax.f32 %v4615, %v5157
  %v5286 = vmax.f32 %v4616, %v5158
  %v5287 = vmax.f32 %v4617, %v5159
  %v5288 = vmax.f32 %v4618, %v5160
  %v5289 = vmax.f32 %v4619, %v5161
  %v5290 = vmax.f32 %v4620, %v5162
  %v5291 = vmax.f32 %v4621, %v5163
  %v5292 = vmax.f32 %v4622, %v5164
  %v5293 = vld [vmem:[%s7] sm:$0xff]
  %v5294 = vld [vmem:[%s7 + $0x8] sm:$0xff]
  %v5295 = vld [vmem:[%s7 + $0x10] sm:$0xff]
  %v5296 = vld [vmem:[%s7 + $0x18] sm:$0xff]
  %v5297 = vld [vmem:[%s7 + $0x20] sm:$0xff]
  %v5298 = vld [vmem:[%s7 + $0x28] sm:$0xff]
  %v5299 = vld [vmem:[%s7 + $0x30] sm:$0xff]
  %v5300 = vld [vmem:[%s7 + $0x38] sm:$0xff]
  %v5301 = vld [vmem:[%s7 + $0x40] sm:$0xff]
  %v5302 = vld [vmem:[%s7 + $0x48] sm:$0xff]
  %v5303 = vld [vmem:[%s7 + $0x50] sm:$0xff]
  %v5304 = vld [vmem:[%s7 + $0x58] sm:$0xff]
  %v5305 = vld [vmem:[%s8] sm:$0x1]
  %v5307 = vperm.slane %v5305, 0
  %vm5309 = vcmask 785408
  %v5311 = vsel %vm5309, %v5165, 0
  %v5314 = vsel %vm5309, %v5166, 0
  %v5317 = vsel %vm5309, %v5167, 0
  %v5320 = vsel %vm5309, %v5168, 0
  %v5323 = vsel %vm5309, %v5169, 0
  %v5326 = vsel %vm5309, %v5170, 0
  %v5329 = vsel %vm5309, %v5171, 0
  %v5332 = vsel %vm5309, %v5172, 0
  %v5335 = vsel %vm5309, %v5173, 0
  %v5338 = vsel %vm5309, %v5174, 0
  %v5341 = vsel %vm5309, %v5175, 0
  %v5344 = vsel %vm5309, %v5176, 0
  %v5347 = vsel %vm5309, %v5177, 0
  %v5350 = vsel %vm5309, %v5178, 0
  %v5353 = vsel %vm5309, %v5179, 0
  %v5356 = vsel %vm5309, %v5180, 0
  %v5359 = vsel %vm5309, %v5181, 0
  %v5362 = vsel %vm5309, %v5182, 0
  %v5365 = vsel %vm5309, %v5183, 0
  %v5368 = vsel %vm5309, %v5184, 0
  %v5371 = vsel %vm5309, %v5185, 0
  %v5374 = vsel %vm5309, %v5186, 0
  %v5377 = vsel %vm5309, %v5187, 0
  %v5380 = vsel %vm5309, %v5188, 0
  %v5383 = vsel %vm5309, %v5189, 0
  %v5386 = vsel %vm5309, %v5190, 0
  %v5389 = vsel %vm5309, %v5191, 0
  %v5392 = vsel %vm5309, %v5192, 0
  %v5395 = vsel %vm5309, %v5193, 0
  %v5398 = vsel %vm5309, %v5194, 0
  %v5401 = vsel %vm5309, %v5195, 0
  %v5404 = vsel %vm5309, %v5196, 0
  %v5407 = vsel %vm5309, %v5197, 0
  %v5410 = vsel %vm5309, %v5198, 0
  %v5413 = vsel %vm5309, %v5199, 0
  %v5416 = vsel %vm5309, %v5200, 0
  %v5419 = vsel %vm5309, %v5201, 0
  %v5422 = vsel %vm5309, %v5202, 0
  %v5425 = vsel %vm5309, %v5203, 0
  %v5428 = vsel %vm5309, %v5204, 0
  %v5431 = vsel %vm5309, %v5205, 0
  %v5434 = vsel %vm5309, %v5206, 0
  %v5437 = vsel %vm5309, %v5207, 0
  %v5440 = vsel %vm5309, %v5208, 0
  %v5443 = vsel %vm5309, %v5209, 0
  %v5446 = vsel %vm5309, %v5210, 0
  %v5449 = vsel %vm5309, %v5211, 0
  %v5452 = vsel %vm5309, %v5212, 0
  %v5455 = vsel %vm5309, %v5213, 0
  %v5458 = vsel %vm5309, %v5214, 0
  %v5461 = vsel %vm5309, %v5215, 0
  %v5464 = vsel %vm5309, %v5216, 0
  %v5467 = vsel %vm5309, %v5217, 0
  %v5470 = vsel %vm5309, %v5218, 0
  %v5473 = vsel %vm5309, %v5219, 0
  %v5476 = vsel %vm5309, %v5220, 0
  %v5479 = vsel %vm5309, %v5221, 0
  %v5482 = vsel %vm5309, %v5222, 0
  %v5485 = vsel %vm5309, %v5223, 0
  %v5488 = vsel %vm5309, %v5224, 0
  %v5491 = vsel %vm5309, %v5225, 0
  %v5494 = vsel %vm5309, %v5226, 0
  %v5497 = vsel %vm5309, %v5227, 0
  %v5500 = vsel %vm5309, %v5228, 0
  %v5503 = vsel %vm5309, %v5229, 0
  %v5506 = vsel %vm5309, %v5230, 0
  %v5509 = vsel %vm5309, %v5231, 0
  %v5512 = vsel %vm5309, %v5232, 0
  %v5515 = vsel %vm5309, %v5233, 0
  %v5518 = vsel %vm5309, %v5234, 0
  %v5521 = vsel %vm5309, %v5235, 0
  %v5524 = vsel %vm5309, %v5236, 0
  %v5527 = vsel %vm5309, %v5237, 0
  %v5530 = vsel %vm5309, %v5238, 0
  %v5533 = vsel %vm5309, %v5239, 0
  %v5536 = vsel %vm5309, %v5240, 0
  %v5539 = vsel %vm5309, %v5241, 0
  %v5542 = vsel %vm5309, %v5242, 0
  %v5545 = vsel %vm5309, %v5243, 0
  %v5548 = vsel %vm5309, %v5244, 0
  %v5551 = vsel %vm5309, %v5245, 0
  %v5554 = vsel %vm5309, %v5246, 0
  %v5557 = vsel %vm5309, %v5247, 0
  %v5560 = vsel %vm5309, %v5248, 0
  %v5563 = vsel %vm5309, %v5249, 0
  %v5566 = vsel %vm5309, %v5250, 0
  %v5569 = vsel %vm5309, %v5251, 0
  %v5572 = vsel %vm5309, %v5252, 0
  %v5575 = vsel %vm5309, %v5253, 0
  %v5578 = vsel %vm5309, %v5254, 0
  %v5581 = vsel %vm5309, %v5255, 0
  %v5584 = vsel %vm5309, %v5256, 0
  %v5587 = vsel %vm5309, %v5257, 0
  %v5590 = vsel %vm5309, %v5258, 0
  %v5593 = vsel %vm5309, %v5259, 0
  %v5596 = vsel %vm5309, %v5260, 0
  %v5599 = vsel %vm5309, %v5261, 0
  %v5602 = vsel %vm5309, %v5262, 0
  %v5605 = vsel %vm5309, %v5263, 0
  %v5608 = vsel %vm5309, %v5264, 0
  %v5611 = vsel %vm5309, %v5265, 0
  %v5614 = vsel %vm5309, %v5266, 0
  %v5617 = vsel %vm5309, %v5267, 0
  %v5620 = vsel %vm5309, %v5268, 0
  %v5623 = vsel %vm5309, %v5269, 0
  %v5626 = vsel %vm5309, %v5270, 0
  %v5629 = vsel %vm5309, %v5271, 0
  %v5632 = vsel %vm5309, %v5272, 0
  %v5635 = vsel %vm5309, %v5273, 0
  %v5638 = vsel %vm5309, %v5274, 0
  %v5641 = vsel %vm5309, %v5275, 0
  %v5644 = vsel %vm5309, %v5276, 0
  %v5647 = vsel %vm5309, %v5277, 0
  %v5650 = vsel %vm5309, %v5278, 0
  %v5653 = vsel %vm5309, %v5279, 0
  %v5656 = vsel %vm5309, %v5280, 0
  %v5659 = vsel %vm5309, %v5281, 0
  %v5662 = vsel %vm5309, %v5282, 0
  %v5665 = vsel %vm5309, %v5283, 0
  %v5668 = vsel %vm5309, %v5284, 0
  %v5671 = vsel %vm5309, %v5285, 0
  %v5674 = vsel %vm5309, %v5286, 0
  %v5677 = vsel %vm5309, %v5287, 0
  %v5680 = vsel %vm5309, %v5288, 0
  %v5683 = vsel %vm5309, %v5289, 0
  %v5686 = vsel %vm5309, %v5290, 0
  %v5689 = vsel %vm5309, %v5291, 0
  %v5692 = vsel %vm5309, %v5292, 0
  %5694 = vmatpush.msra.mxu0 0.0
  %5695 = vmatpush.msra.mxu0 0.0
  %5696 = vmatpush.msra.mxu0 0.0
  %5697 = vmatpush.msra.mxu0 0.0
  %5698 = vmatpush.msra.mxu0 %v5304
  %5699 = vmatpush.msra.mxu0 %v5303
  %5700 = vmatpush.msra.mxu0 %v5302
  %5701 = vmatpush.msra.mxu0 %v5301
  %5702 = vmatpush.msra.mxu0 %v5300
  %5703 = vmatpush.msra.mxu0 %v5299
  %5704 = vmatpush.msra.mxu0 %v5298
  %5705 = vmatpush.msra.mxu0 %v5297
  %5706 = vmatpush.msra.mxu0 %v5296
  %5707 = vmatpush.msra.mxu0 %v5295
  %5708 = vmatpush.msra.mxu0 %v5294
  %5709 = vmatpush.msra.mxu0 %v5293
  %5710 = vmatmul.f32.gmra.mxu0 %v5311
  %v5711 = vpop.f32.mrf.mxu0
  %v5712 = vadd.f32 %v5307, %v5711
  %5713 = vmatmul.f32.gmra.mxu0 %v5314
  %v5714 = vpop.f32.mrf.mxu0
  %v5715 = vadd.f32 %v5307, %v5714
  %5716 = vmatmul.f32.gmra.mxu0 %v5317
  %v5717 = vpop.f32.mrf.mxu0
  %v5718 = vadd.f32 %v5307, %v5717
  %5719 = vmatmul.f32.gmra.mxu0 %v5320
  %v5720 = vpop.f32.mrf.mxu0
  %v5721 = vadd.f32 %v5307, %v5720
  %5722 = vmatmul.f32.gmra.mxu0 %v5323
  %v5723 = vpop.f32.mrf.mxu0
  %v5724 = vadd.f32 %v5307, %v5723
  %5725 = vmatmul.f32.gmra.mxu0 %v5326
  %v5726 = vpop.f32.mrf.mxu0
  %v5727 = vadd.f32 %v5307, %v5726
  %5728 = vmatmul.f32.gmra.mxu0 %v5329
  %v5729 = vpop.f32.mrf.mxu0
  %v5730 = vadd.f32 %v5307, %v5729
  %5731 = vmatmul.f32.gmra.mxu0 %v5332
  %v5732 = vpop.f32.mrf.mxu0
  %v5733 = vadd.f32 %v5307, %v5732
  %5734 = vmatmul.f32.gmra.mxu0 %v5335
  %v5735 = vpop.f32.mrf.mxu0
  %v5736 = vadd.f32 %v5307, %v5735
  %5737 = vmatmul.f32.gmra.mxu0 %v5338
  %v5738 = vpop.f32.mrf.mxu0
  %v5739 = vadd.f32 %v5307, %v5738
  %5740 = vmatmul.f32.gmra.mxu0 %v5341
  %v5741 = vpop.f32.mrf.mxu0
  %v5742 = vadd.f32 %v5307, %v5741
  %5743 = vmatmul.f32.gmra.mxu0 %v5344
  %v5744 = vpop.f32.mrf.mxu0
  %v5745 = vadd.f32 %v5307, %v5744
  %5746 = vmatmul.f32.gmra.mxu0 %v5347
  %v5747 = vpop.f32.mrf.mxu0
  %v5748 = vadd.f32 %v5307, %v5747
  %5749 = vmatmul.f32.gmra.mxu0 %v5350
  %v5750 = vpop.f32.mrf.mxu0
  %v5751 = vadd.f32 %v5307, %v5750
  %5752 = vmatmul.f32.gmra.mxu0 %v5353
  %v5753 = vpop.f32.mrf.mxu0
  %v5754 = vadd.f32 %v5307, %v5753
  %5755 = vmatmul.f32.gmra.mxu0 %v5356
  %v5756 = vpop.f32.mrf.mxu0
  %v5757 = vadd.f32 %v5307, %v5756
  %5758 = vmatmul.f32.gmra.mxu0 %v5359
  %v5759 = vpop.f32.mrf.mxu0
  %v5760 = vadd.f32 %v5307, %v5759
  %5761 = vmatmul.f32.gmra.mxu0 %v5362
  %v5762 = vpop.f32.mrf.mxu0
  %v5763 = vadd.f32 %v5307, %v5762
  %5764 = vmatmul.f32.gmra.mxu0 %v5365
  %v5765 = vpop.f32.mrf.mxu0
  %v5766 = vadd.f32 %v5307, %v5765
  %5767 = vmatmul.f32.gmra.mxu0 %v5368
  %v5768 = vpop.f32.mrf.mxu0
  %v5769 = vadd.f32 %v5307, %v5768
  %5770 = vmatmul.f32.gmra.mxu0 %v5371
  %v5771 = vpop.f32.mrf.mxu0
  %v5772 = vadd.f32 %v5307, %v5771
  %5773 = vmatmul.f32.gmra.mxu0 %v5374
  %v5774 = vpop.f32.mrf.mxu0
  %v5775 = vadd.f32 %v5307, %v5774
  %5776 = vmatmul.f32.gmra.mxu0 %v5377
  %v5777 = vpop.f32.mrf.mxu0
  %v5778 = vadd.f32 %v5307, %v5777
  %5779 = vmatmul.f32.gmra.mxu0 %v5380
  %v5780 = vpop.f32.mrf.mxu0
  %v5781 = vadd.f32 %v5307, %v5780
  %5782 = vmatmul.f32.gmra.mxu0 %v5383
  %v5783 = vpop.f32.mrf.mxu0
  %v5784 = vadd.f32 %v5307, %v5783
  %5785 = vmatmul.f32.gmra.mxu0 %v5386
  %v5786 = vpop.f32.mrf.mxu0
  %v5787 = vadd.f32 %v5307, %v5786
  %5788 = vmatmul.f32.gmra.mxu0 %v5389
  %v5789 = vpop.f32.mrf.mxu0
  %v5790 = vadd.f32 %v5307, %v5789
  %5791 = vmatmul.f32.gmra.mxu0 %v5392
  %v5792 = vpop.f32.mrf.mxu0
  %v5793 = vadd.f32 %v5307, %v5792
  %5794 = vmatmul.f32.gmra.mxu0 %v5395
  %v5795 = vpop.f32.mrf.mxu0
  %v5796 = vadd.f32 %v5307, %v5795
  %5797 = vmatmul.f32.gmra.mxu0 %v5398
  %v5798 = vpop.f32.mrf.mxu0
  %v5799 = vadd.f32 %v5307, %v5798
  %5800 = vmatmul.f32.gmra.mxu0 %v5401
  %v5801 = vpop.f32.mrf.mxu0
  %v5802 = vadd.f32 %v5307, %v5801
  %5803 = vmatmul.f32.gmra.mxu0 %v5404
  %v5804 = vpop.f32.mrf.mxu0
  %v5805 = vadd.f32 %v5307, %v5804
  %5806 = vmatmul.f32.gmra.mxu0 %v5407
  %v5807 = vpop.f32.mrf.mxu0
  %v5808 = vadd.f32 %v5307, %v5807
  %5809 = vmatmul.f32.gmra.mxu0 %v5410
  %v5810 = vpop.f32.mrf.mxu0
  %v5811 = vadd.f32 %v5307, %v5810
  %5812 = vmatmul.f32.gmra.mxu0 %v5413
  %v5813 = vpop.f32.mrf.mxu0
  %v5814 = vadd.f32 %v5307, %v5813
  %5815 = vmatmul.f32.gmra.mxu0 %v5416
  %v5816 = vpop.f32.mrf.mxu0
  %v5817 = vadd.f32 %v5307, %v5816
  %5818 = vmatmul.f32.gmra.mxu0 %v5419
  %v5819 = vpop.f32.mrf.mxu0
  %v5820 = vadd.f32 %v5307, %v5819
  %5821 = vmatmul.f32.gmra.mxu0 %v5422
  %v5822 = vpop.f32.mrf.mxu0
  %v5823 = vadd.f32 %v5307, %v5822
  %5824 = vmatmul.f32.gmra.mxu0 %v5425
  %v5825 = vpop.f32.mrf.mxu0
  %v5826 = vadd.f32 %v5307, %v5825
  %5827 = vmatmul.f32.gmra.mxu0 %v5428
  %v5828 = vpop.f32.mrf.mxu0
  %v5829 = vadd.f32 %v5307, %v5828
  %5830 = vmatmul.f32.gmra.mxu0 %v5431
  %v5831 = vpop.f32.mrf.mxu0
  %v5832 = vadd.f32 %v5307, %v5831
  %5833 = vmatmul.f32.gmra.mxu0 %v5434
  %v5834 = vpop.f32.mrf.mxu0
  %v5835 = vadd.f32 %v5307, %v5834
  %5836 = vmatmul.f32.gmra.mxu0 %v5437
  %v5837 = vpop.f32.mrf.mxu0
  %v5838 = vadd.f32 %v5307, %v5837
  %5839 = vmatmul.f32.gmra.mxu0 %v5440
  %v5840 = vpop.f32.mrf.mxu0
  %v5841 = vadd.f32 %v5307, %v5840
  %5842 = vmatmul.f32.gmra.mxu0 %v5443
  %v5843 = vpop.f32.mrf.mxu0
  %v5844 = vadd.f32 %v5307, %v5843
  %5845 = vmatmul.f32.gmra.mxu0 %v5446
  %v5846 = vpop.f32.mrf.mxu0
  %v5847 = vadd.f32 %v5307, %v5846
  %5848 = vmatmul.f32.gmra.mxu0 %v5449
  %v5849 = vpop.f32.mrf.mxu0
  %v5850 = vadd.f32 %v5307, %v5849
  %5851 = vmatmul.f32.gmra.mxu0 %v5452
  %v5852 = vpop.f32.mrf.mxu0
  %v5853 = vadd.f32 %v5307, %v5852
  %5854 = vmatmul.f32.gmra.mxu0 %v5455
  %v5855 = vpop.f32.mrf.mxu0
  %v5856 = vadd.f32 %v5307, %v5855
  %5857 = vmatmul.f32.gmra.mxu0 %v5458
  %v5858 = vpop.f32.mrf.mxu0
  %v5859 = vadd.f32 %v5307, %v5858
  %5860 = vmatmul.f32.gmra.mxu0 %v5461
  %v5861 = vpop.f32.mrf.mxu0
  %v5862 = vadd.f32 %v5307, %v5861
  %5863 = vmatmul.f32.gmra.mxu0 %v5464
  %v5864 = vpop.f32.mrf.mxu0
  %v5865 = vadd.f32 %v5307, %v5864
  %5866 = vmatmul.f32.gmra.mxu0 %v5467
  %v5867 = vpop.f32.mrf.mxu0
  %v5868 = vadd.f32 %v5307, %v5867
  %5869 = vmatmul.f32.gmra.mxu0 %v5470
  %v5870 = vpop.f32.mrf.mxu0
  %v5871 = vadd.f32 %v5307, %v5870
  %5872 = vmatmul.f32.gmra.mxu0 %v5473
  %v5873 = vpop.f32.mrf.mxu0
  %v5874 = vadd.f32 %v5307, %v5873
  %5875 = vmatmul.f32.gmra.mxu0 %v5476
  %v5876 = vpop.f32.mrf.mxu0
  %v5877 = vadd.f32 %v5307, %v5876
  %5878 = vmatmul.f32.gmra.mxu0 %v5479
  %v5879 = vpop.f32.mrf.mxu0
  %v5880 = vadd.f32 %v5307, %v5879
  %5881 = vmatmul.f32.gmra.mxu0 %v5482
  %v5882 = vpop.f32.mrf.mxu0
  %v5883 = vadd.f32 %v5307, %v5882
  %5884 = vmatmul.f32.gmra.mxu0 %v5485
  %v5885 = vpop.f32.mrf.mxu0
  %v5886 = vadd.f32 %v5307, %v5885
  %5887 = vmatmul.f32.gmra.mxu0 %v5488
  %v5888 = vpop.f32.mrf.mxu0
  %v5889 = vadd.f32 %v5307, %v5888
  %5890 = vmatmul.f32.gmra.mxu0 %v5491
  %v5891 = vpop.f32.mrf.mxu0
  %v5892 = vadd.f32 %v5307, %v5891
  %5893 = vmatmul.f32.gmra.mxu0 %v5494
  %v5894 = vpop.f32.mrf.mxu0
  %v5895 = vadd.f32 %v5307, %v5894
  %5896 = vmatmul.f32.gmra.mxu0 %v5497
  %v5897 = vpop.f32.mrf.mxu0
  %v5898 = vadd.f32 %v5307, %v5897
  %5899 = vmatmul.f32.gmra.mxu0 %v5500
  %v5900 = vpop.f32.mrf.mxu0
  %v5901 = vadd.f32 %v5307, %v5900
  %5902 = vmatmul.f32.gmra.mxu0 %v5503
  %v5903 = vpop.f32.mrf.mxu0
  %v5904 = vadd.f32 %v5307, %v5903
  %5905 = vmatmul.f32.gmra.mxu0 %v5506
  %v5906 = vpop.f32.mrf.mxu0
  %v5907 = vadd.f32 %v5307, %v5906
  %5908 = vmatmul.f32.gmra.mxu0 %v5509
  %v5909 = vpop.f32.mrf.mxu0
  %v5910 = vadd.f32 %v5307, %v5909
  %5911 = vmatmul.f32.gmra.mxu0 %v5512
  %v5912 = vpop.f32.mrf.mxu0
  %v5913 = vadd.f32 %v5307, %v5912
  %5914 = vmatmul.f32.gmra.mxu0 %v5515
  %v5915 = vpop.f32.mrf.mxu0
  %v5916 = vadd.f32 %v5307, %v5915
  %5917 = vmatmul.f32.gmra.mxu0 %v5518
  %v5918 = vpop.f32.mrf.mxu0
  %v5919 = vadd.f32 %v5307, %v5918
  %5920 = vmatmul.f32.gmra.mxu0 %v5521
  %v5921 = vpop.f32.mrf.mxu0
  %v5922 = vadd.f32 %v5307, %v5921
  %5923 = vmatmul.f32.gmra.mxu0 %v5524
  %v5924 = vpop.f32.mrf.mxu0
  %v5925 = vadd.f32 %v5307, %v5924
  %5926 = vmatmul.f32.gmra.mxu0 %v5527
  %v5927 = vpop.f32.mrf.mxu0
  %v5928 = vadd.f32 %v5307, %v5927
  %5929 = vmatmul.f32.gmra.mxu0 %v5530
  %v5930 = vpop.f32.mrf.mxu0
  %v5931 = vadd.f32 %v5307, %v5930
  %5932 = vmatmul.f32.gmra.mxu0 %v5533
  %v5933 = vpop.f32.mrf.mxu0
  %v5934 = vadd.f32 %v5307, %v5933
  %5935 = vmatmul.f32.gmra.mxu0 %v5536
  %v5936 = vpop.f32.mrf.mxu0
  %v5937 = vadd.f32 %v5307, %v5936
  %5938 = vmatmul.f32.gmra.mxu0 %v5539
  %v5939 = vpop.f32.mrf.mxu0
  %v5940 = vadd.f32 %v5307, %v5939
  %5941 = vmatmul.f32.gmra.mxu0 %v5542
  %v5942 = vpop.f32.mrf.mxu0
  %v5943 = vadd.f32 %v5307, %v5942
  %5944 = vmatmul.f32.gmra.mxu0 %v5545
  %v5945 = vpop.f32.mrf.mxu0
  %v5946 = vadd.f32 %v5307, %v5945
  %5947 = vmatmul.f32.gmra.mxu0 %v5548
  %v5948 = vpop.f32.mrf.mxu0
  %v5949 = vadd.f32 %v5307, %v5948
  %5950 = vmatmul.f32.gmra.mxu0 %v5551
  %v5951 = vpop.f32.mrf.mxu0
  %v5952 = vadd.f32 %v5307, %v5951
  %5953 = vmatmul.f32.gmra.mxu0 %v5554
  %v5954 = vpop.f32.mrf.mxu0
  %v5955 = vadd.f32 %v5307, %v5954
  %5956 = vmatmul.f32.gmra.mxu0 %v5557
  %v5957 = vpop.f32.mrf.mxu0
  %v5958 = vadd.f32 %v5307, %v5957
  %5959 = vmatmul.f32.gmra.mxu0 %v5560
  %v5960 = vpop.f32.mrf.mxu0
  %v5961 = vadd.f32 %v5307, %v5960
  %5962 = vmatmul.f32.gmra.mxu0 %v5563
  %v5963 = vpop.f32.mrf.mxu0
  %v5964 = vadd.f32 %v5307, %v5963
  %5965 = vmatmul.f32.gmra.mxu0 %v5566
  %v5966 = vpop.f32.mrf.mxu0
  %v5967 = vadd.f32 %v5307, %v5966
  %5968 = vmatmul.f32.gmra.mxu0 %v5569
  %v5969 = vpop.f32.mrf.mxu0
  %v5970 = vadd.f32 %v5307, %v5969
  %5971 = vmatmul.f32.gmra.mxu0 %v5572
  %v5972 = vpop.f32.mrf.mxu0
  %v5973 = vadd.f32 %v5307, %v5972
  %5974 = vmatmul.f32.gmra.mxu0 %v5575
  %v5975 = vpop.f32.mrf.mxu0
  %v5976 = vadd.f32 %v5307, %v5975
  %5977 = vmatmul.f32.gmra.mxu0 %v5578
  %v5978 = vpop.f32.mrf.mxu0
  %v5979 = vadd.f32 %v5307, %v5978
  %5980 = vmatmul.f32.gmra.mxu0 %v5581
  %v5981 = vpop.f32.mrf.mxu0
  %v5982 = vadd.f32 %v5307, %v5981
  %5983 = vmatmul.f32.gmra.mxu0 %v5584
  %v5984 = vpop.f32.mrf.mxu0
  %v5985 = vadd.f32 %v5307, %v5984
  %5986 = vmatmul.f32.gmra.mxu0 %v5587
  %v5987 = vpop.f32.mrf.mxu0
  %v5988 = vadd.f32 %v5307, %v5987
  %5989 = vmatmul.f32.gmra.mxu0 %v5590
  %v5990 = vpop.f32.mrf.mxu0
  %v5991 = vadd.f32 %v5307, %v5990
  %5992 = vmatmul.f32.gmra.mxu0 %v5593
  %v5993 = vpop.f32.mrf.mxu0
  %v5994 = vadd.f32 %v5307, %v5993
  %5995 = vmatmul.f32.gmra.mxu0 %v5596
  %v5996 = vpop.f32.mrf.mxu0
  %v5997 = vadd.f32 %v5307, %v5996
  %5998 = vmatmul.f32.gmra.mxu0 %v5599
  %v5999 = vpop.f32.mrf.mxu0
  %v6000 = vadd.f32 %v5307, %v5999
  %6001 = vmatmul.f32.gmra.mxu0 %v5602
  %v6002 = vpop.f32.mrf.mxu0
  %v6003 = vadd.f32 %v5307, %v6002
  %6004 = vmatmul.f32.gmra.mxu0 %v5605
  %v6005 = vpop.f32.mrf.mxu0
  %v6006 = vadd.f32 %v5307, %v6005
  %6007 = vmatmul.f32.gmra.mxu0 %v5608
  %v6008 = vpop.f32.mrf.mxu0
  %v6009 = vadd.f32 %v5307, %v6008
  %6010 = vmatmul.f32.gmra.mxu0 %v5611
  %v6011 = vpop.f32.mrf.mxu0
  %v6012 = vadd.f32 %v5307, %v6011
  %6013 = vmatmul.f32.gmra.mxu0 %v5614
  %v6014 = vpop.f32.mrf.mxu0
  %v6015 = vadd.f32 %v5307, %v6014
  %6016 = vmatmul.f32.gmra.mxu0 %v5617
  %v6017 = vpop.f32.mrf.mxu0
  %v6018 = vadd.f32 %v5307, %v6017
  %6019 = vmatmul.f32.gmra.mxu0 %v5620
  %v6020 = vpop.f32.mrf.mxu0
  %v6021 = vadd.f32 %v5307, %v6020
  %6022 = vmatmul.f32.gmra.mxu0 %v5623
  %v6023 = vpop.f32.mrf.mxu0
  %v6024 = vadd.f32 %v5307, %v6023
  %6025 = vmatmul.f32.gmra.mxu0 %v5626
  %v6026 = vpop.f32.mrf.mxu0
  %v6027 = vadd.f32 %v5307, %v6026
  %6028 = vmatmul.f32.gmra.mxu0 %v5629
  %v6029 = vpop.f32.mrf.mxu0
  %v6030 = vadd.f32 %v5307, %v6029
  %6031 = vmatmul.f32.gmra.mxu0 %v5632
  %v6032 = vpop.f32.mrf.mxu0
  %v6033 = vadd.f32 %v5307, %v6032
  %6034 = vmatmul.f32.gmra.mxu0 %v5635
  %v6035 = vpop.f32.mrf.mxu0
  %v6036 = vadd.f32 %v5307, %v6035
  %6037 = vmatmul.f32.gmra.mxu0 %v5638
  %v6038 = vpop.f32.mrf.mxu0
  %v6039 = vadd.f32 %v5307, %v6038
  %6040 = vmatmul.f32.gmra.mxu0 %v5641
  %v6041 = vpop.f32.mrf.mxu0
  %v6042 = vadd.f32 %v5307, %v6041
  %6043 = vmatmul.f32.gmra.mxu0 %v5644
  %v6044 = vpop.f32.mrf.mxu0
  %v6045 = vadd.f32 %v5307, %v6044
  %6046 = vmatmul.f32.gmra.mxu0 %v5647
  %v6047 = vpop.f32.mrf.mxu0
  %v6048 = vadd.f32 %v5307, %v6047
  %6049 = vmatmul.f32.gmra.mxu0 %v5650
  %v6050 = vpop.f32.mrf.mxu0
  %v6051 = vadd.f32 %v5307, %v6050
  %6052 = vmatmul.f32.gmra.mxu0 %v5653
  %v6053 = vpop.f32.mrf.mxu0
  %v6054 = vadd.f32 %v5307, %v6053
  %6055 = vmatmul.f32.gmra.mxu0 %v5656
  %v6056 = vpop.f32.mrf.mxu0
  %v6057 = vadd.f32 %v5307, %v6056
  %6058 = vmatmul.f32.gmra.mxu0 %v5659
  %v6059 = vpop.f32.mrf.mxu0
  %v6060 = vadd.f32 %v5307, %v6059
  %6061 = vmatmul.f32.gmra.mxu0 %v5662
  %v6062 = vpop.f32.mrf.mxu0
  %v6063 = vadd.f32 %v5307, %v6062
  %6064 = vmatmul.f32.gmra.mxu0 %v5665
  %v6065 = vpop.f32.mrf.mxu0
  %v6066 = vadd.f32 %v5307, %v6065
  %6067 = vmatmul.f32.gmra.mxu0 %v5668
  %v6068 = vpop.f32.mrf.mxu0
  %v6069 = vadd.f32 %v5307, %v6068
  %6070 = vmatmul.f32.gmra.mxu0 %v5671
  %v6071 = vpop.f32.mrf.mxu0
  %v6072 = vadd.f32 %v5307, %v6071
  %6073 = vmatmul.f32.gmra.mxu0 %v5674
  %v6074 = vpop.f32.mrf.mxu0
  %v6075 = vadd.f32 %v5307, %v6074
  %6076 = vmatmul.f32.gmra.mxu0 %v5677
  %v6077 = vpop.f32.mrf.mxu0
  %v6078 = vadd.f32 %v5307, %v6077
  %6079 = vmatmul.f32.gmra.mxu0 %v5680
  %v6080 = vpop.f32.mrf.mxu0
  %v6081 = vadd.f32 %v5307, %v6080
  %6082 = vmatmul.f32.gmra.mxu0 %v5683
  %v6083 = vpop.f32.mrf.mxu0
  %v6084 = vadd.f32 %v5307, %v6083
  %6085 = vmatmul.f32.gmra.mxu0 %v5686
  %v6086 = vpop.f32.mrf.mxu0
  %v6087 = vadd.f32 %v5307, %v6086
  %6088 = vmatmul.f32.gmra.mxu0 %v5689
  %v6089 = vpop.f32.mrf.mxu0
  %v6090 = vadd.f32 %v5307, %v6089
  %6091 = vmatmul.f32.gmra.mxu0 %v5692
  %v6092 = vpop.f32.mrf.mxu0
  %v6093 = vadd.f32 %v5307, %v6092
  %6094 = vdwg.mxu0
  %v6095 = vmax.f32 %v5712, 0.0
  %v6096 = vmax.f32 %v5715, 0.0
  %v6097 = vmax.f32 %v5718, 0.0
  %v6098 = vmax.f32 %v5721, 0.0
  %v6099 = vmax.f32 %v5724, 0.0
  %v6100 = vmax.f32 %v5727, 0.0
  %v6101 = vmax.f32 %v5730, 0.0
  %v6102 = vmax.f32 %v5733, 0.0
  %v6103 = vmax.f32 %v5736, 0.0
  %v6104 = vmax.f32 %v5739, 0.0
  %v6105 = vmax.f32 %v5742, 0.0
  %v6106 = vmax.f32 %v5745, 0.0
  %v6107 = vmax.f32 %v5748, 0.0
  %v6108 = vmax.f32 %v5751, 0.0
  %v6109 = vmax.f32 %v5754, 0.0
  %v6110 = vmax.f32 %v5757, 0.0
  %v6111 = vmax.f32 %v5760, 0.0
  %v6112 = vmax.f32 %v5763, 0.0
  %v6113 = vmax.f32 %v5766, 0.0
  %v6114 = vmax.f32 %v5769, 0.0
  %v6115 = vmax.f32 %v5772, 0.0
  %v6116 = vmax.f32 %v5775, 0.0
  %v6117 = vmax.f32 %v5778, 0.0
  %v6118 = vmax.f32 %v5781, 0.0
  %v6119 = vmax.f32 %v5784, 0.0
  %v6120 = vmax.f32 %v5787, 0.0
  %v6121 = vmax.f32 %v5790, 0.0
  %v6122 = vmax.f32 %v5793, 0.0
  %v6123 = vmax.f32 %v5796, 0.0
  %v6124 = vmax.f32 %v5799, 0.0
  %v6125 = vmax.f32 %v5802, 0.0
  %v6126 = vmax.f32 %v5805, 0.0
  %v6127 = vmax.f32 %v5808, 0.0
  %v6128 = vmax.f32 %v5811, 0.0
  %v6129 = vmax.f32 %v5814, 0.0
  %v6130 = vmax.f32 %v5817, 0.0
  %v6131 = vmax.f32 %v5820, 0.0
  %v6132 = vmax.f32 %v5823, 0.0
  %v6133 = vmax.f32 %v5826, 0.0
  %v6134 = vmax.f32 %v5829, 0.0
  %v6135 = vmax.f32 %v5832, 0.0
  %v6136 = vmax.f32 %v5835, 0.0
  %v6137 = vmax.f32 %v5838, 0.0
  %v6138 = vmax.f32 %v5841, 0.0
  %v6139 = vmax.f32 %v5844, 0.0
  %v6140 = vmax.f32 %v5847, 0.0
  %v6141 = vmax.f32 %v5850, 0.0
  %v6142 = vmax.f32 %v5853, 0.0
  %v6143 = vmax.f32 %v5856, 0.0
  %v6144 = vmax.f32 %v5859, 0.0
  %v6145 = vmax.f32 %v5862, 0.0
  %v6146 = vmax.f32 %v5865, 0.0
  %v6147 = vmax.f32 %v5868, 0.0
  %v6148 = vmax.f32 %v5871, 0.0
  %v6149 = vmax.f32 %v5874, 0.0
  %v6150 = vmax.f32 %v5877, 0.0
  %v6151 = vmax.f32 %v5880, 0.0
  %v6152 = vmax.f32 %v5883, 0.0
  %v6153 = vmax.f32 %v5886, 0.0
  %v6154 = vmax.f32 %v5889, 0.0
  %v6155 = vmax.f32 %v5892, 0.0
  %v6156 = vmax.f32 %v5895, 0.0
  %v6157 = vmax.f32 %v5898, 0.0
  %v6158 = vmax.f32 %v5901, 0.0
  %v6159 = vmax.f32 %v5904, 0.0
  %v6160 = vmax.f32 %v5907, 0.0
  %v6161 = vmax.f32 %v5910, 0.0
  %v6162 = vmax.f32 %v5913, 0.0
  %v6163 = vmax.f32 %v5916, 0.0
  %v6164 = vmax.f32 %v5919, 0.0
  %v6165 = vmax.f32 %v5922, 0.0
  %v6166 = vmax.f32 %v5925, 0.0
  %v6167 = vmax.f32 %v5928, 0.0
  %v6168 = vmax.f32 %v5931, 0.0
  %v6169 = vmax.f32 %v5934, 0.0
  %v6170 = vmax.f32 %v5937, 0.0
  %v6171 = vmax.f32 %v5940, 0.0
  %v6172 = vmax.f32 %v5943, 0.0
  %v6173 = vmax.f32 %v5946, 0.0
  %v6174 = vmax.f32 %v5949, 0.0
  %v6175 = vmax.f32 %v5952, 0.0
  %v6176 = vmax.f32 %v5955, 0.0
  %v6177 = vmax.f32 %v5958, 0.0
  %v6178 = vmax.f32 %v5961, 0.0
  %v6179 = vmax.f32 %v5964, 0.0
  %v6180 = vmax.f32 %v5967, 0.0
  %v6181 = vmax.f32 %v5970, 0.0
  %v6182 = vmax.f32 %v5973, 0.0
  %v6183 = vmax.f32 %v5976, 0.0
  %v6184 = vmax.f32 %v5979, 0.0
  %v6185 = vmax.f32 %v5982, 0.0
  %v6186 = vmax.f32 %v5985, 0.0
  %v6187 = vmax.f32 %v5988, 0.0
  %v6188 = vmax.f32 %v5991, 0.0
  %v6189 = vmax.f32 %v5994, 0.0
  %v6190 = vmax.f32 %v5997, 0.0
  %v6191 = vmax.f32 %v6000, 0.0
  %v6192 = vmax.f32 %v6003, 0.0
  %v6193 = vmax.f32 %v6006, 0.0
  %v6194 = vmax.f32 %v6009, 0.0
  %v6195 = vmax.f32 %v6012, 0.0
  %v6196 = vmax.f32 %v6015, 0.0
  %v6197 = vmax.f32 %v6018, 0.0
  %v6198 = vmax.f32 %v6021, 0.0
  %v6199 = vmax.f32 %v6024, 0.0
  %v6200 = vmax.f32 %v6027, 0.0
  %v6201 = vmax.f32 %v6030, 0.0
  %v6202 = vmax.f32 %v6033, 0.0
  %v6203 = vmax.f32 %v6036, 0.0
  %v6204 = vmax.f32 %v6039, 0.0
  %v6205 = vmax.f32 %v6042, 0.0
  %v6206 = vmax.f32 %v6045, 0.0
  %v6207 = vmax.f32 %v6048, 0.0
  %v6208 = vmax.f32 %v6051, 0.0
  %v6209 = vmax.f32 %v6054, 0.0
  %v6210 = vmax.f32 %v6057, 0.0
  %v6211 = vmax.f32 %v6060, 0.0
  %v6212 = vmax.f32 %v6063, 0.0
  %v6213 = vmax.f32 %v6066, 0.0
  %v6214 = vmax.f32 %v6069, 0.0
  %v6215 = vmax.f32 %v6072, 0.0
  %v6216 = vmax.f32 %v6075, 0.0
  %v6217 = vmax.f32 %v6078, 0.0
  %v6218 = vmax.f32 %v6081, 0.0
  %v6219 = vmax.f32 %v6084, 0.0
  %v6220 = vmax.f32 %v6087, 0.0
  %v6221 = vmax.f32 %v6090, 0.0
  %v6222 = vmax.f32 %v6093, 0.0
  %v6223 = vld [vmem:[%s9] sm:$0xf]
  %v6224 = vld [vmem:[%s10] sm:$0xf]
  %6226 = vset.pattern.permute.xlu0 0
  %6227 = vperm.xlu0 %6226, %v6224
  %v6228 = vpop.permute.xlu0 %6227
  %vm6230 = vcmask 130048
  %v6232 = vsel %vm6230, %v6223, 0
  %v6235 = vsel %vm6230, %v6095, 0
  %v6238 = vsel %vm6230, %v6096, 0
  %v6241 = vsel %vm6230, %v6097, 0
  %v6244 = vsel %vm6230, %v6098, 0
  %v6247 = vsel %vm6230, %v6099, 0
  %v6250 = vsel %vm6230, %v6100, 0
  %v6253 = vsel %vm6230, %v6101, 0
  %v6256 = vsel %vm6230, %v6102, 0
  %v6259 = vsel %vm6230, %v6103, 0
  %v6262 = vsel %vm6230, %v6104, 0
  %v6265 = vsel %vm6230, %v6105, 0
  %v6268 = vsel %vm6230, %v6106, 0
  %v6271 = vsel %vm6230, %v6107, 0
  %v6274 = vsel %vm6230, %v6108, 0
  %v6277 = vsel %vm6230, %v6109, 0
  %v6280 = vsel %vm6230, %v6110, 0
  %v6283 = vsel %vm6230, %v6111, 0
  %v6286 = vsel %vm6230, %v6112, 0
  %v6289 = vsel %vm6230, %v6113, 0
  %v6292 = vsel %vm6230, %v6114, 0
  %v6295 = vsel %vm6230, %v6115, 0
  %v6298 = vsel %vm6230, %v6116, 0
  %v6301 = vsel %vm6230, %v6117, 0
  %v6304 = vsel %vm6230, %v6118, 0
  %v6307 = vsel %vm6230, %v6119, 0
  %v6310 = vsel %vm6230, %v6120, 0
  %v6313 = vsel %vm6230, %v6121, 0
  %v6316 = vsel %vm6230, %v6122, 0
  %v6319 = vsel %vm6230, %v6123, 0
  %v6322 = vsel %vm6230, %v6124, 0
  %v6325 = vsel %vm6230, %v6125, 0
  %v6328 = vsel %vm6230, %v6126, 0
  %v6331 = vsel %vm6230, %v6127, 0
  %v6334 = vsel %vm6230, %v6128, 0
  %v6337 = vsel %vm6230, %v6129, 0
  %v6340 = vsel %vm6230, %v6130, 0
  %v6343 = vsel %vm6230, %v6131, 0
  %v6346 = vsel %vm6230, %v6132, 0
  %v6349 = vsel %vm6230, %v6133, 0
  %v6352 = vsel %vm6230, %v6134, 0
  %v6355 = vsel %vm6230, %v6135, 0
  %v6358 = vsel %vm6230, %v6136, 0
  %v6361 = vsel %vm6230, %v6137, 0
  %v6364 = vsel %vm6230, %v6138, 0
  %v6367 = vsel %vm6230, %v6139, 0
  %v6370 = vsel %vm6230, %v6140, 0
  %v6373 = vsel %vm6230, %v6141, 0
  %v6376 = vsel %vm6230, %v6142, 0
  %v6379 = vsel %vm6230, %v6143, 0
  %v6382 = vsel %vm6230, %v6144, 0
  %v6385 = vsel %vm6230, %v6145, 0
  %v6388 = vsel %vm6230, %v6146, 0
  %v6391 = vsel %vm6230, %v6147, 0
  %v6394 = vsel %vm6230, %v6148, 0
  %v6397 = vsel %vm6230, %v6149, 0
  %v6400 = vsel %vm6230, %v6150, 0
  %v6403 = vsel %vm6230, %v6151, 0
  %v6406 = vsel %vm6230, %v6152, 0
  %v6409 = vsel %vm6230, %v6153, 0
  %v6412 = vsel %vm6230, %v6154, 0
  %v6415 = vsel %vm6230, %v6155, 0
  %v6418 = vsel %vm6230, %v6156, 0
  %v6421 = vsel %vm6230, %v6157, 0
  %v6424 = vsel %vm6230, %v6158, 0
  %v6427 = vsel %vm6230, %v6159, 0
  %v6430 = vsel %vm6230, %v6160, 0
  %v6433 = vsel %vm6230, %v6161, 0
  %v6436 = vsel %vm6230, %v6162, 0
  %v6439 = vsel %vm6230, %v6163, 0
  %v6442 = vsel %vm6230, %v6164, 0
  %v6445 = vsel %vm6230, %v6165, 0
  %v6448 = vsel %vm6230, %v6166, 0
  %v6451 = vsel %vm6230, %v6167, 0
  %v6454 = vsel %vm6230, %v6168, 0
  %v6457 = vsel %vm6230, %v6169, 0
  %v6460 = vsel %vm6230, %v6170, 0
  %v6463 = vsel %vm6230, %v6171, 0
  %v6466 = vsel %vm6230, %v6172, 0
  %v6469 = vsel %vm6230, %v6173, 0
  %v6472 = vsel %vm6230, %v6174, 0
  %v6475 = vsel %vm6230, %v6175, 0
  %v6478 = vsel %vm6230, %v6176, 0
  %v6481 = vsel %vm6230, %v6177, 0
  %v6484 = vsel %vm6230, %v6178, 0
  %v6487 = vsel %vm6230, %v6179, 0
  %v6490 = vsel %vm6230, %v6180, 0
  %v6493 = vsel %vm6230, %v6181, 0
  %v6496 = vsel %vm6230, %v6182, 0
  %v6499 = vsel %vm6230, %v6183, 0
  %v6502 = vsel %vm6230, %v6184, 0
  %v6505 = vsel %vm6230, %v6185, 0
  %v6508 = vsel %vm6230, %v6186, 0
  %v6511 = vsel %vm6230, %v6187, 0
  %v6514 = vsel %vm6230, %v6188, 0
  %v6517 = vsel %vm6230, %v6189, 0
  %v6520 = vsel %vm6230, %v6190, 0
  %v6523 = vsel %vm6230, %v6191, 0
  %v6526 = vsel %vm6230, %v6192, 0
  %v6529 = vsel %vm6230, %v6193, 0
  %v6532 = vsel %vm6230, %v6194, 0
  %v6535 = vsel %vm6230, %v6195, 0
  %v6538 = vsel %vm6230, %v6196, 0
  %v6541 = vsel %vm6230, %v6197, 0
  %v6544 = vsel %vm6230, %v6198, 0
  %v6547 = vsel %vm6230, %v6199, 0
  %v6550 = vsel %vm6230, %v6200, 0
  %v6553 = vsel %vm6230, %v6201, 0
  %v6556 = vsel %vm6230, %v6202, 0
  %v6559 = vsel %vm6230, %v6203, 0
  %v6562 = vsel %vm6230, %v6204, 0
  %v6565 = vsel %vm6230, %v6205, 0
  %v6568 = vsel %vm6230, %v6206, 0
  %v6571 = vsel %vm6230, %v6207, 0
  %v6574 = vsel %vm6230, %v6208, 0
  %v6577 = vsel %vm6230, %v6209, 0
  %v6580 = vsel %vm6230, %v6210, 0
  %v6583 = vsel %vm6230, %v6211, 0
  %v6586 = vsel %vm6230, %v6212, 0
  %v6589 = vsel %vm6230, %v6213, 0
  %v6592 = vsel %vm6230, %v6214, 0
  %v6595 = vsel %vm6230, %v6215, 0
  %v6598 = vsel %vm6230, %v6216, 0
  %v6601 = vsel %vm6230, %v6217, 0
  %v6604 = vsel %vm6230, %v6218, 0
  %v6607 = vsel %vm6230, %v6219, 0
  %v6610 = vsel %vm6230, %v6220, 0
  %v6613 = vsel %vm6230, %v6221, 0
  %v6616 = vsel %vm6230, %v6222, 0
  %6618 = vmatpush.xpose.msra.mxu0 %v6280
  %6619 = vmatpush.xpose.msra.mxu0 %v6277
  %6620 = vmatpush.xpose.msra.mxu0 %v6274
  %6621 = vmatpush.xpose.msra.mxu0 %v6271
  %6622 = vmatpush.xpose.msra.mxu0 %v6268
  %6623 = vmatpush.xpose.msra.mxu0 %v6265
  %6624 = vmatpush.xpose.msra.mxu0 %v6262
  %6625 = vmatpush.xpose.msra.mxu0 %v6259
  %6626 = vmatpush.xpose.msra.mxu0 %v6256
  %6627 = vmatpush.xpose.msra.mxu0 %v6253
  %6628 = vmatpush.xpose.msra.mxu0 %v6250
  %6629 = vmatpush.xpose.msra.mxu0 %v6247
  %6630 = vmatpush.xpose.msra.mxu0 %v6244
  %6631 = vmatpush.xpose.msra.mxu0 %v6241
  %6632 = vmatpush.xpose.msra.mxu0 %v6238
  %6633 = vmatpush.xpose.msra.mxu0 %v6235
  %6634 = vmatmul.f32.gmra.mxu0 %v6232
  %v6635 = vpop.f32.mrf.mxu0
  %v6636 = vadd.f32 %v6228, %v6635
  %6637 = vdwg.mxu0
  %6638 = vmatpush.xpose.msra.mxu0 %v6328
  %6639 = vmatpush.xpose.msra.mxu0 %v6325
  %6640 = vmatpush.xpose.msra.mxu0 %v6322
  %6641 = vmatpush.xpose.msra.mxu0 %v6319
  %6642 = vmatpush.xpose.msra.mxu0 %v6316
  %6643 = vmatpush.xpose.msra.mxu0 %v6313
  %6644 = vmatpush.xpose.msra.mxu0 %v6310
  %6645 = vmatpush.xpose.msra.mxu0 %v6307
  %6646 = vmatpush.xpose.msra.mxu0 %v6304
  %6647 = vmatpush.xpose.msra.mxu0 %v6301
  %6648 = vmatpush.xpose.msra.mxu0 %v6298
  %6649 = vmatpush.xpose.msra.mxu0 %v6295
  %6650 = vmatpush.xpose.msra.mxu0 %v6292
  %6651 = vmatpush.xpose.msra.mxu0 %v6289
  %6652 = vmatpush.xpose.msra.mxu0 %v6286
  %6653 = vmatpush.xpose.msra.mxu0 %v6283
  %6654 = vmatmul.f32.gmra.mxu0 %v6232
  %v6655 = vpop.f32.mrf.mxu0
  %v6656 = vadd.f32 %v6228, %v6655
  %6657 = vdwg.mxu0
  %6658 = vmatpush.xpose.msra.mxu0 %v6376
  %6659 = vmatpush.xpose.msra.mxu0 %v6373
  %6660 = vmatpush.xpose.msra.mxu0 %v6370
  %6661 = vmatpush.xpose.msra.mxu0 %v6367
  %6662 = vmatpush.xpose.msra.mxu0 %v6364
  %6663 = vmatpush.xpose.msra.mxu0 %v6361
  %6664 = vmatpush.xpose.msra.mxu0 %v6358
  %6665 = vmatpush.xpose.msra.mxu0 %v6355
  %6666 = vmatpush.xpose.msra.mxu0 %v6352
  %6667 = vmatpush.xpose.msra.mxu0 %v6349
  %6668 = vmatpush.xpose.msra.mxu0 %v6346
  %6669 = vmatpush.xpose.msra.mxu0 %v6343
  %6670 = vmatpush.xpose.msra.mxu0 %v6340
  %6671 = vmatpush.xpose.msra.mxu0 %v6337
  %6672 = vmatpush.xpose.msra.mxu0 %v6334
  %6673 = vmatpush.xpose.msra.mxu0 %v6331
  %6674 = vmatmul.f32.gmra.mxu0 %v6232
  %v6675 = vpop.f32.mrf.mxu0
  %v6676 = vadd.f32 %v6228, %v6675
  %6677 = vdwg.mxu0
  %6678 = vmatpush.xpose.msra.mxu0 %v6424
  %6679 = vmatpush.xpose.msra.mxu0 %v6421
  %6680 = vmatpush.xpose.msra.mxu0 %v6418
  %6681 = vmatpush.xpose.msra.mxu0 %v6415
  %6682 = vmatpush.xpose.msra.mxu0 %v6412
  %6683 = vmatpush.xpose.msra.mxu0 %v6409
  %6684 = vmatpush.xpose.msra.mxu0 %v6406
  %6685 = vmatpush.xpose.msra.mxu0 %v6403
  %6686 = vmatpush.xpose.msra.mxu0 %v6400
  %6687 = vmatpush.xpose.msra.mxu0 %v6397
  %6688 = vmatpush.xpose.msra.mxu0 %v6394
  %6689 = vmatpush.xpose.msra.mxu0 %v6391
  %6690 = vmatpush.xpose.msra.mxu0 %v6388
  %6691 = vmatpush.xpose.msra.mxu0 %v6385
  %6692 = vmatpush.xpose.msra.mxu0 %v6382
  %6693 = vmatpush.xpose.msra.mxu0 %v6379
  %6694 = vmatmul.f32.gmra.mxu0 %v6232
  %v6695 = vpop.f32.mrf.mxu0
  %v6696 = vadd.f32 %v6228, %v6695
  %6697 = vdwg.mxu0
  %6698 = vmatpush.xpose.msra.mxu0 %v6472
  %6699 = vmatpush.xpose.msra.mxu0 %v6469
  %6700 = vmatpush.xpose.msra.mxu0 %v6466
  %6701 = vmatpush.xpose.msra.mxu0 %v6463
  %6702 = vmatpush.xpose.msra.mxu0 %v6460
  %6703 = vmatpush.xpose.msra.mxu0 %v6457
  %6704 = vmatpush.xpose.msra.mxu0 %v6454
  %6705 = vmatpush.xpose.msra.mxu0 %v6451
  %6706 = vmatpush.xpose.msra.mxu0 %v6448
  %6707 = vmatpush.xpose.msra.mxu0 %v6445
  %6708 = vmatpush.xpose.msra.mxu0 %v6442
  %6709 = vmatpush.xpose.msra.mxu0 %v6439
  %6710 = vmatpush.xpose.msra.mxu0 %v6436
  %6711 = vmatpush.xpose.msra.mxu0 %v6433
  %6712 = vmatpush.xpose.msra.mxu0 %v6430
  %6713 = vmatpush.xpose.msra.mxu0 %v6427
  %6714 = vmatmul.f32.gmra.mxu0 %v6232
  %v6715 = vpop.f32.mrf.mxu0
  %v6716 = vadd.f32 %v6228, %v6715
  %6717 = vdwg.mxu0
  %6718 = vmatpush.xpose.msra.mxu0 %v6520
  %6719 = vmatpush.xpose.msra.mxu0 %v6517
  %6720 = vmatpush.xpose.msra.mxu0 %v6514
  %6721 = vmatpush.xpose.msra.mxu0 %v6511
  %6722 = vmatpush.xpose.msra.mxu0 %v6508
  %6723 = vmatpush.xpose.msra.mxu0 %v6505
  %6724 = vmatpush.xpose.msra.mxu0 %v6502
  %6725 = vmatpush.xpose.msra.mxu0 %v6499
  %6726 = vmatpush.xpose.msra.mxu0 %v6496
  %6727 = vmatpush.xpose.msra.mxu0 %v6493
  %6728 = vmatpush.xpose.msra.mxu0 %v6490
  %6729 = vmatpush.xpose.msra.mxu0 %v6487
  %6730 = vmatpush.xpose.msra.mxu0 %v6484
  %6731 = vmatpush.xpose.msra.mxu0 %v6481
  %6732 = vmatpush.xpose.msra.mxu0 %v6478
  %6733 = vmatpush.xpose.msra.mxu0 %v6475
  %6734 = vmatmul.f32.gmra.mxu0 %v6232
  %v6735 = vpop.f32.mrf.mxu0
  %v6736 = vadd.f32 %v6228, %v6735
  %6737 = vdwg.mxu0
  %6738 = vmatpush.xpose.msra.mxu0 %v6568
  %6739 = vmatpush.xpose.msra.mxu0 %v6565
  %6740 = vmatpush.xpose.msra.mxu0 %v6562
  %6741 = vmatpush.xpose.msra.mxu0 %v6559
  %6742 = vmatpush.xpose.msra.mxu0 %v6556
  %6743 = vmatpush.xpose.msra.mxu0 %v6553
  %6744 = vmatpush.xpose.msra.mxu0 %v6550
  %6745 = vmatpush.xpose.msra.mxu0 %v6547
  %6746 = vmatpush.xpose.msra.mxu0 %v6544
  %6747 = vmatpush.xpose.msra.mxu0 %v6541
  %6748 = vmatpush.xpose.msra.mxu0 %v6538
  %6749 = vmatpush.xpose.msra.mxu0 %v6535
  %6750 = vmatpush.xpose.msra.mxu0 %v6532
  %6751 = vmatpush.xpose.msra.mxu0 %v6529
  %6752 = vmatpush.xpose.msra.mxu0 %v6526
  %6753 = vmatpush.xpose.msra.mxu0 %v6523
  %6754 = vmatmul.f32.gmra.mxu0 %v6232
  %v6755 = vpop.f32.mrf.mxu0
  %v6756 = vadd.f32 %v6228, %v6755
  %6757 = vdwg.mxu0
  %6758 = vmatpush.xpose.msra.mxu0 %v6616
  %6759 = vmatpush.xpose.msra.mxu0 %v6613
  %6760 = vmatpush.xpose.msra.mxu0 %v6610
  %6761 = vmatpush.xpose.msra.mxu0 %v6607
  %6762 = vmatpush.xpose.msra.mxu0 %v6604
  %6763 = vmatpush.xpose.msra.mxu0 %v6601
  %6764 = vmatpush.xpose.msra.mxu0 %v6598
  %6765 = vmatpush.xpose.msra.mxu0 %v6595
  %6766 = vmatpush.xpose.msra.mxu0 %v6592
  %6767 = vmatpush.xpose.msra.mxu0 %v6589
  %6768 = vmatpush.xpose.msra.mxu0 %v6586
  %6769 = vmatpush.xpose.msra.mxu0 %v6583
  %6770 = vmatpush.xpose.msra.mxu0 %v6580
  %6771 = vmatpush.xpose.msra.mxu0 %v6577
  %6772 = vmatpush.xpose.msra.mxu0 %v6574
  %6773 = vmatpush.xpose.msra.mxu0 %v6571
  %6774 = vmatmul.f32.gmra.mxu0 %v6232
  %v6775 = vpop.f32.mrf.mxu0
  %v6776 = vadd.f32 %v6228, %v6775
  %6777 = vdwg.mxu0
  %v6778 = vmax.f32 %v6636, 0.0
  %v6779 = vmax.f32 %v6656, 0.0
  %v6780 = vmax.f32 %v6676, 0.0
  %v6781 = vmax.f32 %v6696, 0.0
  %v6782 = vmax.f32 %v6716, 0.0
  %v6783 = vmax.f32 %v6736, 0.0
  %v6784 = vmax.f32 %v6756, 0.0
  %v6785 = vmax.f32 %v6776, 0.0
  %v6786 = vld [vmem:[%s11] sm:$0x1]
  %v6787 = vld [vmem:[#allocation2] sm:$0x1]
  %6789 = vset.pattern.permute.xlu0 0
  %6790 = vperm.xlu0 %6789, %v6787
  %v6791 = vpop.permute.xlu0 %6790
  %v6793 = vperm.slane %v6791, 0
  %vm6794 = vcmask 31744
  %v6796 = vsel %vm6794, %v6786, 0
  %vm6798 = vcmask 1043456
  %v6800 = vsel %vm6798, %v6778, 0
  %v6803 = vsel %vm6798, %v6779, 0
  %v6806 = vsel %vm6798, %v6780, 0
  %v6809 = vsel %vm6798, %v6781, 0
  %v6812 = vsel %vm6798, %v6782, 0
  %v6815 = vsel %vm6798, %v6783, 0
  %v6818 = vsel %vm6798, %v6784, 0
  %v6821 = vsel %vm6798, %v6785, 0
  %6823 = vmatpush.msra.mxu0 0.0
  %6824 = vmatpush.msra.mxu0 0.0
  %6825 = vmatpush.msra.mxu0 0.0
  %6826 = vmatpush.msra.mxu0 0.0
  %6827 = vmatpush.msra.mxu0 0.0
  %6828 = vmatpush.msra.mxu0 0.0
  %6829 = vmatpush.msra.mxu0 0.0
  %6830 = vmatpush.msra.mxu0 0.0
  %6831 = vmatpush.msra.mxu0 0.0
  %6832 = vmatpush.msra.mxu0 0.0
  %6833 = vmatpush.msra.mxu0 0.0
  %6834 = vmatpush.msra.mxu0 0.0
  %6835 = vmatpush.msra.mxu0 0.0
  %6836 = vmatpush.msra.mxu0 0.0
  %6837 = vmatpush.msra.mxu0 0.0
  %6838 = vmatpush.msra.mxu0 %v6800
  %6839 = vmatmul.f32.gmra.mxu0 %v6796
  %v6840 = vpop.f32.mrf.mxu0
  %v6841 = vadd.f32 %v6793, %v6840
  %6842 = vdwg.mxu0
  %6843 = vmatpush.msra.mxu0 0.0
  %6844 = vmatpush.msra.mxu0 0.0
  %6845 = vmatpush.msra.mxu0 0.0
  %6846 = vmatpush.msra.mxu0 0.0
  %6847 = vmatpush.msra.mxu0 0.0
  %6848 = vmatpush.msra.mxu0 0.0
  %6849 = vmatpush.msra.mxu0 0.0
  %6850 = vmatpush.msra.mxu0 0.0
  %6851 = vmatpush.msra.mxu0 0.0
  %6852 = vmatpush.msra.mxu0 0.0
  %6853 = vmatpush.msra.mxu0 0.0
  %6854 = vmatpush.msra.mxu0 0.0
  %6855 = vmatpush.msra.mxu0 0.0
  %6856 = vmatpush.msra.mxu0 0.0
  %6857 = vmatpush.msra.mxu0 0.0
  %6858 = vmatpush.msra.mxu0 %v6803
  %6859 = vmatmul.f32.gmra.mxu0 %v6796
  %v6860 = vpop.f32.mrf.mxu0
  %v6861 = vadd.f32 %v6793, %v6860
  %6862 = vdwg.mxu0
  %6863 = vmatpush.msra.mxu0 0.0
  %6864 = vmatpush.msra.mxu0 0.0
  %6865 = vmatpush.msra.mxu0 0.0
  %6866 = vmatpush.msra.mxu0 0.0
  %6867 = vmatpush.msra.mxu0 0.0
  %6868 = vmatpush.msra.mxu0 0.0
  %6869 = vmatpush.msra.mxu0 0.0
  %6870 = vmatpush.msra.mxu0 0.0
  %6871 = vmatpush.msra.mxu0 0.0
  %6872 = vmatpush.msra.mxu0 0.0
  %6873 = vmatpush.msra.mxu0 0.0
  %6874 = vmatpush.msra.mxu0 0.0
  %6875 = vmatpush.msra.mxu0 0.0
  %6876 = vmatpush.msra.mxu0 0.0
  %6877 = vmatpush.msra.mxu0 0.0
  %6878 = vmatpush.msra.mxu0 %v6806
  %6879 = vmatmul.f32.gmra.mxu0 %v6796
  %v6880 = vpop.f32.mrf.mxu0
  %v6881 = vadd.f32 %v6793, %v6880
  %6882 = vdwg.mxu0
  %6883 = vmatpush.msra.mxu0 0.0
  %6884 = vmatpush.msra.mxu0 0.0
  %6885 = vmatpush.msra.mxu0 0.0
  %6886 = vmatpush.msra.mxu0 0.0
  %6887 = vmatpush.msra.mxu0 0.0
  %6888 = vmatpush.msra.mxu0 0.0
  %6889 = vmatpush.msra.mxu0 0.0
  %6890 = vmatpush.msra.mxu0 0.0
  %6891 = vmatpush.msra.mxu0 0.0
  %6892 = vmatpush.msra.mxu0 0.0
  %6893 = vmatpush.msra.mxu0 0.0
  %6894 = vmatpush.msra.mxu0 0.0
  %6895 = vmatpush.msra.mxu0 0.0
  %6896 = vmatpush.msra.mxu0 0.0
  %6897 = vmatpush.msra.mxu0 0.0
  %6898 = vmatpush.msra.mxu0 %v6809
  %6899 = vmatmul.f32.gmra.mxu0 %v6796
  %v6900 = vpop.f32.mrf.mxu0
  %v6901 = vadd.f32 %v6793, %v6900
  %6902 = vdwg.mxu0
  %6903 = vmatpush.msra.mxu0 0.0
  %6904 = vmatpush.msra.mxu0 0.0
  %6905 = vmatpush.msra.mxu0 0.0
  %6906 = vmatpush.msra.mxu0 0.0
  %6907 = vmatpush.msra.mxu0 0.0
  %6908 = vmatpush.msra.mxu0 0.0
  %6909 = vmatpush.msra.mxu0 0.0
  %6910 = vmatpush.msra.mxu0 0.0
  %6911 = vmatpush.msra.mxu0 0.0
  %6912 = vmatpush.msra.mxu0 0.0
  %6913 = vmatpush.msra.mxu0 0.0
  %6914 = vmatpush.msra.mxu0 0.0
  %6915 = vmatpush.msra.mxu0 0.0
  %6916 = vmatpush.msra.mxu0 0.0
  %6917 = vmatpush.msra.mxu0 0.0
  %6918 = vmatpush.msra.mxu0 %v6812
  %6919 = vmatmul.f32.gmra.mxu0 %v6796
  %v6920 = vpop.f32.mrf.mxu0
  %v6921 = vadd.f32 %v6793, %v6920
  %6922 = vdwg.mxu0
  %6923 = vmatpush.msra.mxu0 0.0
  %6924 = vmatpush.msra.mxu0 0.0
  %6925 = vmatpush.msra.mxu0 0.0
  %6926 = vmatpush.msra.mxu0 0.0
  %6927 = vmatpush.msra.mxu0 0.0
  %6928 = vmatpush.msra.mxu0 0.0
  %6929 = vmatpush.msra.mxu0 0.0
  %6930 = vmatpush.msra.mxu0 0.0
  %6931 = vmatpush.msra.mxu0 0.0
  %6932 = vmatpush.msra.mxu0 0.0
  %6933 = vmatpush.msra.mxu0 0.0
  %6934 = vmatpush.msra.mxu0 0.0
  %6935 = vmatpush.msra.mxu0 0.0
  %6936 = vmatpush.msra.mxu0 0.0
  %6937 = vmatpush.msra.mxu0 0.0
  %6938 = vmatpush.msra.mxu0 %v6815
  %6939 = vmatmul.f32.gmra.mxu0 %v6796
  %v6940 = vpop.f32.mrf.mxu0
  %v6941 = vadd.f32 %v6793, %v6940
  %6942 = vdwg.mxu0
  %6943 = vmatpush.msra.mxu0 0.0
  %6944 = vmatpush.msra.mxu0 0.0
  %6945 = vmatpush.msra.mxu0 0.0
  %6946 = vmatpush.msra.mxu0 0.0
  %6947 = vmatpush.msra.mxu0 0.0
  %6948 = vmatpush.msra.mxu0 0.0
  %6949 = vmatpush.msra.mxu0 0.0
  %6950 = vmatpush.msra.mxu0 0.0
  %6951 = vmatpush.msra.mxu0 0.0
  %6952 = vmatpush.msra.mxu0 0.0
  %6953 = vmatpush.msra.mxu0 0.0
  %6954 = vmatpush.msra.mxu0 0.0
  %6955 = vmatpush.msra.mxu0 0.0
  %6956 = vmatpush.msra.mxu0 0.0
  %6957 = vmatpush.msra.mxu0 0.0
  %6958 = vmatpush.msra.mxu0 %v6818
  %6959 = vmatmul.f32.gmra.mxu0 %v6796
  %v6960 = vpop.f32.mrf.mxu0
  %v6961 = vadd.f32 %v6793, %v6960
  %6962 = vdwg.mxu0
  %6963 = vmatpush.msra.mxu0 0.0
  %6964 = vmatpush.msra.mxu0 0.0
  %6965 = vmatpush.msra.mxu0 0.0
  %6966 = vmatpush.msra.mxu0 0.0
  %6967 = vmatpush.msra.mxu0 0.0
  %6968 = vmatpush.msra.mxu0 0.0
  %6969 = vmatpush.msra.mxu0 0.0
  %6970 = vmatpush.msra.mxu0 0.0
  %6971 = vmatpush.msra.mxu0 0.0
  %6972 = vmatpush.msra.mxu0 0.0
  %6973 = vmatpush.msra.mxu0 0.0
  %6974 = vmatpush.msra.mxu0 0.0
  %6975 = vmatpush.msra.mxu0 0.0
  %6976 = vmatpush.msra.mxu0 0.0
  %6977 = vmatpush.msra.mxu0 0.0
  %6978 = vmatpush.msra.mxu0 %v6821
  %6979 = vmatmul.f32.gmra.mxu0 %v6796
  %v6980 = vpop.f32.mrf.mxu0
  %v6981 = vadd.f32 %v6793, %v6980
  %6982 = vdwg.mxu0
  %v6991 = vrot.slane %v6861, 7
  %v6992 = vrot.slane %v6881, 6
  %v6993 = vrot.slane %v6901, 5
  %v6994 = vrot.slane %v6921, 4
  %v6995 = vrot.slane %v6941, 3
  %v6996 = vrot.slane %v6961, 2
  %v6997 = vrot.slane %v6981, 1
  %v6998 = vsel %vm857, %v6841, %v6991
  %vm6999 = vcmask 1042434
  %v7000 = vsel %vm6999, %v6992, %v6993
  %vm7001 = vcmask 1041408
  %v7002 = vsel %vm7001, %v6998, %v7000
  %vm7003 = vcmask 1044484
  %v7004 = vsel %vm7003, %v6994, %v6995
  %vm7005 = vcmask 1046534
  %v7006 = vsel %vm7005, %v6996, %v6997
  %vm7007 = vcmask 1045508
  %v7008 = vsel %vm7007, %v7004, %v7006
  %v7009 = vsel %vm6798, %v7002, %v7008
  %7011 = vst [vmem:[%s13] sm:$0xff] %v7009
  // Predicated region
  $region54: #{cnn_forward_pallas.1} parent=0 // pred_check
    _
  $region55: #{cnn_forward_pallas.1} parent=0 // pred_check_branch
    %7013 = sbr.rel (0) target = $region57
  $region56: #{cnn_forward_pallas.1} parent=0 // pred_region
    _
  $region57: #{cnn_forward_pallas.1} parent=0 // pred_fallthru
    _
  // Predicated region
  $region58: #{cnn_forward_pallas.1} parent=0 // pred_check
    _
  $region59: #{cnn_forward_pallas.1} parent=0 // pred_check_branch
    %7015 = sbr.rel (0) target = $region61
  $region60: #{cnn_forward_pallas.1} parent=0 // pred_region
    _
  $region61: #{cnn_forward_pallas.1} parent=0 // pred_fallthru
    _

</llo_original>
